<compile_context>
chip_gen: v7x
topology: tpu7x:2x2x1
jax: 0.10.0
libtpu: 0.0.40
codegen_flags: <defaults>
</compile_context>

<pallas_src>
import math

import jax
import jax.numpy as jnp
from jax.experimental import pallas as pl
from jax.experimental.pallas import tpu as pltpu


def _cdiv(a: int, b: int) -> int:
    return -(-a // b)


def _round_up(a: int, b: int) -> int:
    return _cdiv(a, b) * b


def _pe_kernel(freqs_ref, coords_ref, out_ref):
    """One lane-tile of the channel-major positional-encoding slab.

    freqs_ref : (C, 2)   columns [2*pi*G[0], 2*pi*G[1]] (per-channel, sublane)
    coords_ref: (2, T)   rows [2*x-1, 2*y-1]            (lane-dense spatial tile)
    out_ref   : (2C, T)  rows [0:C] = sin(proj), rows [C:2C] = cos(proj)
                         proj[c,t] = cx[t]*2*pi*G[0,c] + cy[t]*2*pi*G[1,c]
    """
    c = freqs_ref.shape[0]
    cx = coords_ref[0:1, :]          # (1, T) lane-dense spatial coordinate
    cy = coords_ref[1:2, :]          # (1, T)
    a0 = freqs_ref[:, 0:1]           # (C, 1) per-channel sublane splats
    a1 = freqs_ref[:, 1:2]
    proj = cx * a0 + cy * a1         # (C, T), shared by sin and cos halves
    out_ref[0:c, :] = jnp.sin(proj)
    out_ref[c:, :] = jnp.cos(proj)


def _choose_lane_tile(hw: int, c2: int,
                      max_block_bytes: int = 2 * 1024 * 1024,
                      target_steps: int = 8) -> int:
    """Pick the lane-tile width T (multiple of 128).

    Priorities:
      * output block (c2, T) f32 stays near/below max_block_bytes (VMEM
        headroom incl. v7x's 64 MiB/TC when double-buffered),
      * T >= 512 whenever the problem allows (store-path efficiency),
      * an even grid-step count (v7x splits the "parallel" axis over 2 TCs),
      * little padded (wasted) work and a step count near `target_steps`.
    """
    hw128 = _round_up(hw, 128)
    t_bytes = (max_block_bytes // (c2 * 4)) // 128 * 128
    t_cap = min(4096, max(512, t_bytes))   # always allow >=512 lanes
    t_cap = min(t_cap, hw128)
    t_floor = min(512, t_cap)
    best_key, best_t = None, t_floor
    for t in range(t_floor, t_cap + 1, 128):
        steps = _cdiv(hw128, t)
        waste = steps * t - hw128                      # padded lanes
        odd = 1 if (steps > 1 and steps % 2 == 1) else 0
        key = (odd, waste, abs(steps - target_steps))  # lexicographic score
        if best_key is None or key < best_key:
            best_key, best_t = key, t
    return best_t


def position_embedding_random(gaussian_matrix: jax.Array, size) -> jax.Array:
    """Returns pe of shape (2*num_pos_feats, H, W), matching the torch module."""
    H, W = size
    g = gaussian_matrix.astype(jnp.float32)            # (2, C)
    C = g.shape[1]
    C2 = 2 * C
    HW = H * W

    # ---- tiny one-time wrapper precompute (amortized over H*W*2C outputs) ----
    freqs = (2.0 * math.pi) * jnp.transpose(g)          # (C, 2)

    # Centered, normalized coordinates already mapped to 2*x-1 / 2*y-1,
    # flattened row-major: (2, HW) = [cx; cy].
    x_line = 2.0 * (jnp.arange(W, dtype=jnp.float32) + 0.5) / W - 1.0
    y_line = 2.0 * (jnp.arange(H, dtype=jnp.float32) + 0.5) / H - 1.0
    x_flat = jnp.broadcast_to(x_line[None, :], (H, W)).reshape(HW)
    y_flat = jnp.broadcast_to(y_line[:, None], (H, W)).reshape(HW)
    coords = jnp.stack([x_flat, y_flat], axis=0)         # (2, HW)

    # Pick T first, then pad the flattened spatial axis up to steps*T so every
    # store (including the last block) is full lane width.
    T = _choose_lane_tile(HW, C2)
    steps = _cdiv(HW, T)
    hw_pad = steps * T
    if hw_pad != HW:
        coords = jnp.pad(coords, ((0, 0), (0, hw_pad - HW)))

    cost = pl.CostEstimate(
        flops=3 * C * hw_pad,                 # 2 mul + 1 add per proj element
        transcendentals=C2 * hw_pad,          # one sin + one cos per channel pair
        bytes_accessed=4 * C2 * hw_pad + 4 * 2 * hw_pad + 4 * 2 * C,
    )

    pe_flat = pl.pallas_call(
        _pe_kernel,
        out_shape=jax.ShapeDtypeStruct((C2, hw_pad), jnp.float32),
        grid_spec=pltpu.PrefetchScalarGridSpec(
            num_scalar_prefetch=0,
            grid=(steps,),
            in_specs=[
                pl.BlockSpec((C, 2), lambda i: (0, 0)),   # folded frequencies
                pl.BlockSpec((2, T), lambda i: (0, i)),   # coord lane tile
            ],
            # Note: pipeline_mode=pl.Buffered(3) is a sweepable knob for v5e's
            # near-binding store path; default double-buffering kept here.
            out_specs=pl.BlockSpec((C2, T), lambda i: (0, i)),
        ),
        compiler_params=pltpu.CompilerParams(
            dimension_semantics=("parallel",),
            vmem_limit_bytes=32 * 1024 * 1024,   # conservative; safe on v7x too
        ),
        cost_estimate=cost,
    )(freqs, coords)

    if hw_pad != HW:
        pe_flat = pe_flat[:, :HW]
    # Free row-major reshape: (2C, H*W) -> (2C, H, W). No transpose pass.
    return pe_flat.reshape(C2, H, W)


def _reference(gaussian_matrix, size):
    H, W = size
    grid = jnp.ones((H, W), jnp.float32)
    y_embed = (jnp.cumsum(grid, axis=0) - 0.5) / H
    x_embed = (jnp.cumsum(grid, axis=1) - 0.5) / W
    coords = jnp.stack([x_embed, y_embed], axis=-1)
    coords = 2.0 * coords - 1.0
    coords = coords @ gaussian_matrix
    coords = 2.0 * math.pi * coords
    pe = jnp.concatenate([jnp.sin(coords), jnp.cos(coords)], axis=-1)
    return jnp.transpose(pe, (2, 0, 1))


if __name__ == "__main__":
    num_pos_feats = 64
    scale = 1.0  # scale is None/<=0 -> 1.0 in the module

    key = jax.random.PRNGKey(0)
    gaussian_matrix = scale * jax.random.normal(key, (2, num_pos_feats), jnp.float32)

    ok = True
    # (16,16): single block; (24,40): padding path; (50,50): multi-step, even grid.
    for (H, W) in [(16, 16), (24, 40), (50, 50)]:
        pe = position_embedding_random(gaussian_matrix, (H, W))
        pe = jax.block_until_ready(pe)
        ref = _reference(gaussian_matrix, (H, W))
        assert pe.shape == (2 * num_pos_feats, H, W), pe.shape
        ok &= bool(jnp.allclose(pe, ref, atol=1e-4, rtol=1e-4))
    assert ok

    print("KERNEL_OK")
</pallas_src>

<mosaic_0001>
module attributes {stable_mosaic.version = 11 : i64} {
  func.func @_pe_kernel(%arg0: i32, %arg1: memref<64x2xf32, #tpu.memory_space<vmem>>, %arg2: memref<2x256xf32, #tpu.memory_space<vmem>>, %arg3: memref<128x256xf32, #tpu.memory_space<vmem>>) attributes {dimension_semantics = [#tpu.dimension_semantics<parallel>], iteration_bounds = array<i64: 1>, scalar_prefetch = 0 : i64, scratch_operands = 0 : i64, tpu.core_type = #tpu.core_type<tc>, window_params = [{pipeline_mode = #tpu.pipeline_mode<synchronous>, transform_indices = @transform_0, window_bounds = array<i64: 64, 2>}, {transform_indices = @transform_1, window_bounds = array<i64: 2, 256>}, {transform_indices = @transform_2, window_bounds = array<i64: 128, 256>}]} {
    %c0 = arith.constant 0 : index
    %c0_0 = arith.constant 0 : index
    %0 = vector.load %arg2[%c0, %c0_0] : memref<2x256xf32, #tpu.memory_space<vmem>>, vector<1x256xf32>
    %c1 = arith.constant 1 : index
    %c0_1 = arith.constant 0 : index
    %1 = vector.load %arg2[%c1, %c0_1] : memref<2x256xf32, #tpu.memory_space<vmem>>, vector<1x256xf32>
    %c0_2 = arith.constant 0 : index
    %c0_3 = arith.constant 0 : index
    %2 = vector.load %arg1[%c0_2, %c0_3] : memref<64x2xf32, #tpu.memory_space<vmem>>, vector<64x1xf32>
    %c0_4 = arith.constant 0 : index
    %c1_5 = arith.constant 1 : index
    %3 = vector.load %arg1[%c0_4, %c1_5] : memref<64x2xf32, #tpu.memory_space<vmem>>, vector<64x1xf32>
    %4 = vector.broadcast %0 : vector<1x256xf32> to vector<64x256xf32>
    %5 = vector.broadcast %2 : vector<64x1xf32> to vector<64x256xf32>
    %6 = arith.mulf %4, %5 : vector<64x256xf32>
    %7 = vector.broadcast %1 : vector<1x256xf32> to vector<64x256xf32>
    %8 = vector.broadcast %3 : vector<64x1xf32> to vector<64x256xf32>
    %9 = arith.mulf %7, %8 : vector<64x256xf32>
    %10 = arith.addf %6, %9 : vector<64x256xf32>
    %11 = math.sin %10 : vector<64x256xf32>
    %c0_6 = arith.constant 0 : index
    %c0_7 = arith.constant 0 : index
    %12 = vector.load %arg3[%c0_6, %c0_7] : memref<128x256xf32, #tpu.memory_space<vmem>>, vector<64x256xf32>
    tpu.vector_store %arg3[%c0_6, %c0_7], %11 {strides = array<i32>} : memref<128x256xf32, #tpu.memory_space<vmem>>, vector<64x256xf32>,
    %13 = math.cos %10 : vector<64x256xf32>
    %c64 = arith.constant 64 : index
    %c0_8 = arith.constant 0 : index
    %14 = vector.load %arg3[%c64, %c0_8] : memref<128x256xf32, #tpu.memory_space<vmem>>, vector<64x256xf32>
    tpu.vector_store %arg3[%c64, %c0_8], %13 {strides = array<i32>} : memref<128x256xf32, #tpu.memory_space<vmem>>, vector<64x256xf32>,
    return
  }
  func.func @transform_0(%arg0: i32) -> (i32, i32) {
    %c0_i32 = arith.constant 0 : i32
    %c0_i32_0 = arith.constant 0 : i32
    %c0_i32_1 = arith.constant 0 : i32
    return %c0_i32, %c0_i32_0 : i32, i32
  }
  func.func @transform_1(%arg0: i32) -> (i32, i32) {
    %c0_i32 = arith.constant 0 : i32
    %c0_i32_0 = arith.constant 0 : i32
    return %c0_i32, %arg0 : i32, i32
  }
  func.func @transform_2(%arg0: i32) -> (i32, i32) {
    %c0_i32 = arith.constant 0 : i32
    %c0_i32_0 = arith.constant 0 : i32
    return %c0_i32, %arg0 : i32, i32
  }
}

</mosaic_0001>

<llo_original>
// kernel: tpu_custom_call.1
$region0: #{tpu_custom_call.1}
  #allocation0 [shape = 'u32[]', space=smem, size = 0x4, offset = 0x4, fixed_abs, tag = 'smem constant byte address 0x4 - core index']
  #allocation1 [shape = 'u32[144,128]{1,0:T(1,128)}', space=vmem, size = 0x12000, scoped, tag = 'internal scratch']
  %s0 = inlined_call_operand.vmem [shape: f32[64,2], index: 0, kind: input, shape index: {}]
  %s1 = inlined_call_operand.vmem [shape: f32[2,256], index: 1, kind: input, shape index: {}]
  %s2 = inlined_call_operand.hbm [shape: f32[128,256], index: 2, kind: output, shape index: {}]
  %s3 = sld [smem:[#allocation0]]
  $region18: #{tpu_custom_call.1} parent=0
    _
  %s5 = ssub.s32 1, %s3
  %s6 = scalar_select 0, %s5, %s3
  $region1: #{tpu_custom_call.1} parent=0
    #allocation2 [shape = 'u8[131072]{0}', space=vmem, size = 0x20000, scoped, tag = 'output window, operand 0, single buffered']
    #allocation3 [shape = 's32[1]{0}', space=sflag, size = 0x4, scoped, tag = 'scoped memory for tpu_custom_call.1']
    %7 = vsyncpa [#allocation3], 0
    // Predicated region
    $region2: #{tpu_custom_call.1} parent=1 // pred_check
      _
    $region3: #{tpu_custom_call.1} parent=1 // pred_check_branch
      %9 = sbr.rel (0) target = $region5
    $region4: #{tpu_custom_call.1} parent=1 // pred_region
      _
    $region5: #{tpu_custom_call.1} parent=1 // pred_fallthru
      _
    // Predicated region
    $region6: #{tpu_custom_call.1} parent=1 // pred_check
      _
    $region7: #{tpu_custom_call.1} parent=1 // pred_check_branch
      %11 = sbr.rel (0) target = $region9
    $region8: #{tpu_custom_call.1} parent=1 // pred_region
      _
    $region9: #{tpu_custom_call.1} parent=1 // pred_fallthru
      _
    %v12 = vld [vmem:[%s1] ss:$2 sm:$0x3]
    %s13 = scalar_lea.vmem %s1, 1
    %v14 = vld [vmem:[%s13] ss:$2 sm:$0x3]
    %v15 = vld [vmem:[%s0] sm:$0xff]
    %v16 = vld [vmem:[%s0 + $0x8] sm:$0xff]
    %v17 = vld [vmem:[%s0 + $0x10] sm:$0xff]
    %v18 = vld [vmem:[%s0 + $0x18] sm:$0xff]
    %v19 = vld [vmem:[%s0 + $0x20] sm:$0xff]
    %v20 = vld [vmem:[%s0 + $0x28] sm:$0xff]
    %v21 = vld [vmem:[%s0 + $0x30] sm:$0xff]
    %v22 = vld [vmem:[%s0 + $0x38] sm:$0xff]
    %v24 = vlaneseq
    %v25 = vshrl.u32 %v24, 7
    %v26 = vsub.s32 0, %v25
    %v27 = vrot.slane %v12, %v26
    %v28 = vlaneseq
    %v29 = vshrl.u32 %v28, 7
    %v30 = vsub.s32 1, %v29
    %v31 = vrot.slane %v12, %v30
    %35 = vset.pattern.permute.xlu0 0
    %36 = vperm.xlu0 %35, %v15
    %v37 = vpop.permute.xlu0 %36
    %40 = vset.pattern.permute.xlu0 0
    %41 = vperm.xlu0 %40, %v16
    %v42 = vpop.permute.xlu0 %41
    %45 = vset.pattern.permute.xlu0 0
    %46 = vperm.xlu0 %45, %v17
    %v47 = vpop.permute.xlu0 %46
    %50 = vset.pattern.permute.xlu0 0
    %51 = vperm.xlu0 %50, %v18
    %v52 = vpop.permute.xlu0 %51
    %55 = vset.pattern.permute.xlu0 0
    %56 = vperm.xlu0 %55, %v19
    %v57 = vpop.permute.xlu0 %56
    %60 = vset.pattern.permute.xlu0 0
    %61 = vperm.xlu0 %60, %v20
    %v62 = vpop.permute.xlu0 %61
    %65 = vset.pattern.permute.xlu0 0
    %66 = vperm.xlu0 %65, %v21
    %v67 = vpop.permute.xlu0 %66
    %70 = vset.pattern.permute.xlu0 0
    %71 = vperm.xlu0 %70, %v22
    %v72 = vpop.permute.xlu0 %71
    %v74 = vmul.f32 %v27, %v37
    %v75 = vmul.f32 %v31, %v37
    %v76 = vmul.f32 %v27, %v42
    %v77 = vmul.f32 %v31, %v42
    %v78 = vmul.f32 %v27, %v47
    %v79 = vmul.f32 %v31, %v47
    %v80 = vmul.f32 %v27, %v52
    %v81 = vmul.f32 %v31, %v52
    %v82 = vmul.f32 %v27, %v57
    %v83 = vmul.f32 %v31, %v57
    %v84 = vmul.f32 %v27, %v62
    %v85 = vmul.f32 %v31, %v62
    %v86 = vmul.f32 %v27, %v67
    %v87 = vmul.f32 %v31, %v67
    %v88 = vmul.f32 %v27, %v72
    %v89 = vmul.f32 %v31, %v72
    %v91 = vlaneseq
    %v92 = vshrl.u32 %v91, 7
    %v93 = vsub.s32 0, %v92
    %v94 = vrot.slane %v14, %v93
    %v95 = vlaneseq
    %v96 = vshrl.u32 %v95, 7
    %v97 = vsub.s32 1, %v96
    %v98 = vrot.slane %v14, %v97
    %101 = vset.pattern.permute.xlu0 1
    %102 = vperm.xlu0 %101, %v15
    %v103 = vpop.permute.xlu0 %102
    %105 = vset.pattern.permute.xlu0 1
    %106 = vperm.xlu0 %105, %v16
    %v107 = vpop.permute.xlu0 %106
    %109 = vset.pattern.permute.xlu0 1
    %110 = vperm.xlu0 %109, %v17
    %v111 = vpop.permute.xlu0 %110
    %113 = vset.pattern.permute.xlu0 1
    %114 = vperm.xlu0 %113, %v18
    %v115 = vpop.permute.xlu0 %114
    %117 = vset.pattern.permute.xlu0 1
    %118 = vperm.xlu0 %117, %v19
    %v119 = vpop.permute.xlu0 %118
    %121 = vset.pattern.permute.xlu0 1
    %122 = vperm.xlu0 %121, %v20
    %v123 = vpop.permute.xlu0 %122
    %125 = vset.pattern.permute.xlu0 1
    %126 = vperm.xlu0 %125, %v21
    %v127 = vpop.permute.xlu0 %126
    %129 = vset.pattern.permute.xlu0 1
    %130 = vperm.xlu0 %129, %v22
    %v131 = vpop.permute.xlu0 %130
    %v133 = vmul.f32 %v94, %v103
    %v134 = vmul.f32 %v98, %v103
    %v135 = vmul.f32 %v94, %v107
    %v136 = vmul.f32 %v98, %v107
    %v137 = vmul.f32 %v94, %v111
    %v138 = vmul.f32 %v98, %v111
    %v139 = vmul.f32 %v94, %v115
    %v140 = vmul.f32 %v98, %v115
    %v141 = vmul.f32 %v94, %v119
    %v142 = vmul.f32 %v98, %v119
    %v143 = vmul.f32 %v94, %v123
    %v144 = vmul.f32 %v98, %v123
    %v145 = vmul.f32 %v94, %v127
    %v146 = vmul.f32 %v98, %v127
    %v147 = vmul.f32 %v94, %v131
    %v148 = vmul.f32 %v98, %v131
    %v149 = vadd.f32 %v74, %v133
    %v150 = vadd.f32 %v75, %v134
    %v151 = vadd.f32 %v76, %v135
    %v152 = vadd.f32 %v77, %v136
    %v153 = vadd.f32 %v78, %v137
    %v154 = vadd.f32 %v79, %v138
    %v155 = vadd.f32 %v80, %v139
    %v156 = vadd.f32 %v81, %v140
    %v157 = vadd.f32 %v82, %v141
    %v158 = vadd.f32 %v83, %v142
    %v159 = vadd.f32 %v84, %v143
    %v160 = vadd.f32 %v85, %v144
    %v161 = vadd.f32 %v86, %v145
    %v162 = vadd.f32 %v87, %v146
    %v163 = vadd.f32 %v88, %v147
    %v164 = vadd.f32 %v89, %v148
    %v165 = vand.u32 2147483647, %v149
    %vm166 = vcmp.le.f32.partialorder %v165, 0.7853982
    %vm167 = vcmp.lt.s32.totalorder %v149, 0
    %v168 = vand.u32 %v149, 2139095040
    %v169 = vshrl.u32 %v168, 23
    %v170 = vsub.s32 %v169, 127
    %v171 = vand.u32 2147483647, %v149
    %v172 = vand.u32 %v171, 8388607
    %v173 = vor.u32 %v172, 8388608
    %v174 = vsub.s32 0, %v173
    %v175 = vadd.s32 %v170, 1
    %vm176 = vcmp.gt.s32.totalorder %v175, 0
    %v177 = vsel %vm176, %v175, 0
    %v178 = vshrl.u32 %v177, 5
    %v179 = vand.u32 %v177, 31
    %v180 = vsub.s32 32, %v179
    %v181 = vshrl.u32 683565275, %v180
    %v182 = vshll.u32 683565275, %v179
    %v183 = vshrl.u32 2475754826, %v180
    %v184 = vor.u32 %v182, %v183
    %v185 = vshll.u32 2475754826, %v179
    %v186 = vshrl.u32 2131351028, %v180
    %v187 = vor.u32 %v185, %v186
    %v188 = vshll.u32 2131351028, %v179
    %v189 = vshrl.u32 2102212464, %v180
    %v190 = vor.u32 %v188, %v189
    %v191 = vshll.u32 2102212464, %v179
    %v192 = vshrl.u32 920167782, %v180
    %v193 = vor.u32 %v191, %v192
    %v194 = vshll.u32 920167782, %v179
    %v195 = vshrl.u32 1326507024, %v180
    %v196 = vor.u32 %v194, %v195
    %vm197 = vcmp.lt.s32.totalorder %v178, 1
    %vm198 = vcmp.lt.s32.totalorder %v178, 2
    %vm199 = vcmp.lt.s32.totalorder %v178, 3
    %vm200 = vcmp.lt.s32.totalorder %v178, 4
    %v201 = vsel %vm197, %v181, %v184
    %v202 = vsel %vm200, %v190, 2102212464
    %v203 = vsel %vm199, %v187, %v202
    %v204 = vsel %vm198, %v201, %v203
    %v205 = vsel %vm197, %v184, %v187
    %v206 = vsel %vm200, %v193, 920167782
    %v207 = vsel %vm199, %v190, %v206
    %v208 = vsel %vm198, %v205, %v207
    %v209 = vsel %vm197, %v187, %v190
    %v210 = vsel %vm200, %v196, 1326507024
    %v211 = vsel %vm199, %v193, %v210
    %v212 = vsel %vm198, %v209, %v211
    %v213 = vshll.u32 %v173, 8
    %v214 = vmul.u32.u64.compose %v213, %v212
    %v215 = vextract.low.u32 %v214
    %v216 = vextract.high.u32 %v214
    %v217 = vmul.u32.u64.compose %v213, %v208
    %v218 = vextract.low.u32 %v217
    %v219 = vextract.high.u32 %v217
    %v220 = vmul.u32 %v213, %v204
    %v221 = vadd.s32 %v216, %v218
    %vm222 = vc.u32 %v216, %v218
    %v223 = vadd.s32 %v219, 1
    %v224 = vsel %vm222, %v223, %v219
    %v225 = vadd.s32 %v220, %v224
    %v226 = vadd.s32 %v225, 536870912
    %v227 = vshrl.u32 %v226, 30
    %v228 = vshll.u32 %v227, 30
    %v229 = vsub.s32 %v225, %v228
    %vm230 = vcmp.lt.s32.totalorder %v229, 0
    %v231 = vsub.s32 0, %v229
    %v232 = vsel %vm230, %v231, %v229
    %v233 = vclz %v232
    %v234 = vsub.s32 %v233, 2
    %vm235 = vcmp.gt.s32.totalorder 0, %v234
    %v236 = vsel %vm235, 0, %v234
    %v237 = vsub.s32 32, %v236
    %v238 = vshll.u32 %v229, %v236
    %v239 = vshrl.u32 %v221, %v237
    %v240 = vor.u32 %v238, %v239
    %v241 = vsub.s32 4294967266, %v236
    %v242 = vadd.s32 %v241, 127
    %v243 = vshll.u32 %v242, 23
    %v244 = vor.u32 4788187, %v243
    %v245 = vand.u32 2147483647, %v244
    %v247 = vcvt.s32.f32 %v240
    %v248 = vmul.f32 %v247, %v245
    %v249 = vxor.u32 %v248, 2147483648
    %v250 = vsel %vm167, %v249, %v248
    %v251 = vsub.s32 4, %v227
    %v252 = vsel %vm167, %v251, %v227
    %v253 = vsel %vm166, %v149, %v250
    %v254 = vsel %vm166, 0, %v252
    %v255 = vcosq.f32.pop %v253
    %v256 = vsinq.f32.pop %v253
    %vm257 = vweird.f32 %v149
    %v258 = vadd.s32 %v254, 3
    %v259 = vand.u32 %v258, 3
    %vm260 = vcmp.lt.s32.totalorder %v259, 2
    %vm261 = vcmp.eq.s32.totalorder %v259, 0
    %v262 = vxor.u32 %v256, 2147483648
    %v263 = vsel %vm261, %v255, %v262
    %vm264 = vcmp.eq.s32.totalorder %v259, 2
    %v265 = vxor.u32 %v255, 2147483648
    %v266 = vsel %vm264, %v265, %v256
    %v267 = vsel %vm260, %v263, %v266
    %v268 = vsel %vm257, nan, %v267
    %v269 = vand.u32 2147483647, %v150
    %vm270 = vcmp.le.f32.partialorder %v269, 0.7853982
    %vm271 = vcmp.lt.s32.totalorder %v150, 0
    %v272 = vand.u32 %v150, 2139095040
    %v273 = vshrl.u32 %v272, 23
    %v274 = vsub.s32 %v273, 127
    %v275 = vand.u32 2147483647, %v150
    %v276 = vand.u32 %v275, 8388607
    %v277 = vor.u32 %v276, 8388608
    %v278 = vsub.s32 0, %v277
    %v279 = vadd.s32 %v274, 1
    %vm280 = vcmp.gt.s32.totalorder %v279, 0
    %v281 = vsel %vm280, %v279, 0
    %v282 = vshrl.u32 %v281, 5
    %v283 = vand.u32 %v281, 31
    %v284 = vsub.s32 32, %v283
    %v285 = vshrl.u32 683565275, %v284
    %v286 = vshll.u32 683565275, %v283
    %v287 = vshrl.u32 2475754826, %v284
    %v288 = vor.u32 %v286, %v287
    %v289 = vshll.u32 2475754826, %v283
    %v290 = vshrl.u32 2131351028, %v284
    %v291 = vor.u32 %v289, %v290
    %v292 = vshll.u32 2131351028, %v283
    %v293 = vshrl.u32 2102212464, %v284
    %v294 = vor.u32 %v292, %v293
    %v295 = vshll.u32 2102212464, %v283
    %v296 = vshrl.u32 920167782, %v284
    %v297 = vor.u32 %v295, %v296
    %v298 = vshll.u32 920167782, %v283
    %v299 = vshrl.u32 1326507024, %v284
    %v300 = vor.u32 %v298, %v299
    %vm301 = vcmp.lt.s32.totalorder %v282, 1
    %vm302 = vcmp.lt.s32.totalorder %v282, 2
    %vm303 = vcmp.lt.s32.totalorder %v282, 3
    %vm304 = vcmp.lt.s32.totalorder %v282, 4
    %v305 = vsel %vm301, %v285, %v288
    %v306 = vsel %vm304, %v294, 2102212464
    %v307 = vsel %vm303, %v291, %v306
    %v308 = vsel %vm302, %v305, %v307
    %v309 = vsel %vm301, %v288, %v291
    %v310 = vsel %vm304, %v297, 920167782
    %v311 = vsel %vm303, %v294, %v310
    %v312 = vsel %vm302, %v309, %v311
    %v313 = vsel %vm301, %v291, %v294
    %v314 = vsel %vm304, %v300, 1326507024
    %v315 = vsel %vm303, %v297, %v314
    %v316 = vsel %vm302, %v313, %v315
    %v317 = vshll.u32 %v277, 8
    %v318 = vmul.u32.u64.compose %v317, %v316
    %v319 = vextract.low.u32 %v318
    %v320 = vextract.high.u32 %v318
    %v321 = vmul.u32.u64.compose %v317, %v312
    %v322 = vextract.low.u32 %v321
    %v323 = vextract.high.u32 %v321
    %v324 = vmul.u32 %v317, %v308
    %v325 = vadd.s32 %v320, %v322
    %vm326 = vc.u32 %v320, %v322
    %v327 = vadd.s32 %v323, 1
    %v328 = vsel %vm326, %v327, %v323
    %v329 = vadd.s32 %v324, %v328
    %v330 = vadd.s32 %v329, 536870912
    %v331 = vshrl.u32 %v330, 30
    %v332 = vshll.u32 %v331, 30
    %v333 = vsub.s32 %v329, %v332
    %vm334 = vcmp.lt.s32.totalorder %v333, 0
    %v335 = vsub.s32 0, %v333
    %v336 = vsel %vm334, %v335, %v333
    %v337 = vclz %v336
    %v338 = vsub.s32 %v337, 2
    %vm339 = vcmp.gt.s32.totalorder 0, %v338
    %v340 = vsel %vm339, 0, %v338
    %v341 = vsub.s32 32, %v340
    %v342 = vshll.u32 %v333, %v340
    %v343 = vshrl.u32 %v325, %v341
    %v344 = vor.u32 %v342, %v343
    %v345 = vsub.s32 4294967266, %v340
    %v346 = vadd.s32 %v345, 127
    %v347 = vshll.u32 %v346, 23
    %v348 = vor.u32 4788187, %v347
    %v349 = vand.u32 2147483647, %v348
    %v351 = vcvt.s32.f32 %v344
    %v352 = vmul.f32 %v351, %v349
    %v353 = vxor.u32 %v352, 2147483648
    %v354 = vsel %vm271, %v353, %v352
    %v355 = vsub.s32 4, %v331
    %v356 = vsel %vm271, %v355, %v331
    %v357 = vsel %vm270, %v150, %v354
    %v358 = vsel %vm270, 0, %v356
    %v359 = vcosq.f32.pop %v357
    %v360 = vsinq.f32.pop %v357
    %vm361 = vweird.f32 %v150
    %v362 = vadd.s32 %v358, 3
    %v363 = vand.u32 %v362, 3
    %vm364 = vcmp.lt.s32.totalorder %v363, 2
    %vm365 = vcmp.eq.s32.totalorder %v363, 0
    %v366 = vxor.u32 %v360, 2147483648
    %v367 = vsel %vm365, %v359, %v366
    %vm368 = vcmp.eq.s32.totalorder %v363, 2
    %v369 = vxor.u32 %v359, 2147483648
    %v370 = vsel %vm368, %v369, %v360
    %v371 = vsel %vm364, %v367, %v370
    %v372 = vsel %vm361, nan, %v371
    %v373 = vand.u32 2147483647, %v151
    %vm374 = vcmp.le.f32.partialorder %v373, 0.7853982
    %vm375 = vcmp.lt.s32.totalorder %v151, 0
    %v376 = vand.u32 %v151, 2139095040
    %v377 = vshrl.u32 %v376, 23
    %v378 = vsub.s32 %v377, 127
    %v379 = vand.u32 2147483647, %v151
    %v380 = vand.u32 %v379, 8388607
    %v381 = vor.u32 %v380, 8388608
    %v382 = vsub.s32 0, %v381
    %v383 = vadd.s32 %v378, 1
    %vm384 = vcmp.gt.s32.totalorder %v383, 0
    %v385 = vsel %vm384, %v383, 0
    %v386 = vshrl.u32 %v385, 5
    %v387 = vand.u32 %v385, 31
    %v388 = vsub.s32 32, %v387
    %v389 = vshrl.u32 683565275, %v388
    %v390 = vshll.u32 683565275, %v387
    %v391 = vshrl.u32 2475754826, %v388
    %v392 = vor.u32 %v390, %v391
    %v393 = vshll.u32 2475754826, %v387
    %v394 = vshrl.u32 2131351028, %v388
    %v395 = vor.u32 %v393, %v394
    %v396 = vshll.u32 2131351028, %v387
    %v397 = vshrl.u32 2102212464, %v388
    %v398 = vor.u32 %v396, %v397
    %v399 = vshll.u32 2102212464, %v387
    %v400 = vshrl.u32 920167782, %v388
    %v401 = vor.u32 %v399, %v400
    %v402 = vshll.u32 920167782, %v387
    %v403 = vshrl.u32 1326507024, %v388
    %v404 = vor.u32 %v402, %v403
    %vm405 = vcmp.lt.s32.totalorder %v386, 1
    %vm406 = vcmp.lt.s32.totalorder %v386, 2
    %vm407 = vcmp.lt.s32.totalorder %v386, 3
    %vm408 = vcmp.lt.s32.totalorder %v386, 4
    %v409 = vsel %vm405, %v389, %v392
    %v410 = vsel %vm408, %v398, 2102212464
    %v411 = vsel %vm407, %v395, %v410
    %v412 = vsel %vm406, %v409, %v411
    %v413 = vsel %vm405, %v392, %v395
    %v414 = vsel %vm408, %v401, 920167782
    %v415 = vsel %vm407, %v398, %v414
    %v416 = vsel %vm406, %v413, %v415
    %v417 = vsel %vm405, %v395, %v398
    %v418 = vsel %vm408, %v404, 1326507024
    %v419 = vsel %vm407, %v401, %v418
    %v420 = vsel %vm406, %v417, %v419
    %v421 = vshll.u32 %v381, 8
    %v422 = vmul.u32.u64.compose %v421, %v420
    %v423 = vextract.low.u32 %v422
    %v424 = vextract.high.u32 %v422
    %v425 = vmul.u32.u64.compose %v421, %v416
    %v426 = vextract.low.u32 %v425
    %v427 = vextract.high.u32 %v425
    %v428 = vmul.u32 %v421, %v412
    %v429 = vadd.s32 %v424, %v426
    %vm430 = vc.u32 %v424, %v426
    %v431 = vadd.s32 %v427, 1
    %v432 = vsel %vm430, %v431, %v427
    %v433 = vadd.s32 %v428, %v432
    %v434 = vadd.s32 %v433, 536870912
    %v435 = vshrl.u32 %v434, 30
    %v436 = vshll.u32 %v435, 30
    %v437 = vsub.s32 %v433, %v436
    %vm438 = vcmp.lt.s32.totalorder %v437, 0
    %v439 = vsub.s32 0, %v437
    %v440 = vsel %vm438, %v439, %v437
    %v441 = vclz %v440
    %v442 = vsub.s32 %v441, 2
    %vm443 = vcmp.gt.s32.totalorder 0, %v442
    %v444 = vsel %vm443, 0, %v442
    %v445 = vsub.s32 32, %v444
    %v446 = vshll.u32 %v437, %v444
    %v447 = vshrl.u32 %v429, %v445
    %v448 = vor.u32 %v446, %v447
    %v449 = vsub.s32 4294967266, %v444
    %v450 = vadd.s32 %v449, 127
    %v451 = vshll.u32 %v450, 23
    %v452 = vor.u32 4788187, %v451
    %v453 = vand.u32 2147483647, %v452
    %v455 = vcvt.s32.f32 %v448
    %v456 = vmul.f32 %v455, %v453
    %v457 = vxor.u32 %v456, 2147483648
    %v458 = vsel %vm375, %v457, %v456
    %v459 = vsub.s32 4, %v435
    %v460 = vsel %vm375, %v459, %v435
    %v461 = vsel %vm374, %v151, %v458
    %v462 = vsel %vm374, 0, %v460
    %v463 = vcosq.f32.pop %v461
    %v464 = vsinq.f32.pop %v461
    %vm465 = vweird.f32 %v151
    %v466 = vadd.s32 %v462, 3
    %v467 = vand.u32 %v466, 3
    %vm468 = vcmp.lt.s32.totalorder %v467, 2
    %vm469 = vcmp.eq.s32.totalorder %v467, 0
    %v470 = vxor.u32 %v464, 2147483648
    %v471 = vsel %vm469, %v463, %v470
    %vm472 = vcmp.eq.s32.totalorder %v467, 2
    %v473 = vxor.u32 %v463, 2147483648
    %v474 = vsel %vm472, %v473, %v464
    %v475 = vsel %vm468, %v471, %v474
    %v476 = vsel %vm465, nan, %v475
    %v477 = vand.u32 2147483647, %v152
    %vm478 = vcmp.le.f32.partialorder %v477, 0.7853982
    %vm479 = vcmp.lt.s32.totalorder %v152, 0
    %v480 = vand.u32 %v152, 2139095040
    %v481 = vshrl.u32 %v480, 23
    %v482 = vsub.s32 %v481, 127
    %v483 = vand.u32 2147483647, %v152
    %v484 = vand.u32 %v483, 8388607
    %v485 = vor.u32 %v484, 8388608
    %v486 = vsub.s32 0, %v485
    %v487 = vadd.s32 %v482, 1
    %vm488 = vcmp.gt.s32.totalorder %v487, 0
    %v489 = vsel %vm488, %v487, 0
    %v490 = vshrl.u32 %v489, 5
    %v491 = vand.u32 %v489, 31
    %v492 = vsub.s32 32, %v491
    %v493 = vshrl.u32 683565275, %v492
    %v494 = vshll.u32 683565275, %v491
    %v495 = vshrl.u32 2475754826, %v492
    %v496 = vor.u32 %v494, %v495
    %v497 = vshll.u32 2475754826, %v491
    %v498 = vshrl.u32 2131351028, %v492
    %v499 = vor.u32 %v497, %v498
    %v500 = vshll.u32 2131351028, %v491
    %v501 = vshrl.u32 2102212464, %v492
    %v502 = vor.u32 %v500, %v501
    %v503 = vshll.u32 2102212464, %v491
    %v504 = vshrl.u32 920167782, %v492
    %v505 = vor.u32 %v503, %v504
    %v506 = vshll.u32 920167782, %v491
    %v507 = vshrl.u32 1326507024, %v492
    %v508 = vor.u32 %v506, %v507
    %vm509 = vcmp.lt.s32.totalorder %v490, 1
    %vm510 = vcmp.lt.s32.totalorder %v490, 2
    %vm511 = vcmp.lt.s32.totalorder %v490, 3
    %vm512 = vcmp.lt.s32.totalorder %v490, 4
    %v513 = vsel %vm509, %v493, %v496
    %v514 = vsel %vm512, %v502, 2102212464
    %v515 = vsel %vm511, %v499, %v514
    %v516 = vsel %vm510, %v513, %v515
    %v517 = vsel %vm509, %v496, %v499
    %v518 = vsel %vm512, %v505, 920167782
    %v519 = vsel %vm511, %v502, %v518
    %v520 = vsel %vm510, %v517, %v519
    %v521 = vsel %vm509, %v499, %v502
    %v522 = vsel %vm512, %v508, 1326507024
    %v523 = vsel %vm511, %v505, %v522
    %v524 = vsel %vm510, %v521, %v523
    %v525 = vshll.u32 %v485, 8
    %v526 = vmul.u32.u64.compose %v525, %v524
    %v527 = vextract.low.u32 %v526
    %v528 = vextract.high.u32 %v526
    %v529 = vmul.u32.u64.compose %v525, %v520
    %v530 = vextract.low.u32 %v529
    %v531 = vextract.high.u32 %v529
    %v532 = vmul.u32 %v525, %v516
    %v533 = vadd.s32 %v528, %v530
    %vm534 = vc.u32 %v528, %v530
    %v535 = vadd.s32 %v531, 1
    %v536 = vsel %vm534, %v535, %v531
    %v537 = vadd.s32 %v532, %v536
    %v538 = vadd.s32 %v537, 536870912
    %v539 = vshrl.u32 %v538, 30
    %v540 = vshll.u32 %v539, 30
    %v541 = vsub.s32 %v537, %v540
    %vm542 = vcmp.lt.s32.totalorder %v541, 0
    %v543 = vsub.s32 0, %v541
    %v544 = vsel %vm542, %v543, %v541
    %v545 = vclz %v544
    %v546 = vsub.s32 %v545, 2
    %vm547 = vcmp.gt.s32.totalorder 0, %v546
    %v548 = vsel %vm547, 0, %v546
    %v549 = vsub.s32 32, %v548
    %v550 = vshll.u32 %v541, %v548
    %v551 = vshrl.u32 %v533, %v549
    %v552 = vor.u32 %v550, %v551
    %v553 = vsub.s32 4294967266, %v548
    %v554 = vadd.s32 %v553, 127
    %v555 = vshll.u32 %v554, 23
    %v556 = vor.u32 4788187, %v555
    %v557 = vand.u32 2147483647, %v556
    %v559 = vcvt.s32.f32 %v552
    %v560 = vmul.f32 %v559, %v557
    %v561 = vxor.u32 %v560, 2147483648
    %v562 = vsel %vm479, %v561, %v560
    %v563 = vsub.s32 4, %v539
    %v564 = vsel %vm479, %v563, %v539
    %v565 = vsel %vm478, %v152, %v562
    %v566 = vsel %vm478, 0, %v564
    %v567 = vcosq.f32.pop %v565
    %v568 = vsinq.f32.pop %v565
    %vm569 = vweird.f32 %v152
    %v570 = vadd.s32 %v566, 3
    %v571 = vand.u32 %v570, 3
    %vm572 = vcmp.lt.s32.totalorder %v571, 2
    %vm573 = vcmp.eq.s32.totalorder %v571, 0
    %v574 = vxor.u32 %v568, 2147483648
    %v575 = vsel %vm573, %v567, %v574
    %vm576 = vcmp.eq.s32.totalorder %v571, 2
    %v577 = vxor.u32 %v567, 2147483648
    %v578 = vsel %vm576, %v577, %v568
    %v579 = vsel %vm572, %v575, %v578
    %v580 = vsel %vm569, nan, %v579
    %v581 = vand.u32 2147483647, %v153
    %vm582 = vcmp.le.f32.partialorder %v581, 0.7853982
    %vm583 = vcmp.lt.s32.totalorder %v153, 0
    %v584 = vand.u32 %v153, 2139095040
    %v585 = vshrl.u32 %v584, 23
    %v586 = vsub.s32 %v585, 127
    %v587 = vand.u32 2147483647, %v153
    %v588 = vand.u32 %v587, 8388607
    %v589 = vor.u32 %v588, 8388608
    %v590 = vsub.s32 0, %v589
    %v591 = vadd.s32 %v586, 1
    %vm592 = vcmp.gt.s32.totalorder %v591, 0
    %v593 = vsel %vm592, %v591, 0
    %v594 = vshrl.u32 %v593, 5
    %v595 = vand.u32 %v593, 31
    %v596 = vsub.s32 32, %v595
    %v597 = vshrl.u32 683565275, %v596
    %v598 = vshll.u32 683565275, %v595
    %v599 = vshrl.u32 2475754826, %v596
    %v600 = vor.u32 %v598, %v599
    %v601 = vshll.u32 2475754826, %v595
    %v602 = vshrl.u32 2131351028, %v596
    %v603 = vor.u32 %v601, %v602
    %v604 = vshll.u32 2131351028, %v595
    %v605 = vshrl.u32 2102212464, %v596
    %v606 = vor.u32 %v604, %v605
    %v607 = vshll.u32 2102212464, %v595
    %v608 = vshrl.u32 920167782, %v596
    %v609 = vor.u32 %v607, %v608
    %v610 = vshll.u32 920167782, %v595
    %v611 = vshrl.u32 1326507024, %v596
    %v612 = vor.u32 %v610, %v611
    %vm613 = vcmp.lt.s32.totalorder %v594, 1
    %vm614 = vcmp.lt.s32.totalorder %v594, 2
    %vm615 = vcmp.lt.s32.totalorder %v594, 3
    %vm616 = vcmp.lt.s32.totalorder %v594, 4
    %v617 = vsel %vm613, %v597, %v600
    %v618 = vsel %vm616, %v606, 2102212464
    %v619 = vsel %vm615, %v603, %v618
    %v620 = vsel %vm614, %v617, %v619
    %v621 = vsel %vm613, %v600, %v603
    %v622 = vsel %vm616, %v609, 920167782
    %v623 = vsel %vm615, %v606, %v622
    %v624 = vsel %vm614, %v621, %v623
    %v625 = vsel %vm613, %v603, %v606
    %v626 = vsel %vm616, %v612, 1326507024
    %v627 = vsel %vm615, %v609, %v626
    %v628 = vsel %vm614, %v625, %v627
    %v629 = vshll.u32 %v589, 8
    %v630 = vmul.u32.u64.compose %v629, %v628
    %v631 = vextract.low.u32 %v630
    %v632 = vextract.high.u32 %v630
    %v633 = vmul.u32.u64.compose %v629, %v624
    %v634 = vextract.low.u32 %v633
    %v635 = vextract.high.u32 %v633
    %v636 = vmul.u32 %v629, %v620
    %v637 = vadd.s32 %v632, %v634
    %vm638 = vc.u32 %v632, %v634
    %v639 = vadd.s32 %v635, 1
    %v640 = vsel %vm638, %v639, %v635
    %v641 = vadd.s32 %v636, %v640
    %v642 = vadd.s32 %v641, 536870912
    %v643 = vshrl.u32 %v642, 30
    %v644 = vshll.u32 %v643, 30
    %v645 = vsub.s32 %v641, %v644
    %vm646 = vcmp.lt.s32.totalorder %v645, 0
    %v647 = vsub.s32 0, %v645
    %v648 = vsel %vm646, %v647, %v645
    %v649 = vclz %v648
    %v650 = vsub.s32 %v649, 2
    %vm651 = vcmp.gt.s32.totalorder 0, %v650
    %v652 = vsel %vm651, 0, %v650
    %v653 = vsub.s32 32, %v652
    %v654 = vshll.u32 %v645, %v652
    %v655 = vshrl.u32 %v637, %v653
    %v656 = vor.u32 %v654, %v655
    %v657 = vsub.s32 4294967266, %v652
    %v658 = vadd.s32 %v657, 127
    %v659 = vshll.u32 %v658, 23
    %v660 = vor.u32 4788187, %v659
    %v661 = vand.u32 2147483647, %v660
    %v663 = vcvt.s32.f32 %v656
    %v664 = vmul.f32 %v663, %v661
    %v665 = vxor.u32 %v664, 2147483648
    %v666 = vsel %vm583, %v665, %v664
    %v667 = vsub.s32 4, %v643
    %v668 = vsel %vm583, %v667, %v643
    %v669 = vsel %vm582, %v153, %v666
    %v670 = vsel %vm582, 0, %v668
    %v671 = vcosq.f32.pop %v669
    %v672 = vsinq.f32.pop %v669
    %vm673 = vweird.f32 %v153
    %v674 = vadd.s32 %v670, 3
    %v675 = vand.u32 %v674, 3
    %vm676 = vcmp.lt.s32.totalorder %v675, 2
    %vm677 = vcmp.eq.s32.totalorder %v675, 0
    %v678 = vxor.u32 %v672, 2147483648
    %v679 = vsel %vm677, %v671, %v678
    %vm680 = vcmp.eq.s32.totalorder %v675, 2
    %v681 = vxor.u32 %v671, 2147483648
    %v682 = vsel %vm680, %v681, %v672
    %v683 = vsel %vm676, %v679, %v682
    %v684 = vsel %vm673, nan, %v683
    %v685 = vand.u32 2147483647, %v154
    %vm686 = vcmp.le.f32.partialorder %v685, 0.7853982
    %vm687 = vcmp.lt.s32.totalorder %v154, 0
    %v688 = vand.u32 %v154, 2139095040
    %v689 = vshrl.u32 %v688, 23
    %v690 = vsub.s32 %v689, 127
    %v691 = vand.u32 2147483647, %v154
    %v692 = vand.u32 %v691, 8388607
    %v693 = vor.u32 %v692, 8388608
    %v694 = vsub.s32 0, %v693
    %v695 = vadd.s32 %v690, 1
    %vm696 = vcmp.gt.s32.totalorder %v695, 0
    %v697 = vsel %vm696, %v695, 0
    %v698 = vshrl.u32 %v697, 5
    %v699 = vand.u32 %v697, 31
    %v700 = vsub.s32 32, %v699
    %v701 = vshrl.u32 683565275, %v700
    %v702 = vshll.u32 683565275, %v699
    %v703 = vshrl.u32 2475754826, %v700
    %v704 = vor.u32 %v702, %v703
    %v705 = vshll.u32 2475754826, %v699
    %v706 = vshrl.u32 2131351028, %v700
    %v707 = vor.u32 %v705, %v706
    %v708 = vshll.u32 2131351028, %v699
    %v709 = vshrl.u32 2102212464, %v700
    %v710 = vor.u32 %v708, %v709
    %v711 = vshll.u32 2102212464, %v699
    %v712 = vshrl.u32 920167782, %v700
    %v713 = vor.u32 %v711, %v712
    %v714 = vshll.u32 920167782, %v699
    %v715 = vshrl.u32 1326507024, %v700
    %v716 = vor.u32 %v714, %v715
    %vm717 = vcmp.lt.s32.totalorder %v698, 1
    %vm718 = vcmp.lt.s32.totalorder %v698, 2
    %vm719 = vcmp.lt.s32.totalorder %v698, 3
    %vm720 = vcmp.lt.s32.totalorder %v698, 4
    %v721 = vsel %vm717, %v701, %v704
    %v722 = vsel %vm720, %v710, 2102212464
    %v723 = vsel %vm719, %v707, %v722
    %v724 = vsel %vm718, %v721, %v723
    %v725 = vsel %vm717, %v704, %v707
    %v726 = vsel %vm720, %v713, 920167782
    %v727 = vsel %vm719, %v710, %v726
    %v728 = vsel %vm718, %v725, %v727
    %v729 = vsel %vm717, %v707, %v710
    %v730 = vsel %vm720, %v716, 1326507024
    %v731 = vsel %vm719, %v713, %v730
    %v732 = vsel %vm718, %v729, %v731
    %v733 = vshll.u32 %v693, 8
    %v734 = vmul.u32.u64.compose %v733, %v732
    %v735 = vextract.low.u32 %v734
    %v736 = vextract.high.u32 %v734
    %v737 = vmul.u32.u64.compose %v733, %v728
    %v738 = vextract.low.u32 %v737
    %v739 = vextract.high.u32 %v737
    %v740 = vmul.u32 %v733, %v724
    %v741 = vadd.s32 %v736, %v738
    %vm742 = vc.u32 %v736, %v738
    %v743 = vadd.s32 %v739, 1
    %v744 = vsel %vm742, %v743, %v739
    %v745 = vadd.s32 %v740, %v744
    %v746 = vadd.s32 %v745, 536870912
    %v747 = vshrl.u32 %v746, 30
    %v748 = vshll.u32 %v747, 30
    %v749 = vsub.s32 %v745, %v748
    %vm750 = vcmp.lt.s32.totalorder %v749, 0
    %v751 = vsub.s32 0, %v749
    %v752 = vsel %vm750, %v751, %v749
    %v753 = vclz %v752
    %v754 = vsub.s32 %v753, 2
    %vm755 = vcmp.gt.s32.totalorder 0, %v754
    %v756 = vsel %vm755, 0, %v754
    %v757 = vsub.s32 32, %v756
    %v758 = vshll.u32 %v749, %v756
    %v759 = vshrl.u32 %v741, %v757
    %v760 = vor.u32 %v758, %v759
    %v761 = vsub.s32 4294967266, %v756
    %v762 = vadd.s32 %v761, 127
    %v763 = vshll.u32 %v762, 23
    %v764 = vor.u32 4788187, %v763
    %v765 = vand.u32 2147483647, %v764
    %v767 = vcvt.s32.f32 %v760
    %v768 = vmul.f32 %v767, %v765
    %v769 = vxor.u32 %v768, 2147483648
    %v770 = vsel %vm687, %v769, %v768
    %v771 = vsub.s32 4, %v747
    %v772 = vsel %vm687, %v771, %v747
    %v773 = vsel %vm686, %v154, %v770
    %v774 = vsel %vm686, 0, %v772
    %v775 = vcosq.f32.pop %v773
    %v776 = vsinq.f32.pop %v773
    %vm777 = vweird.f32 %v154
    %v778 = vadd.s32 %v774, 3
    %v779 = vand.u32 %v778, 3
    %vm780 = vcmp.lt.s32.totalorder %v779, 2
    %vm781 = vcmp.eq.s32.totalorder %v779, 0
    %v782 = vxor.u32 %v776, 2147483648
    %v783 = vsel %vm781, %v775, %v782
    %vm784 = vcmp.eq.s32.totalorder %v779, 2
    %v785 = vxor.u32 %v775, 2147483648
    %v786 = vsel %vm784, %v785, %v776
    %v787 = vsel %vm780, %v783, %v786
    %v788 = vsel %vm777, nan, %v787
    %v789 = vand.u32 2147483647, %v155
    %vm790 = vcmp.le.f32.partialorder %v789, 0.7853982
    %vm791 = vcmp.lt.s32.totalorder %v155, 0
    %v792 = vand.u32 %v155, 2139095040
    %v793 = vshrl.u32 %v792, 23
    %v794 = vsub.s32 %v793, 127
    %v795 = vand.u32 2147483647, %v155
    %v796 = vand.u32 %v795, 8388607
    %v797 = vor.u32 %v796, 8388608
    %v798 = vsub.s32 0, %v797
    %v799 = vadd.s32 %v794, 1
    %vm800 = vcmp.gt.s32.totalorder %v799, 0
    %v801 = vsel %vm800, %v799, 0
    %v802 = vshrl.u32 %v801, 5
    %v803 = vand.u32 %v801, 31
    %v804 = vsub.s32 32, %v803
    %v805 = vshrl.u32 683565275, %v804
    %v806 = vshll.u32 683565275, %v803
    %v807 = vshrl.u32 2475754826, %v804
    %v808 = vor.u32 %v806, %v807
    %v809 = vshll.u32 2475754826, %v803
    %v810 = vshrl.u32 2131351028, %v804
    %v811 = vor.u32 %v809, %v810
    %v812 = vshll.u32 2131351028, %v803
    %v813 = vshrl.u32 2102212464, %v804
    %v814 = vor.u32 %v812, %v813
    %v815 = vshll.u32 2102212464, %v803
    %v816 = vshrl.u32 920167782, %v804
    %v817 = vor.u32 %v815, %v816
    %v818 = vshll.u32 920167782, %v803
    %v819 = vshrl.u32 1326507024, %v804
    %v820 = vor.u32 %v818, %v819
    %vm821 = vcmp.lt.s32.totalorder %v802, 1
    %vm822 = vcmp.lt.s32.totalorder %v802, 2
    %vm823 = vcmp.lt.s32.totalorder %v802, 3
    %vm824 = vcmp.lt.s32.totalorder %v802, 4
    %v825 = vsel %vm821, %v805, %v808
    %v826 = vsel %vm824, %v814, 2102212464
    %v827 = vsel %vm823, %v811, %v826
    %v828 = vsel %vm822, %v825, %v827
    %v829 = vsel %vm821, %v808, %v811
    %v830 = vsel %vm824, %v817, 920167782
    %v831 = vsel %vm823, %v814, %v830
    %v832 = vsel %vm822, %v829, %v831
    %v833 = vsel %vm821, %v811, %v814
    %v834 = vsel %vm824, %v820, 1326507024
    %v835 = vsel %vm823, %v817, %v834
    %v836 = vsel %vm822, %v833, %v835
    %v837 = vshll.u32 %v797, 8
    %v838 = vmul.u32.u64.compose %v837, %v836
    %v839 = vextract.low.u32 %v838
    %v840 = vextract.high.u32 %v838
    %v841 = vmul.u32.u64.compose %v837, %v832
    %v842 = vextract.low.u32 %v841
    %v843 = vextract.high.u32 %v841
    %v844 = vmul.u32 %v837, %v828
    %v845 = vadd.s32 %v840, %v842
    %vm846 = vc.u32 %v840, %v842
    %v847 = vadd.s32 %v843, 1
    %v848 = vsel %vm846, %v847, %v843
    %v849 = vadd.s32 %v844, %v848
    %v850 = vadd.s32 %v849, 536870912
    %v851 = vshrl.u32 %v850, 30
    %v852 = vshll.u32 %v851, 30
    %v853 = vsub.s32 %v849, %v852
    %vm854 = vcmp.lt.s32.totalorder %v853, 0
    %v855 = vsub.s32 0, %v853
    %v856 = vsel %vm854, %v855, %v853
    %v857 = vclz %v856
    %v858 = vsub.s32 %v857, 2
    %vm859 = vcmp.gt.s32.totalorder 0, %v858
    %v860 = vsel %vm859, 0, %v858
    %v861 = vsub.s32 32, %v860
    %v862 = vshll.u32 %v853, %v860
    %v863 = vshrl.u32 %v845, %v861
    %v864 = vor.u32 %v862, %v863
    %v865 = vsub.s32 4294967266, %v860
    %v866 = vadd.s32 %v865, 127
    %v867 = vshll.u32 %v866, 23
    %v868 = vor.u32 4788187, %v867
    %v869 = vand.u32 2147483647, %v868
    %v871 = vcvt.s32.f32 %v864
    %v872 = vmul.f32 %v871, %v869
    %v873 = vxor.u32 %v872, 2147483648
    %v874 = vsel %vm791, %v873, %v872
    %v875 = vsub.s32 4, %v851
    %v876 = vsel %vm791, %v875, %v851
    %v877 = vsel %vm790, %v155, %v874
    %v878 = vsel %vm790, 0, %v876
    %v879 = vcosq.f32.pop %v877
    %v880 = vsinq.f32.pop %v877
    %vm881 = vweird.f32 %v155
    %v882 = vadd.s32 %v878, 3
    %v883 = vand.u32 %v882, 3
    %vm884 = vcmp.lt.s32.totalorder %v883, 2
    %vm885 = vcmp.eq.s32.totalorder %v883, 0
    %v886 = vxor.u32 %v880, 2147483648
    %v887 = vsel %vm885, %v879, %v886
    %vm888 = vcmp.eq.s32.totalorder %v883, 2
    %v889 = vxor.u32 %v879, 2147483648
    %v890 = vsel %vm888, %v889, %v880
    %v891 = vsel %vm884, %v887, %v890
    %v892 = vsel %vm881, nan, %v891
    %v893 = vand.u32 2147483647, %v156
    %vm894 = vcmp.le.f32.partialorder %v893, 0.7853982
    %vm895 = vcmp.lt.s32.totalorder %v156, 0
    %v896 = vand.u32 %v156, 2139095040
    %v897 = vshrl.u32 %v896, 23
    %v898 = vsub.s32 %v897, 127
    %v899 = vand.u32 2147483647, %v156
    %v900 = vand.u32 %v899, 8388607
    %v901 = vor.u32 %v900, 8388608
    %v902 = vsub.s32 0, %v901
    %v903 = vadd.s32 %v898, 1
    %vm904 = vcmp.gt.s32.totalorder %v903, 0
    %v905 = vsel %vm904, %v903, 0
    %v906 = vshrl.u32 %v905, 5
    %v907 = vand.u32 %v905, 31
    %v908 = vsub.s32 32, %v907
    %v909 = vshrl.u32 683565275, %v908
    %v910 = vshll.u32 683565275, %v907
    %v911 = vshrl.u32 2475754826, %v908
    %v912 = vor.u32 %v910, %v911
    %v913 = vshll.u32 2475754826, %v907
    %v914 = vshrl.u32 2131351028, %v908
    %v915 = vor.u32 %v913, %v914
    %v916 = vshll.u32 2131351028, %v907
    %v917 = vshrl.u32 2102212464, %v908
    %v918 = vor.u32 %v916, %v917
    %v919 = vshll.u32 2102212464, %v907
    %v920 = vshrl.u32 920167782, %v908
    %v921 = vor.u32 %v919, %v920
    %v922 = vshll.u32 920167782, %v907
    %v923 = vshrl.u32 1326507024, %v908
    %v924 = vor.u32 %v922, %v923
    %vm925 = vcmp.lt.s32.totalorder %v906, 1
    %vm926 = vcmp.lt.s32.totalorder %v906, 2
    %vm927 = vcmp.lt.s32.totalorder %v906, 3
    %vm928 = vcmp.lt.s32.totalorder %v906, 4
    %v929 = vsel %vm925, %v909, %v912
    %v930 = vsel %vm928, %v918, 2102212464
    %v931 = vsel %vm927, %v915, %v930
    %v932 = vsel %vm926, %v929, %v931
    %v933 = vsel %vm925, %v912, %v915
    %v934 = vsel %vm928, %v921, 920167782
    %v935 = vsel %vm927, %v918, %v934
    %v936 = vsel %vm926, %v933, %v935
    %v937 = vsel %vm925, %v915, %v918
    %v938 = vsel %vm928, %v924, 1326507024
    %v939 = vsel %vm927, %v921, %v938
    %v940 = vsel %vm926, %v937, %v939
    %v941 = vshll.u32 %v901, 8
    %v942 = vmul.u32.u64.compose %v941, %v940
    %v943 = vextract.low.u32 %v942
    %v944 = vextract.high.u32 %v942
    %v945 = vmul.u32.u64.compose %v941, %v936
    %v946 = vextract.low.u32 %v945
    %v947 = vextract.high.u32 %v945
    %v948 = vmul.u32 %v941, %v932
    %v949 = vadd.s32 %v944, %v946
    %vm950 = vc.u32 %v944, %v946
    %v951 = vadd.s32 %v947, 1
    %v952 = vsel %vm950, %v951, %v947
    %v953 = vadd.s32 %v948, %v952
    %v954 = vadd.s32 %v953, 536870912
    %v955 = vshrl.u32 %v954, 30
    %v956 = vshll.u32 %v955, 30
    %v957 = vsub.s32 %v953, %v956
    %vm958 = vcmp.lt.s32.totalorder %v957, 0
    %v959 = vsub.s32 0, %v957
    %v960 = vsel %vm958, %v959, %v957
    %v961 = vclz %v960
    %v962 = vsub.s32 %v961, 2
    %vm963 = vcmp.gt.s32.totalorder 0, %v962
    %v964 = vsel %vm963, 0, %v962
    %v965 = vsub.s32 32, %v964
    %v966 = vshll.u32 %v957, %v964
    %v967 = vshrl.u32 %v949, %v965
    %v968 = vor.u32 %v966, %v967
    %v969 = vsub.s32 4294967266, %v964
    %v970 = vadd.s32 %v969, 127
    %v971 = vshll.u32 %v970, 23
    %v972 = vor.u32 4788187, %v971
    %v973 = vand.u32 2147483647, %v972
    %v975 = vcvt.s32.f32 %v968
    %v976 = vmul.f32 %v975, %v973
    %v977 = vxor.u32 %v976, 2147483648
    %v978 = vsel %vm895, %v977, %v976
    %v979 = vsub.s32 4, %v955
    %v980 = vsel %vm895, %v979, %v955
    %v981 = vsel %vm894, %v156, %v978
    %v982 = vsel %vm894, 0, %v980
    %v983 = vcosq.f32.pop %v981
    %v984 = vsinq.f32.pop %v981
    %vm985 = vweird.f32 %v156
    %v986 = vadd.s32 %v982, 3
    %v987 = vand.u32 %v986, 3
    %vm988 = vcmp.lt.s32.totalorder %v987, 2
    %vm989 = vcmp.eq.s32.totalorder %v987, 0
    %v990 = vxor.u32 %v984, 2147483648
    %v991 = vsel %vm989, %v983, %v990
    %vm992 = vcmp.eq.s32.totalorder %v987, 2
    %v993 = vxor.u32 %v983, 2147483648
    %v994 = vsel %vm992, %v993, %v984
    %v995 = vsel %vm988, %v991, %v994
    %v996 = vsel %vm985, nan, %v995
    %v997 = vand.u32 2147483647, %v157
    %vm998 = vcmp.le.f32.partialorder %v997, 0.7853982
    %vm999 = vcmp.lt.s32.totalorder %v157, 0
    %v1000 = vand.u32 %v157, 2139095040
    %v1001 = vshrl.u32 %v1000, 23
    %v1002 = vsub.s32 %v1001, 127
    %v1003 = vand.u32 2147483647, %v157
    %v1004 = vand.u32 %v1003, 8388607
    %v1005 = vor.u32 %v1004, 8388608
    %v1006 = vsub.s32 0, %v1005
    %v1007 = vadd.s32 %v1002, 1
    %vm1008 = vcmp.gt.s32.totalorder %v1007, 0
    %v1009 = vsel %vm1008, %v1007, 0
    %v1010 = vshrl.u32 %v1009, 5
    %v1011 = vand.u32 %v1009, 31
    %v1012 = vsub.s32 32, %v1011
    %v1013 = vshrl.u32 683565275, %v1012
    %v1014 = vshll.u32 683565275, %v1011
    %v1015 = vshrl.u32 2475754826, %v1012
    %v1016 = vor.u32 %v1014, %v1015
    %v1017 = vshll.u32 2475754826, %v1011
    %v1018 = vshrl.u32 2131351028, %v1012
    %v1019 = vor.u32 %v1017, %v1018
    %v1020 = vshll.u32 2131351028, %v1011
    %v1021 = vshrl.u32 2102212464, %v1012
    %v1022 = vor.u32 %v1020, %v1021
    %v1023 = vshll.u32 2102212464, %v1011
    %v1024 = vshrl.u32 920167782, %v1012
    %v1025 = vor.u32 %v1023, %v1024
    %v1026 = vshll.u32 920167782, %v1011
    %v1027 = vshrl.u32 1326507024, %v1012
    %v1028 = vor.u32 %v1026, %v1027
    %vm1029 = vcmp.lt.s32.totalorder %v1010, 1
    %vm1030 = vcmp.lt.s32.totalorder %v1010, 2
    %vm1031 = vcmp.lt.s32.totalorder %v1010, 3
    %vm1032 = vcmp.lt.s32.totalorder %v1010, 4
    %v1033 = vsel %vm1029, %v1013, %v1016
    %v1034 = vsel %vm1032, %v1022, 2102212464
    %v1035 = vsel %vm1031, %v1019, %v1034
    %v1036 = vsel %vm1030, %v1033, %v1035
    %v1037 = vsel %vm1029, %v1016, %v1019
    %v1038 = vsel %vm1032, %v1025, 920167782
    %v1039 = vsel %vm1031, %v1022, %v1038
    %v1040 = vsel %vm1030, %v1037, %v1039
    %v1041 = vsel %vm1029, %v1019, %v1022
    %v1042 = vsel %vm1032, %v1028, 1326507024
    %v1043 = vsel %vm1031, %v1025, %v1042
    %v1044 = vsel %vm1030, %v1041, %v1043
    %v1045 = vshll.u32 %v1005, 8
    %v1046 = vmul.u32.u64.compose %v1045, %v1044
    %v1047 = vextract.low.u32 %v1046
    %v1048 = vextract.high.u32 %v1046
    %v1049 = vmul.u32.u64.compose %v1045, %v1040
    %v1050 = vextract.low.u32 %v1049
    %v1051 = vextract.high.u32 %v1049
    %v1052 = vmul.u32 %v1045, %v1036
    %v1053 = vadd.s32 %v1048, %v1050
    %vm1054 = vc.u32 %v1048, %v1050
    %v1055 = vadd.s32 %v1051, 1
    %v1056 = vsel %vm1054, %v1055, %v1051
    %v1057 = vadd.s32 %v1052, %v1056
    %v1058 = vadd.s32 %v1057, 536870912
    %v1059 = vshrl.u32 %v1058, 30
    %v1060 = vshll.u32 %v1059, 30
    %v1061 = vsub.s32 %v1057, %v1060
    %vm1062 = vcmp.lt.s32.totalorder %v1061, 0
    %v1063 = vsub.s32 0, %v1061
    %v1064 = vsel %vm1062, %v1063, %v1061
    %v1065 = vclz %v1064
    %v1066 = vsub.s32 %v1065, 2
    %vm1067 = vcmp.gt.s32.totalorder 0, %v1066
    %v1068 = vsel %vm1067, 0, %v1066
    %v1069 = vsub.s32 32, %v1068
    %v1070 = vshll.u32 %v1061, %v1068
    %v1071 = vshrl.u32 %v1053, %v1069
    %v1072 = vor.u32 %v1070, %v1071
    %v1073 = vsub.s32 4294967266, %v1068
    %v1074 = vadd.s32 %v1073, 127
    %v1075 = vshll.u32 %v1074, 23
    %v1076 = vor.u32 4788187, %v1075
    %v1077 = vand.u32 2147483647, %v1076
    %v1079 = vcvt.s32.f32 %v1072
    %v1080 = vmul.f32 %v1079, %v1077
    %v1081 = vxor.u32 %v1080, 2147483648
    %v1082 = vsel %vm999, %v1081, %v1080
    %v1083 = vsub.s32 4, %v1059
    %v1084 = vsel %vm999, %v1083, %v1059
    %v1085 = vsel %vm998, %v157, %v1082
    %v1086 = vsel %vm998, 0, %v1084
    %v1087 = vcosq.f32.pop %v1085
    %v1088 = vsinq.f32.pop %v1085
    %vm1089 = vweird.f32 %v157
    %v1090 = vadd.s32 %v1086, 3
    %v1091 = vand.u32 %v1090, 3
    %vm1092 = vcmp.lt.s32.totalorder %v1091, 2
    %vm1093 = vcmp.eq.s32.totalorder %v1091, 0
    %v1094 = vxor.u32 %v1088, 2147483648
    %v1095 = vsel %vm1093, %v1087, %v1094
    %vm1096 = vcmp.eq.s32.totalorder %v1091, 2
    %v1097 = vxor.u32 %v1087, 2147483648
    %v1098 = vsel %vm1096, %v1097, %v1088
    %v1099 = vsel %vm1092, %v1095, %v1098
    %v1100 = vsel %vm1089, nan, %v1099
    %v1101 = vand.u32 2147483647, %v158
    %vm1102 = vcmp.le.f32.partialorder %v1101, 0.7853982
    %vm1103 = vcmp.lt.s32.totalorder %v158, 0
    %v1104 = vand.u32 %v158, 2139095040
    %v1105 = vshrl.u32 %v1104, 23
    %v1106 = vsub.s32 %v1105, 127
    %v1107 = vand.u32 2147483647, %v158
    %v1108 = vand.u32 %v1107, 8388607
    %v1109 = vor.u32 %v1108, 8388608
    %v1110 = vsub.s32 0, %v1109
    %v1111 = vadd.s32 %v1106, 1
    %vm1112 = vcmp.gt.s32.totalorder %v1111, 0
    %v1113 = vsel %vm1112, %v1111, 0
    %v1114 = vshrl.u32 %v1113, 5
    %v1115 = vand.u32 %v1113, 31
    %v1116 = vsub.s32 32, %v1115
    %v1117 = vshrl.u32 683565275, %v1116
    %v1118 = vshll.u32 683565275, %v1115
    %v1119 = vshrl.u32 2475754826, %v1116
    %v1120 = vor.u32 %v1118, %v1119
    %v1121 = vshll.u32 2475754826, %v1115
    %v1122 = vshrl.u32 2131351028, %v1116
    %v1123 = vor.u32 %v1121, %v1122
    %v1124 = vshll.u32 2131351028, %v1115
    %v1125 = vshrl.u32 2102212464, %v1116
    %v1126 = vor.u32 %v1124, %v1125
    %v1127 = vshll.u32 2102212464, %v1115
    %v1128 = vshrl.u32 920167782, %v1116
    %v1129 = vor.u32 %v1127, %v1128
    %v1130 = vshll.u32 920167782, %v1115
    %v1131 = vshrl.u32 1326507024, %v1116
    %v1132 = vor.u32 %v1130, %v1131
    %vm1133 = vcmp.lt.s32.totalorder %v1114, 1
    %vm1134 = vcmp.lt.s32.totalorder %v1114, 2
    %vm1135 = vcmp.lt.s32.totalorder %v1114, 3
    %vm1136 = vcmp.lt.s32.totalorder %v1114, 4
    %v1137 = vsel %vm1133, %v1117, %v1120
    %v1138 = vsel %vm1136, %v1126, 2102212464
    %v1139 = vsel %vm1135, %v1123, %v1138
    %v1140 = vsel %vm1134, %v1137, %v1139
    %v1141 = vsel %vm1133, %v1120, %v1123
    %v1142 = vsel %vm1136, %v1129, 920167782
    %v1143 = vsel %vm1135, %v1126, %v1142
    %v1144 = vsel %vm1134, %v1141, %v1143
    %v1145 = vsel %vm1133, %v1123, %v1126
    %v1146 = vsel %vm1136, %v1132, 1326507024
    %v1147 = vsel %vm1135, %v1129, %v1146
    %v1148 = vsel %vm1134, %v1145, %v1147
    %v1149 = vshll.u32 %v1109, 8
    %v1150 = vmul.u32.u64.compose %v1149, %v1148
    %v1151 = vextract.low.u32 %v1150
    %v1152 = vextract.high.u32 %v1150
    %v1153 = vmul.u32.u64.compose %v1149, %v1144
    %v1154 = vextract.low.u32 %v1153
    %v1155 = vextract.high.u32 %v1153
    %v1156 = vmul.u32 %v1149, %v1140
    %v1157 = vadd.s32 %v1152, %v1154
    %vm1158 = vc.u32 %v1152, %v1154
    %v1159 = vadd.s32 %v1155, 1
    %v1160 = vsel %vm1158, %v1159, %v1155
    %v1161 = vadd.s32 %v1156, %v1160
    %v1162 = vadd.s32 %v1161, 536870912
    %v1163 = vshrl.u32 %v1162, 30
    %v1164 = vshll.u32 %v1163, 30
    %v1165 = vsub.s32 %v1161, %v1164
    %vm1166 = vcmp.lt.s32.totalorder %v1165, 0
    %v1167 = vsub.s32 0, %v1165
    %v1168 = vsel %vm1166, %v1167, %v1165
    %v1169 = vclz %v1168
    %v1170 = vsub.s32 %v1169, 2
    %vm1171 = vcmp.gt.s32.totalorder 0, %v1170
    %v1172 = vsel %vm1171, 0, %v1170
    %v1173 = vsub.s32 32, %v1172
    %v1174 = vshll.u32 %v1165, %v1172
    %v1175 = vshrl.u32 %v1157, %v1173
    %v1176 = vor.u32 %v1174, %v1175
    %v1177 = vsub.s32 4294967266, %v1172
    %v1178 = vadd.s32 %v1177, 127
    %v1179 = vshll.u32 %v1178, 23
    %v1180 = vor.u32 4788187, %v1179
    %v1181 = vand.u32 2147483647, %v1180
    %v1183 = vcvt.s32.f32 %v1176
    %v1184 = vmul.f32 %v1183, %v1181
    %v1185 = vxor.u32 %v1184, 2147483648
    %v1186 = vsel %vm1103, %v1185, %v1184
    %v1187 = vsub.s32 4, %v1163
    %v1188 = vsel %vm1103, %v1187, %v1163
    %v1189 = vsel %vm1102, %v158, %v1186
    %v1190 = vsel %vm1102, 0, %v1188
    %v1191 = vcosq.f32.pop %v1189
    %v1192 = vsinq.f32.pop %v1189
    %vm1193 = vweird.f32 %v158
    %v1194 = vadd.s32 %v1190, 3
    %v1195 = vand.u32 %v1194, 3
    %vm1196 = vcmp.lt.s32.totalorder %v1195, 2
    %vm1197 = vcmp.eq.s32.totalorder %v1195, 0
    %v1198 = vxor.u32 %v1192, 2147483648
    %v1199 = vsel %vm1197, %v1191, %v1198
    %vm1200 = vcmp.eq.s32.totalorder %v1195, 2
    %v1201 = vxor.u32 %v1191, 2147483648
    %v1202 = vsel %vm1200, %v1201, %v1192
    %v1203 = vsel %vm1196, %v1199, %v1202
    %v1204 = vsel %vm1193, nan, %v1203
    %v1205 = vand.u32 2147483647, %v159
    %vm1206 = vcmp.le.f32.partialorder %v1205, 0.7853982
    %vm1207 = vcmp.lt.s32.totalorder %v159, 0
    %v1208 = vand.u32 %v159, 2139095040
    %v1209 = vshrl.u32 %v1208, 23
    %v1210 = vsub.s32 %v1209, 127
    %v1211 = vand.u32 2147483647, %v159
    %v1212 = vand.u32 %v1211, 8388607
    %v1213 = vor.u32 %v1212, 8388608
    %v1214 = vsub.s32 0, %v1213
    %v1215 = vadd.s32 %v1210, 1
    %vm1216 = vcmp.gt.s32.totalorder %v1215, 0
    %v1217 = vsel %vm1216, %v1215, 0
    %v1218 = vshrl.u32 %v1217, 5
    %v1219 = vand.u32 %v1217, 31
    %v1220 = vsub.s32 32, %v1219
    %v1221 = vshrl.u32 683565275, %v1220
    %v1222 = vshll.u32 683565275, %v1219
    %v1223 = vshrl.u32 2475754826, %v1220
    %v1224 = vor.u32 %v1222, %v1223
    %v1225 = vshll.u32 2475754826, %v1219
    %v1226 = vshrl.u32 2131351028, %v1220
    %v1227 = vor.u32 %v1225, %v1226
    %v1228 = vshll.u32 2131351028, %v1219
    %v1229 = vshrl.u32 2102212464, %v1220
    %v1230 = vor.u32 %v1228, %v1229
    %v1231 = vshll.u32 2102212464, %v1219
    %v1232 = vshrl.u32 920167782, %v1220
    %v1233 = vor.u32 %v1231, %v1232
    %v1234 = vshll.u32 920167782, %v1219
    %v1235 = vshrl.u32 1326507024, %v1220
    %v1236 = vor.u32 %v1234, %v1235
    %vm1237 = vcmp.lt.s32.totalorder %v1218, 1
    %vm1238 = vcmp.lt.s32.totalorder %v1218, 2
    %vm1239 = vcmp.lt.s32.totalorder %v1218, 3
    %vm1240 = vcmp.lt.s32.totalorder %v1218, 4
    %v1241 = vsel %vm1237, %v1221, %v1224
    %v1242 = vsel %vm1240, %v1230, 2102212464
    %v1243 = vsel %vm1239, %v1227, %v1242
    %v1244 = vsel %vm1238, %v1241, %v1243
    %v1245 = vsel %vm1237, %v1224, %v1227
    %v1246 = vsel %vm1240, %v1233, 920167782
    %v1247 = vsel %vm1239, %v1230, %v1246
    %v1248 = vsel %vm1238, %v1245, %v1247
    %v1249 = vsel %vm1237, %v1227, %v1230
    %v1250 = vsel %vm1240, %v1236, 1326507024
    %v1251 = vsel %vm1239, %v1233, %v1250
    %v1252 = vsel %vm1238, %v1249, %v1251
    %v1253 = vshll.u32 %v1213, 8
    %v1254 = vmul.u32.u64.compose %v1253, %v1252
    %v1255 = vextract.low.u32 %v1254
    %v1256 = vextract.high.u32 %v1254
    %v1257 = vmul.u32.u64.compose %v1253, %v1248
    %v1258 = vextract.low.u32 %v1257
    %v1259 = vextract.high.u32 %v1257
    %v1260 = vmul.u32 %v1253, %v1244
    %v1261 = vadd.s32 %v1256, %v1258
    %vm1262 = vc.u32 %v1256, %v1258
    %v1263 = vadd.s32 %v1259, 1
    %v1264 = vsel %vm1262, %v1263, %v1259
    %v1265 = vadd.s32 %v1260, %v1264
    %v1266 = vadd.s32 %v1265, 536870912
    %v1267 = vshrl.u32 %v1266, 30
    %v1268 = vshll.u32 %v1267, 30
    %v1269 = vsub.s32 %v1265, %v1268
    %vm1270 = vcmp.lt.s32.totalorder %v1269, 0
    %v1271 = vsub.s32 0, %v1269
    %v1272 = vsel %vm1270, %v1271, %v1269
    %v1273 = vclz %v1272
    %v1274 = vsub.s32 %v1273, 2
    %vm1275 = vcmp.gt.s32.totalorder 0, %v1274
    %v1276 = vsel %vm1275, 0, %v1274
    %v1277 = vsub.s32 32, %v1276
    %v1278 = vshll.u32 %v1269, %v1276
    %v1279 = vshrl.u32 %v1261, %v1277
    %v1280 = vor.u32 %v1278, %v1279
    %v1281 = vsub.s32 4294967266, %v1276
    %v1282 = vadd.s32 %v1281, 127
    %v1283 = vshll.u32 %v1282, 23
    %v1284 = vor.u32 4788187, %v1283
    %v1285 = vand.u32 2147483647, %v1284
    %v1287 = vcvt.s32.f32 %v1280
    %v1288 = vmul.f32 %v1287, %v1285
    %v1289 = vxor.u32 %v1288, 2147483648
    %v1290 = vsel %vm1207, %v1289, %v1288
    %v1291 = vsub.s32 4, %v1267
    %v1292 = vsel %vm1207, %v1291, %v1267
    %v1293 = vsel %vm1206, %v159, %v1290
    %v1294 = vsel %vm1206, 0, %v1292
    %v1295 = vcosq.f32.pop %v1293
    %v1296 = vsinq.f32.pop %v1293
    %vm1297 = vweird.f32 %v159
    %v1298 = vadd.s32 %v1294, 3
    %v1299 = vand.u32 %v1298, 3
    %vm1300 = vcmp.lt.s32.totalorder %v1299, 2
    %vm1301 = vcmp.eq.s32.totalorder %v1299, 0
    %v1302 = vxor.u32 %v1296, 2147483648
    %v1303 = vsel %vm1301, %v1295, %v1302
    %vm1304 = vcmp.eq.s32.totalorder %v1299, 2
    %v1305 = vxor.u32 %v1295, 2147483648
    %v1306 = vsel %vm1304, %v1305, %v1296
    %v1307 = vsel %vm1300, %v1303, %v1306
    %v1308 = vsel %vm1297, nan, %v1307
    %v1309 = vand.u32 2147483647, %v160
    %vm1310 = vcmp.le.f32.partialorder %v1309, 0.7853982
    %vm1311 = vcmp.lt.s32.totalorder %v160, 0
    %v1312 = vand.u32 %v160, 2139095040
    %v1313 = vshrl.u32 %v1312, 23
    %v1314 = vsub.s32 %v1313, 127
    %v1315 = vand.u32 2147483647, %v160
    %v1316 = vand.u32 %v1315, 8388607
    %v1317 = vor.u32 %v1316, 8388608
    %v1318 = vsub.s32 0, %v1317
    %v1319 = vadd.s32 %v1314, 1
    %vm1320 = vcmp.gt.s32.totalorder %v1319, 0
    %v1321 = vsel %vm1320, %v1319, 0
    %v1322 = vshrl.u32 %v1321, 5
    %v1323 = vand.u32 %v1321, 31
    %v1324 = vsub.s32 32, %v1323
    %v1325 = vshrl.u32 683565275, %v1324
    %v1326 = vshll.u32 683565275, %v1323
    %v1327 = vshrl.u32 2475754826, %v1324
    %v1328 = vor.u32 %v1326, %v1327
    %v1329 = vshll.u32 2475754826, %v1323
    %v1330 = vshrl.u32 2131351028, %v1324
    %v1331 = vor.u32 %v1329, %v1330
    %v1332 = vshll.u32 2131351028, %v1323
    %v1333 = vshrl.u32 2102212464, %v1324
    %v1334 = vor.u32 %v1332, %v1333
    %v1335 = vshll.u32 2102212464, %v1323
    %v1336 = vshrl.u32 920167782, %v1324
    %v1337 = vor.u32 %v1335, %v1336
    %v1338 = vshll.u32 920167782, %v1323
    %v1339 = vshrl.u32 1326507024, %v1324
    %v1340 = vor.u32 %v1338, %v1339
    %vm1341 = vcmp.lt.s32.totalorder %v1322, 1
    %vm1342 = vcmp.lt.s32.totalorder %v1322, 2
    %vm1343 = vcmp.lt.s32.totalorder %v1322, 3
    %vm1344 = vcmp.lt.s32.totalorder %v1322, 4
    %v1345 = vsel %vm1341, %v1325, %v1328
    %v1346 = vsel %vm1344, %v1334, 2102212464
    %v1347 = vsel %vm1343, %v1331, %v1346
    %v1348 = vsel %vm1342, %v1345, %v1347
    %v1349 = vsel %vm1341, %v1328, %v1331
    %v1350 = vsel %vm1344, %v1337, 920167782
    %v1351 = vsel %vm1343, %v1334, %v1350
    %v1352 = vsel %vm1342, %v1349, %v1351
    %v1353 = vsel %vm1341, %v1331, %v1334
    %v1354 = vsel %vm1344, %v1340, 1326507024
    %v1355 = vsel %vm1343, %v1337, %v1354
    %v1356 = vsel %vm1342, %v1353, %v1355
    %v1357 = vshll.u32 %v1317, 8
    %v1358 = vmul.u32.u64.compose %v1357, %v1356
    %v1359 = vextract.low.u32 %v1358
    %v1360 = vextract.high.u32 %v1358
    %v1361 = vmul.u32.u64.compose %v1357, %v1352
    %v1362 = vextract.low.u32 %v1361
    %v1363 = vextract.high.u32 %v1361
    %v1364 = vmul.u32 %v1357, %v1348
    %v1365 = vadd.s32 %v1360, %v1362
    %vm1366 = vc.u32 %v1360, %v1362
    %v1367 = vadd.s32 %v1363, 1
    %v1368 = vsel %vm1366, %v1367, %v1363
    %v1369 = vadd.s32 %v1364, %v1368
    %v1370 = vadd.s32 %v1369, 536870912
    %v1371 = vshrl.u32 %v1370, 30
    %v1372 = vshll.u32 %v1371, 30
    %v1373 = vsub.s32 %v1369, %v1372
    %vm1374 = vcmp.lt.s32.totalorder %v1373, 0
    %v1375 = vsub.s32 0, %v1373
    %v1376 = vsel %vm1374, %v1375, %v1373
    %v1377 = vclz %v1376
    %v1378 = vsub.s32 %v1377, 2
    %vm1379 = vcmp.gt.s32.totalorder 0, %v1378
    %v1380 = vsel %vm1379, 0, %v1378
    %v1381 = vsub.s32 32, %v1380
    %v1382 = vshll.u32 %v1373, %v1380
    %v1383 = vshrl.u32 %v1365, %v1381
    %v1384 = vor.u32 %v1382, %v1383
    %v1385 = vsub.s32 4294967266, %v1380
    %v1386 = vadd.s32 %v1385, 127
    %v1387 = vshll.u32 %v1386, 23
    %v1388 = vor.u32 4788187, %v1387
    %v1389 = vand.u32 2147483647, %v1388
    %v1391 = vcvt.s32.f32 %v1384
    %v1392 = vmul.f32 %v1391, %v1389
    %v1393 = vxor.u32 %v1392, 2147483648
    %v1394 = vsel %vm1311, %v1393, %v1392
    %v1395 = vsub.s32 4, %v1371
    %v1396 = vsel %vm1311, %v1395, %v1371
    %v1397 = vsel %vm1310, %v160, %v1394
    %v1398 = vsel %vm1310, 0, %v1396
    %v1399 = vcosq.f32.pop %v1397
    %v1400 = vsinq.f32.pop %v1397
    %vm1401 = vweird.f32 %v160
    %v1402 = vadd.s32 %v1398, 3
    %v1403 = vand.u32 %v1402, 3
    %vm1404 = vcmp.lt.s32.totalorder %v1403, 2
    %vm1405 = vcmp.eq.s32.totalorder %v1403, 0
    %v1406 = vxor.u32 %v1400, 2147483648
    %v1407 = vsel %vm1405, %v1399, %v1406
    %vm1408 = vcmp.eq.s32.totalorder %v1403, 2
    %v1409 = vxor.u32 %v1399, 2147483648
    %v1410 = vsel %vm1408, %v1409, %v1400
    %v1411 = vsel %vm1404, %v1407, %v1410
    %v1412 = vsel %vm1401, nan, %v1411
    %v1413 = vand.u32 2147483647, %v161
    %vm1414 = vcmp.le.f32.partialorder %v1413, 0.7853982
    %vm1415 = vcmp.lt.s32.totalorder %v161, 0
    %v1416 = vand.u32 %v161, 2139095040
    %v1417 = vshrl.u32 %v1416, 23
    %v1418 = vsub.s32 %v1417, 127
    %v1419 = vand.u32 2147483647, %v161
    %v1420 = vand.u32 %v1419, 8388607
    %v1421 = vor.u32 %v1420, 8388608
    %v1422 = vsub.s32 0, %v1421
    %v1423 = vadd.s32 %v1418, 1
    %vm1424 = vcmp.gt.s32.totalorder %v1423, 0
    %v1425 = vsel %vm1424, %v1423, 0
    %v1426 = vshrl.u32 %v1425, 5
    %v1427 = vand.u32 %v1425, 31
    %v1428 = vsub.s32 32, %v1427
    %v1429 = vshrl.u32 683565275, %v1428
    %v1430 = vshll.u32 683565275, %v1427
    %v1431 = vshrl.u32 2475754826, %v1428
    %v1432 = vor.u32 %v1430, %v1431
    %v1433 = vshll.u32 2475754826, %v1427
    %v1434 = vshrl.u32 2131351028, %v1428
    %v1435 = vor.u32 %v1433, %v1434
    %v1436 = vshll.u32 2131351028, %v1427
    %v1437 = vshrl.u32 2102212464, %v1428
    %v1438 = vor.u32 %v1436, %v1437
    %v1439 = vshll.u32 2102212464, %v1427
    %v1440 = vshrl.u32 920167782, %v1428
    %v1441 = vor.u32 %v1439, %v1440
    %v1442 = vshll.u32 920167782, %v1427
    %v1443 = vshrl.u32 1326507024, %v1428
    %v1444 = vor.u32 %v1442, %v1443
    %vm1445 = vcmp.lt.s32.totalorder %v1426, 1
    %vm1446 = vcmp.lt.s32.totalorder %v1426, 2
    %vm1447 = vcmp.lt.s32.totalorder %v1426, 3
    %vm1448 = vcmp.lt.s32.totalorder %v1426, 4
    %v1449 = vsel %vm1445, %v1429, %v1432
    %v1450 = vsel %vm1448, %v1438, 2102212464
    %v1451 = vsel %vm1447, %v1435, %v1450
    %v1452 = vsel %vm1446, %v1449, %v1451
    %v1453 = vsel %vm1445, %v1432, %v1435
    %v1454 = vsel %vm1448, %v1441, 920167782
    %v1455 = vsel %vm1447, %v1438, %v1454
    %v1456 = vsel %vm1446, %v1453, %v1455
    %v1457 = vsel %vm1445, %v1435, %v1438
    %v1458 = vsel %vm1448, %v1444, 1326507024
    %v1459 = vsel %vm1447, %v1441, %v1458
    %v1460 = vsel %vm1446, %v1457, %v1459
    %v1461 = vshll.u32 %v1421, 8
    %v1462 = vmul.u32.u64.compose %v1461, %v1460
    %v1463 = vextract.low.u32 %v1462
    %v1464 = vextract.high.u32 %v1462
    %v1465 = vmul.u32.u64.compose %v1461, %v1456
    %v1466 = vextract.low.u32 %v1465
    %v1467 = vextract.high.u32 %v1465
    %v1468 = vmul.u32 %v1461, %v1452
    %v1469 = vadd.s32 %v1464, %v1466
    %vm1470 = vc.u32 %v1464, %v1466
    %v1471 = vadd.s32 %v1467, 1
    %v1472 = vsel %vm1470, %v1471, %v1467
    %v1473 = vadd.s32 %v1468, %v1472
    %v1474 = vadd.s32 %v1473, 536870912
    %v1475 = vshrl.u32 %v1474, 30
    %v1476 = vshll.u32 %v1475, 30
    %v1477 = vsub.s32 %v1473, %v1476
    %vm1478 = vcmp.lt.s32.totalorder %v1477, 0
    %v1479 = vsub.s32 0, %v1477
    %v1480 = vsel %vm1478, %v1479, %v1477
    %v1481 = vclz %v1480
    %v1482 = vsub.s32 %v1481, 2
    %vm1483 = vcmp.gt.s32.totalorder 0, %v1482
    %v1484 = vsel %vm1483, 0, %v1482
    %v1485 = vsub.s32 32, %v1484
    %v1486 = vshll.u32 %v1477, %v1484
    %v1487 = vshrl.u32 %v1469, %v1485
    %v1488 = vor.u32 %v1486, %v1487
    %v1489 = vsub.s32 4294967266, %v1484
    %v1490 = vadd.s32 %v1489, 127
    %v1491 = vshll.u32 %v1490, 23
    %v1492 = vor.u32 4788187, %v1491
    %v1493 = vand.u32 2147483647, %v1492
    %v1495 = vcvt.s32.f32 %v1488
    %v1496 = vmul.f32 %v1495, %v1493
    %v1497 = vxor.u32 %v1496, 2147483648
    %v1498 = vsel %vm1415, %v1497, %v1496
    %v1499 = vsub.s32 4, %v1475
    %v1500 = vsel %vm1415, %v1499, %v1475
    %v1501 = vsel %vm1414, %v161, %v1498
    %v1502 = vsel %vm1414, 0, %v1500
    %v1503 = vcosq.f32.pop %v1501
    %v1504 = vsinq.f32.pop %v1501
    %vm1505 = vweird.f32 %v161
    %v1506 = vadd.s32 %v1502, 3
    %v1507 = vand.u32 %v1506, 3
    %vm1508 = vcmp.lt.s32.totalorder %v1507, 2
    %vm1509 = vcmp.eq.s32.totalorder %v1507, 0
    %v1510 = vxor.u32 %v1504, 2147483648
    %v1511 = vsel %vm1509, %v1503, %v1510
    %vm1512 = vcmp.eq.s32.totalorder %v1507, 2
    %v1513 = vxor.u32 %v1503, 2147483648
    %v1514 = vsel %vm1512, %v1513, %v1504
    %v1515 = vsel %vm1508, %v1511, %v1514
    %v1516 = vsel %vm1505, nan, %v1515
    %v1517 = vand.u32 2147483647, %v162
    %vm1518 = vcmp.le.f32.partialorder %v1517, 0.7853982
    %vm1519 = vcmp.lt.s32.totalorder %v162, 0
    %v1520 = vand.u32 %v162, 2139095040
    %v1521 = vshrl.u32 %v1520, 23
    %v1522 = vsub.s32 %v1521, 127
    %v1523 = vand.u32 2147483647, %v162
    %v1524 = vand.u32 %v1523, 8388607
    %v1525 = vor.u32 %v1524, 8388608
    %v1526 = vsub.s32 0, %v1525
    %v1527 = vadd.s32 %v1522, 1
    %vm1528 = vcmp.gt.s32.totalorder %v1527, 0
    %v1529 = vsel %vm1528, %v1527, 0
    %v1530 = vshrl.u32 %v1529, 5
    %v1531 = vand.u32 %v1529, 31
    %v1532 = vsub.s32 32, %v1531
    %v1533 = vshrl.u32 683565275, %v1532
    %v1534 = vshll.u32 683565275, %v1531
    %v1535 = vshrl.u32 2475754826, %v1532
    %v1536 = vor.u32 %v1534, %v1535
    %v1537 = vshll.u32 2475754826, %v1531
    %v1538 = vshrl.u32 2131351028, %v1532
    %v1539 = vor.u32 %v1537, %v1538
    %v1540 = vshll.u32 2131351028, %v1531
    %v1541 = vshrl.u32 2102212464, %v1532
    %v1542 = vor.u32 %v1540, %v1541
    %v1543 = vshll.u32 2102212464, %v1531
    %v1544 = vshrl.u32 920167782, %v1532
    %v1545 = vor.u32 %v1543, %v1544
    %v1546 = vshll.u32 920167782, %v1531
    %v1547 = vshrl.u32 1326507024, %v1532
    %v1548 = vor.u32 %v1546, %v1547
    %vm1549 = vcmp.lt.s32.totalorder %v1530, 1
    %vm1550 = vcmp.lt.s32.totalorder %v1530, 2
    %vm1551 = vcmp.lt.s32.totalorder %v1530, 3
    %vm1552 = vcmp.lt.s32.totalorder %v1530, 4
    %v1553 = vsel %vm1549, %v1533, %v1536
    %v1554 = vsel %vm1552, %v1542, 2102212464
    %v1555 = vsel %vm1551, %v1539, %v1554
    %v1556 = vsel %vm1550, %v1553, %v1555
    %v1557 = vsel %vm1549, %v1536, %v1539
    %v1558 = vsel %vm1552, %v1545, 920167782
    %v1559 = vsel %vm1551, %v1542, %v1558
    %v1560 = vsel %vm1550, %v1557, %v1559
    %v1561 = vsel %vm1549, %v1539, %v1542
    %v1562 = vsel %vm1552, %v1548, 1326507024
    %v1563 = vsel %vm1551, %v1545, %v1562
    %v1564 = vsel %vm1550, %v1561, %v1563
    %v1565 = vshll.u32 %v1525, 8
    %v1566 = vmul.u32.u64.compose %v1565, %v1564
    %v1567 = vextract.low.u32 %v1566
    %v1568 = vextract.high.u32 %v1566
    %v1569 = vmul.u32.u64.compose %v1565, %v1560
    %v1570 = vextract.low.u32 %v1569
    %v1571 = vextract.high.u32 %v1569
    %v1572 = vmul.u32 %v1565, %v1556
    %v1573 = vadd.s32 %v1568, %v1570
    %vm1574 = vc.u32 %v1568, %v1570
    %v1575 = vadd.s32 %v1571, 1
    %v1576 = vsel %vm1574, %v1575, %v1571
    %v1577 = vadd.s32 %v1572, %v1576
    %v1578 = vadd.s32 %v1577, 536870912
    %v1579 = vshrl.u32 %v1578, 30
    %v1580 = vshll.u32 %v1579, 30
    %v1581 = vsub.s32 %v1577, %v1580
    %vm1582 = vcmp.lt.s32.totalorder %v1581, 0
    %v1583 = vsub.s32 0, %v1581
    %v1584 = vsel %vm1582, %v1583, %v1581
    %v1585 = vclz %v1584
    %v1586 = vsub.s32 %v1585, 2
    %vm1587 = vcmp.gt.s32.totalorder 0, %v1586
    %v1588 = vsel %vm1587, 0, %v1586
    %v1589 = vsub.s32 32, %v1588
    %v1590 = vshll.u32 %v1581, %v1588
    %v1591 = vshrl.u32 %v1573, %v1589
    %v1592 = vor.u32 %v1590, %v1591
    %v1593 = vsub.s32 4294967266, %v1588
    %v1594 = vadd.s32 %v1593, 127
    %v1595 = vshll.u32 %v1594, 23
    %v1596 = vor.u32 4788187, %v1595
    %v1597 = vand.u32 2147483647, %v1596
    %v1599 = vcvt.s32.f32 %v1592
    %v1600 = vmul.f32 %v1599, %v1597
    %v1601 = vxor.u32 %v1600, 2147483648
    %v1602 = vsel %vm1519, %v1601, %v1600
    %v1603 = vsub.s32 4, %v1579
    %v1604 = vsel %vm1519, %v1603, %v1579
    %v1605 = vsel %vm1518, %v162, %v1602
    %v1606 = vsel %vm1518, 0, %v1604
    %v1607 = vcosq.f32.pop %v1605
    %v1608 = vsinq.f32.pop %v1605
    %vm1609 = vweird.f32 %v162
    %v1610 = vadd.s32 %v1606, 3
    %v1611 = vand.u32 %v1610, 3
    %vm1612 = vcmp.lt.s32.totalorder %v1611, 2
    %vm1613 = vcmp.eq.s32.totalorder %v1611, 0
    %v1614 = vxor.u32 %v1608, 2147483648
    %v1615 = vsel %vm1613, %v1607, %v1614
    %vm1616 = vcmp.eq.s32.totalorder %v1611, 2
    %v1617 = vxor.u32 %v1607, 2147483648
    %v1618 = vsel %vm1616, %v1617, %v1608
    %v1619 = vsel %vm1612, %v1615, %v1618
    %v1620 = vsel %vm1609, nan, %v1619
    %v1621 = vand.u32 2147483647, %v163
    %vm1622 = vcmp.le.f32.partialorder %v1621, 0.7853982
    %vm1623 = vcmp.lt.s32.totalorder %v163, 0
    %v1624 = vand.u32 %v163, 2139095040
    %v1625 = vshrl.u32 %v1624, 23
    %v1626 = vsub.s32 %v1625, 127
    %v1627 = vand.u32 2147483647, %v163
    %v1628 = vand.u32 %v1627, 8388607
    %v1629 = vor.u32 %v1628, 8388608
    %v1630 = vsub.s32 0, %v1629
    %v1631 = vadd.s32 %v1626, 1
    %vm1632 = vcmp.gt.s32.totalorder %v1631, 0
    %v1633 = vsel %vm1632, %v1631, 0
    %v1634 = vshrl.u32 %v1633, 5
    %v1635 = vand.u32 %v1633, 31
    %v1636 = vsub.s32 32, %v1635
    %v1637 = vshrl.u32 683565275, %v1636
    %v1638 = vshll.u32 683565275, %v1635
    %v1639 = vshrl.u32 2475754826, %v1636
    %v1640 = vor.u32 %v1638, %v1639
    %v1641 = vshll.u32 2475754826, %v1635
    %v1642 = vshrl.u32 2131351028, %v1636
    %v1643 = vor.u32 %v1641, %v1642
    %v1644 = vshll.u32 2131351028, %v1635
    %v1645 = vshrl.u32 2102212464, %v1636
    %v1646 = vor.u32 %v1644, %v1645
    %v1647 = vshll.u32 2102212464, %v1635
    %v1648 = vshrl.u32 920167782, %v1636
    %v1649 = vor.u32 %v1647, %v1648
    %v1650 = vshll.u32 920167782, %v1635
    %v1651 = vshrl.u32 1326507024, %v1636
    %v1652 = vor.u32 %v1650, %v1651
    %vm1653 = vcmp.lt.s32.totalorder %v1634, 1
    %vm1654 = vcmp.lt.s32.totalorder %v1634, 2
    %vm1655 = vcmp.lt.s32.totalorder %v1634, 3
    %vm1656 = vcmp.lt.s32.totalorder %v1634, 4
    %v1657 = vsel %vm1653, %v1637, %v1640
    %v1658 = vsel %vm1656, %v1646, 2102212464
    %v1659 = vsel %vm1655, %v1643, %v1658
    %v1660 = vsel %vm1654, %v1657, %v1659
    %v1661 = vsel %vm1653, %v1640, %v1643
    %v1662 = vsel %vm1656, %v1649, 920167782
    %v1663 = vsel %vm1655, %v1646, %v1662
    %v1664 = vsel %vm1654, %v1661, %v1663
    %v1665 = vsel %vm1653, %v1643, %v1646
    %v1666 = vsel %vm1656, %v1652, 1326507024
    %v1667 = vsel %vm1655, %v1649, %v1666
    %v1668 = vsel %vm1654, %v1665, %v1667
    %v1669 = vshll.u32 %v1629, 8
    %v1670 = vmul.u32.u64.compose %v1669, %v1668
    %v1671 = vextract.low.u32 %v1670
    %v1672 = vextract.high.u32 %v1670
    %v1673 = vmul.u32.u64.compose %v1669, %v1664
    %v1674 = vextract.low.u32 %v1673
    %v1675 = vextract.high.u32 %v1673
    %v1676 = vmul.u32 %v1669, %v1660
    %v1677 = vadd.s32 %v1672, %v1674
    %vm1678 = vc.u32 %v1672, %v1674
    %v1679 = vadd.s32 %v1675, 1
    %v1680 = vsel %vm1678, %v1679, %v1675
    %v1681 = vadd.s32 %v1676, %v1680
    %v1682 = vadd.s32 %v1681, 536870912
    %v1683 = vshrl.u32 %v1682, 30
    %v1684 = vshll.u32 %v1683, 30
    %v1685 = vsub.s32 %v1681, %v1684
    %vm1686 = vcmp.lt.s32.totalorder %v1685, 0
    %v1687 = vsub.s32 0, %v1685
    %v1688 = vsel %vm1686, %v1687, %v1685
    %v1689 = vclz %v1688
    %v1690 = vsub.s32 %v1689, 2
    %vm1691 = vcmp.gt.s32.totalorder 0, %v1690
    %v1692 = vsel %vm1691, 0, %v1690
    %v1693 = vsub.s32 32, %v1692
    %v1694 = vshll.u32 %v1685, %v1692
    %v1695 = vshrl.u32 %v1677, %v1693
    %v1696 = vor.u32 %v1694, %v1695
    %v1697 = vsub.s32 4294967266, %v1692
    %v1698 = vadd.s32 %v1697, 127
    %v1699 = vshll.u32 %v1698, 23
    %v1700 = vor.u32 4788187, %v1699
    %v1701 = vand.u32 2147483647, %v1700
    %v1703 = vcvt.s32.f32 %v1696
    %v1704 = vmul.f32 %v1703, %v1701
    %v1705 = vxor.u32 %v1704, 2147483648
    %v1706 = vsel %vm1623, %v1705, %v1704
    %v1707 = vsub.s32 4, %v1683
    %v1708 = vsel %vm1623, %v1707, %v1683
    %v1709 = vsel %vm1622, %v163, %v1706
    %v1710 = vsel %vm1622, 0, %v1708
    %v1711 = vcosq.f32.pop %v1709
    %v1712 = vsinq.f32.pop %v1709
    %vm1713 = vweird.f32 %v163
    %v1714 = vadd.s32 %v1710, 3
    %v1715 = vand.u32 %v1714, 3
    %vm1716 = vcmp.lt.s32.totalorder %v1715, 2
    %vm1717 = vcmp.eq.s32.totalorder %v1715, 0
    %v1718 = vxor.u32 %v1712, 2147483648
    %v1719 = vsel %vm1717, %v1711, %v1718
    %vm1720 = vcmp.eq.s32.totalorder %v1715, 2
    %v1721 = vxor.u32 %v1711, 2147483648
    %v1722 = vsel %vm1720, %v1721, %v1712
    %v1723 = vsel %vm1716, %v1719, %v1722
    %v1724 = vsel %vm1713, nan, %v1723
    %v1725 = vand.u32 2147483647, %v164
    %vm1726 = vcmp.le.f32.partialorder %v1725, 0.7853982
    %vm1727 = vcmp.lt.s32.totalorder %v164, 0
    %v1728 = vand.u32 %v164, 2139095040
    %v1729 = vshrl.u32 %v1728, 23
    %v1730 = vsub.s32 %v1729, 127
    %v1731 = vand.u32 2147483647, %v164
    %v1732 = vand.u32 %v1731, 8388607
    %v1733 = vor.u32 %v1732, 8388608
    %v1734 = vsub.s32 0, %v1733
    %v1735 = vadd.s32 %v1730, 1
    %vm1736 = vcmp.gt.s32.totalorder %v1735, 0
    %v1737 = vsel %vm1736, %v1735, 0
    %v1738 = vshrl.u32 %v1737, 5
    %v1739 = vand.u32 %v1737, 31
    %v1740 = vsub.s32 32, %v1739
    %v1741 = vshrl.u32 683565275, %v1740
    %v1742 = vshll.u32 683565275, %v1739
    %v1743 = vshrl.u32 2475754826, %v1740
    %v1744 = vor.u32 %v1742, %v1743
    %v1745 = vshll.u32 2475754826, %v1739
    %v1746 = vshrl.u32 2131351028, %v1740
    %v1747 = vor.u32 %v1745, %v1746
    %v1748 = vshll.u32 2131351028, %v1739
    %v1749 = vshrl.u32 2102212464, %v1740
    %v1750 = vor.u32 %v1748, %v1749
    %v1751 = vshll.u32 2102212464, %v1739
    %v1752 = vshrl.u32 920167782, %v1740
    %v1753 = vor.u32 %v1751, %v1752
    %v1754 = vshll.u32 920167782, %v1739
    %v1755 = vshrl.u32 1326507024, %v1740
    %v1756 = vor.u32 %v1754, %v1755
    %vm1757 = vcmp.lt.s32.totalorder %v1738, 1
    %vm1758 = vcmp.lt.s32.totalorder %v1738, 2
    %vm1759 = vcmp.lt.s32.totalorder %v1738, 3
    %vm1760 = vcmp.lt.s32.totalorder %v1738, 4
    %v1761 = vsel %vm1757, %v1741, %v1744
    %v1762 = vsel %vm1760, %v1750, 2102212464
    %v1763 = vsel %vm1759, %v1747, %v1762
    %v1764 = vsel %vm1758, %v1761, %v1763
    %v1765 = vsel %vm1757, %v1744, %v1747
    %v1766 = vsel %vm1760, %v1753, 920167782
    %v1767 = vsel %vm1759, %v1750, %v1766
    %v1768 = vsel %vm1758, %v1765, %v1767
    %v1769 = vsel %vm1757, %v1747, %v1750
    %v1770 = vsel %vm1760, %v1756, 1326507024
    %v1771 = vsel %vm1759, %v1753, %v1770
    %v1772 = vsel %vm1758, %v1769, %v1771
    %v1773 = vshll.u32 %v1733, 8
    %v1774 = vmul.u32.u64.compose %v1773, %v1772
    %v1775 = vextract.low.u32 %v1774
    %v1776 = vextract.high.u32 %v1774
    %v1777 = vmul.u32.u64.compose %v1773, %v1768
    %v1778 = vextract.low.u32 %v1777
    %v1779 = vextract.high.u32 %v1777
    %v1780 = vmul.u32 %v1773, %v1764
    %v1781 = vadd.s32 %v1776, %v1778
    %vm1782 = vc.u32 %v1776, %v1778
    %v1783 = vadd.s32 %v1779, 1
    %v1784 = vsel %vm1782, %v1783, %v1779
    %v1785 = vadd.s32 %v1780, %v1784
    %v1786 = vadd.s32 %v1785, 536870912
    %v1787 = vshrl.u32 %v1786, 30
    %v1788 = vshll.u32 %v1787, 30
    %v1789 = vsub.s32 %v1785, %v1788
    %vm1790 = vcmp.lt.s32.totalorder %v1789, 0
    %v1791 = vsub.s32 0, %v1789
    %v1792 = vsel %vm1790, %v1791, %v1789
    %v1793 = vclz %v1792
    %v1794 = vsub.s32 %v1793, 2
    %vm1795 = vcmp.gt.s32.totalorder 0, %v1794
    %v1796 = vsel %vm1795, 0, %v1794
    %v1797 = vsub.s32 32, %v1796
    %v1798 = vshll.u32 %v1789, %v1796
    %v1799 = vshrl.u32 %v1781, %v1797
    %v1800 = vor.u32 %v1798, %v1799
    %v1801 = vsub.s32 4294967266, %v1796
    %v1802 = vadd.s32 %v1801, 127
    %v1803 = vshll.u32 %v1802, 23
    %v1804 = vor.u32 4788187, %v1803
    %v1805 = vand.u32 2147483647, %v1804
    %v1807 = vcvt.s32.f32 %v1800
    %v1808 = vmul.f32 %v1807, %v1805
    %v1809 = vxor.u32 %v1808, 2147483648
    %v1810 = vsel %vm1727, %v1809, %v1808
    %v1811 = vsub.s32 4, %v1787
    %v1812 = vsel %vm1727, %v1811, %v1787
    %v1813 = vsel %vm1726, %v164, %v1810
    %v1814 = vsel %vm1726, 0, %v1812
    %v1815 = vcosq.f32.pop %v1813
    %v1816 = vsinq.f32.pop %v1813
    %vm1817 = vweird.f32 %v164
    %v1818 = vadd.s32 %v1814, 3
    %v1819 = vand.u32 %v1818, 3
    %vm1820 = vcmp.lt.s32.totalorder %v1819, 2
    %vm1821 = vcmp.eq.s32.totalorder %v1819, 0
    %v1822 = vxor.u32 %v1816, 2147483648
    %v1823 = vsel %vm1821, %v1815, %v1822
    %vm1824 = vcmp.eq.s32.totalorder %v1819, 2
    %v1825 = vxor.u32 %v1815, 2147483648
    %v1826 = vsel %vm1824, %v1825, %v1816
    %v1827 = vsel %vm1820, %v1823, %v1826
    %v1828 = vsel %vm1817, nan, %v1827
    %1829 = vst [vmem:[#allocation2] sm:$0xff] %v268
    %1830 = vst [vmem:[#allocation2 + $0x8] sm:$0xff] %v372
    %1831 = vst [vmem:[#allocation2 + $0x10] sm:$0xff] %v476
    %1832 = vst [vmem:[#allocation2 + $0x18] sm:$0xff] %v580
    %1833 = vst [vmem:[#allocation2 + $0x20] sm:$0xff] %v684
    %1834 = vst [vmem:[#allocation2 + $0x28] sm:$0xff] %v788
    %1835 = vst [vmem:[#allocation2 + $0x30] sm:$0xff] %v892
    %1836 = vst [vmem:[#allocation2 + $0x38] sm:$0xff] %v996
    %1837 = vst [vmem:[#allocation2 + $0x40] sm:$0xff] %v1100
    %1838 = vst [vmem:[#allocation2 + $0x48] sm:$0xff] %v1204
    %1839 = vst [vmem:[#allocation2 + $0x50] sm:$0xff] %v1308
    %1840 = vst [vmem:[#allocation2 + $0x58] sm:$0xff] %v1412
    %1841 = vst [vmem:[#allocation2 + $0x60] sm:$0xff] %v1516
    %1842 = vst [vmem:[#allocation2 + $0x68] sm:$0xff] %v1620
    %1843 = vst [vmem:[#allocation2 + $0x70] sm:$0xff] %v1724
    %1844 = vst [vmem:[#allocation2 + $0x78] sm:$0xff] %v1828
    %v1845 = vand.u32 2147483647, %v149
    %vm1846 = vcmp.le.f32.partialorder %v1845, 0.7853982
    %vm1847 = vcmp.lt.s32.totalorder %v149, 0
    %v1848 = vand.u32 %v149, 2139095040
    %v1849 = vshrl.u32 %v1848, 23
    %v1850 = vsub.s32 %v1849, 127
    %v1851 = vand.u32 2147483647, %v149
    %v1852 = vand.u32 %v1851, 8388607
    %v1853 = vor.u32 %v1852, 8388608
    %v1854 = vsub.s32 0, %v1853
    %v1855 = vadd.s32 %v1850, 1
    %vm1856 = vcmp.gt.s32.totalorder %v1855, 0
    %v1857 = vsel %vm1856, %v1855, 0
    %v1858 = vshrl.u32 %v1857, 5
    %v1859 = vand.u32 %v1857, 31
    %v1860 = vsub.s32 32, %v1859
    %v1861 = vshrl.u32 683565275, %v1860
    %v1862 = vshll.u32 683565275, %v1859
    %v1863 = vshrl.u32 2475754826, %v1860
    %v1864 = vor.u32 %v1862, %v1863
    %v1865 = vshll.u32 2475754826, %v1859
    %v1866 = vshrl.u32 2131351028, %v1860
    %v1867 = vor.u32 %v1865, %v1866
    %v1868 = vshll.u32 2131351028, %v1859
    %v1869 = vshrl.u32 2102212464, %v1860
    %v1870 = vor.u32 %v1868, %v1869
    %v1871 = vshll.u32 2102212464, %v1859
    %v1872 = vshrl.u32 920167782, %v1860
    %v1873 = vor.u32 %v1871, %v1872
    %v1874 = vshll.u32 920167782, %v1859
    %v1875 = vshrl.u32 1326507024, %v1860
    %v1876 = vor.u32 %v1874, %v1875
    %vm1877 = vcmp.lt.s32.totalorder %v1858, 1
    %vm1878 = vcmp.lt.s32.totalorder %v1858, 2
    %vm1879 = vcmp.lt.s32.totalorder %v1858, 3
    %vm1880 = vcmp.lt.s32.totalorder %v1858, 4
    %v1881 = vsel %vm1877, %v1861, %v1864
    %v1882 = vsel %vm1880, %v1870, 2102212464
    %v1883 = vsel %vm1879, %v1867, %v1882
    %v1884 = vsel %vm1878, %v1881, %v1883
    %v1885 = vsel %vm1877, %v1864, %v1867
    %v1886 = vsel %vm1880, %v1873, 920167782
    %v1887 = vsel %vm1879, %v1870, %v1886
    %v1888 = vsel %vm1878, %v1885, %v1887
    %v1889 = vsel %vm1877, %v1867, %v1870
    %v1890 = vsel %vm1880, %v1876, 1326507024
    %v1891 = vsel %vm1879, %v1873, %v1890
    %v1892 = vsel %vm1878, %v1889, %v1891
    %v1893 = vshll.u32 %v1853, 8
    %v1894 = vmul.u32.u64.compose %v1893, %v1892
    %v1895 = vextract.low.u32 %v1894
    %v1896 = vextract.high.u32 %v1894
    %v1897 = vmul.u32.u64.compose %v1893, %v1888
    %v1898 = vextract.low.u32 %v1897
    %v1899 = vextract.high.u32 %v1897
    %v1900 = vmul.u32 %v1893, %v1884
    %v1901 = vadd.s32 %v1896, %v1898
    %vm1902 = vc.u32 %v1896, %v1898
    %v1903 = vadd.s32 %v1899, 1
    %v1904 = vsel %vm1902, %v1903, %v1899
    %v1905 = vadd.s32 %v1900, %v1904
    %v1906 = vadd.s32 %v1905, 536870912
    %v1907 = vshrl.u32 %v1906, 30
    %v1908 = vshll.u32 %v1907, 30
    %v1909 = vsub.s32 %v1905, %v1908
    %vm1910 = vcmp.lt.s32.totalorder %v1909, 0
    %v1911 = vsub.s32 0, %v1909
    %v1912 = vsel %vm1910, %v1911, %v1909
    %v1913 = vclz %v1912
    %v1914 = vsub.s32 %v1913, 2
    %vm1915 = vcmp.gt.s32.totalorder 0, %v1914
    %v1916 = vsel %vm1915, 0, %v1914
    %v1917 = vsub.s32 32, %v1916
    %v1918 = vshll.u32 %v1909, %v1916
    %v1919 = vshrl.u32 %v1901, %v1917
    %v1920 = vor.u32 %v1918, %v1919
    %v1921 = vsub.s32 4294967266, %v1916
    %v1922 = vadd.s32 %v1921, 127
    %v1923 = vshll.u32 %v1922, 23
    %v1924 = vor.u32 4788187, %v1923
    %v1925 = vand.u32 2147483647, %v1924
    %v1927 = vcvt.s32.f32 %v1920
    %v1928 = vmul.f32 %v1927, %v1925
    %v1929 = vxor.u32 %v1928, 2147483648
    %v1930 = vsel %vm1847, %v1929, %v1928
    %v1931 = vsub.s32 4, %v1907
    %v1932 = vsel %vm1847, %v1931, %v1907
    %v1933 = vsel %vm1846, %v149, %v1930
    %v1934 = vsel %vm1846, 0, %v1932
    %v1935 = vcosq.f32.pop %v1933
    %v1936 = vsinq.f32.pop %v1933
    %vm1937 = vweird.f32 %v149
    %v1938 = vand.u32 %v1934, 3
    %vm1939 = vcmp.lt.s32.totalorder %v1938, 2
    %vm1940 = vcmp.eq.s32.totalorder %v1938, 0
    %v1941 = vxor.u32 %v1936, 2147483648
    %v1942 = vsel %vm1940, %v1935, %v1941
    %vm1943 = vcmp.eq.s32.totalorder %v1938, 2
    %v1944 = vxor.u32 %v1935, 2147483648
    %v1945 = vsel %vm1943, %v1944, %v1936
    %v1946 = vsel %vm1939, %v1942, %v1945
    %v1947 = vsel %vm1937, nan, %v1946
    %v1948 = vand.u32 2147483647, %v150
    %vm1949 = vcmp.le.f32.partialorder %v1948, 0.7853982
    %vm1950 = vcmp.lt.s32.totalorder %v150, 0
    %v1951 = vand.u32 %v150, 2139095040
    %v1952 = vshrl.u32 %v1951, 23
    %v1953 = vsub.s32 %v1952, 127
    %v1954 = vand.u32 2147483647, %v150
    %v1955 = vand.u32 %v1954, 8388607
    %v1956 = vor.u32 %v1955, 8388608
    %v1957 = vsub.s32 0, %v1956
    %v1958 = vadd.s32 %v1953, 1
    %vm1959 = vcmp.gt.s32.totalorder %v1958, 0
    %v1960 = vsel %vm1959, %v1958, 0
    %v1961 = vshrl.u32 %v1960, 5
    %v1962 = vand.u32 %v1960, 31
    %v1963 = vsub.s32 32, %v1962
    %v1964 = vshrl.u32 683565275, %v1963
    %v1965 = vshll.u32 683565275, %v1962
    %v1966 = vshrl.u32 2475754826, %v1963
    %v1967 = vor.u32 %v1965, %v1966
    %v1968 = vshll.u32 2475754826, %v1962
    %v1969 = vshrl.u32 2131351028, %v1963
    %v1970 = vor.u32 %v1968, %v1969
    %v1971 = vshll.u32 2131351028, %v1962
    %v1972 = vshrl.u32 2102212464, %v1963
    %v1973 = vor.u32 %v1971, %v1972
    %v1974 = vshll.u32 2102212464, %v1962
    %v1975 = vshrl.u32 920167782, %v1963
    %v1976 = vor.u32 %v1974, %v1975
    %v1977 = vshll.u32 920167782, %v1962
    %v1978 = vshrl.u32 1326507024, %v1963
    %v1979 = vor.u32 %v1977, %v1978
    %vm1980 = vcmp.lt.s32.totalorder %v1961, 1
    %vm1981 = vcmp.lt.s32.totalorder %v1961, 2
    %vm1982 = vcmp.lt.s32.totalorder %v1961, 3
    %vm1983 = vcmp.lt.s32.totalorder %v1961, 4
    %v1984 = vsel %vm1980, %v1964, %v1967
    %v1985 = vsel %vm1983, %v1973, 2102212464
    %v1986 = vsel %vm1982, %v1970, %v1985
    %v1987 = vsel %vm1981, %v1984, %v1986
    %v1988 = vsel %vm1980, %v1967, %v1970
    %v1989 = vsel %vm1983, %v1976, 920167782
    %v1990 = vsel %vm1982, %v1973, %v1989
    %v1991 = vsel %vm1981, %v1988, %v1990
    %v1992 = vsel %vm1980, %v1970, %v1973
    %v1993 = vsel %vm1983, %v1979, 1326507024
    %v1994 = vsel %vm1982, %v1976, %v1993
    %v1995 = vsel %vm1981, %v1992, %v1994
    %v1996 = vshll.u32 %v1956, 8
    %v1997 = vmul.u32.u64.compose %v1996, %v1995
    %v1998 = vextract.low.u32 %v1997
    %v1999 = vextract.high.u32 %v1997
    %v2000 = vmul.u32.u64.compose %v1996, %v1991
    %v2001 = vextract.low.u32 %v2000
    %v2002 = vextract.high.u32 %v2000
    %v2003 = vmul.u32 %v1996, %v1987
    %v2004 = vadd.s32 %v1999, %v2001
    %vm2005 = vc.u32 %v1999, %v2001
    %v2006 = vadd.s32 %v2002, 1
    %v2007 = vsel %vm2005, %v2006, %v2002
    %v2008 = vadd.s32 %v2003, %v2007
    %v2009 = vadd.s32 %v2008, 536870912
    %v2010 = vshrl.u32 %v2009, 30
    %v2011 = vshll.u32 %v2010, 30
    %v2012 = vsub.s32 %v2008, %v2011
    %vm2013 = vcmp.lt.s32.totalorder %v2012, 0
    %v2014 = vsub.s32 0, %v2012
    %v2015 = vsel %vm2013, %v2014, %v2012
    %v2016 = vclz %v2015
    %v2017 = vsub.s32 %v2016, 2
    %vm2018 = vcmp.gt.s32.totalorder 0, %v2017
    %v2019 = vsel %vm2018, 0, %v2017
    %v2020 = vsub.s32 32, %v2019
    %v2021 = vshll.u32 %v2012, %v2019
    %v2022 = vshrl.u32 %v2004, %v2020
    %v2023 = vor.u32 %v2021, %v2022
    %v2024 = vsub.s32 4294967266, %v2019
    %v2025 = vadd.s32 %v2024, 127
    %v2026 = vshll.u32 %v2025, 23
    %v2027 = vor.u32 4788187, %v2026
    %v2028 = vand.u32 2147483647, %v2027
    %v2030 = vcvt.s32.f32 %v2023
    %v2031 = vmul.f32 %v2030, %v2028
    %v2032 = vxor.u32 %v2031, 2147483648
    %v2033 = vsel %vm1950, %v2032, %v2031
    %v2034 = vsub.s32 4, %v2010
    %v2035 = vsel %vm1950, %v2034, %v2010
    %v2036 = vsel %vm1949, %v150, %v2033
    %v2037 = vsel %vm1949, 0, %v2035
    %v2038 = vcosq.f32.pop %v2036
    %v2039 = vsinq.f32.pop %v2036
    %vm2040 = vweird.f32 %v150
    %v2041 = vand.u32 %v2037, 3
    %vm2042 = vcmp.lt.s32.totalorder %v2041, 2
    %vm2043 = vcmp.eq.s32.totalorder %v2041, 0
    %v2044 = vxor.u32 %v2039, 2147483648
    %v2045 = vsel %vm2043, %v2038, %v2044
    %vm2046 = vcmp.eq.s32.totalorder %v2041, 2
    %v2047 = vxor.u32 %v2038, 2147483648
    %v2048 = vsel %vm2046, %v2047, %v2039
    %v2049 = vsel %vm2042, %v2045, %v2048
    %v2050 = vsel %vm2040, nan, %v2049
    %v2051 = vand.u32 2147483647, %v151
    %vm2052 = vcmp.le.f32.partialorder %v2051, 0.7853982
    %vm2053 = vcmp.lt.s32.totalorder %v151, 0
    %v2054 = vand.u32 %v151, 2139095040
    %v2055 = vshrl.u32 %v2054, 23
    %v2056 = vsub.s32 %v2055, 127
    %v2057 = vand.u32 2147483647, %v151
    %v2058 = vand.u32 %v2057, 8388607
    %v2059 = vor.u32 %v2058, 8388608
    %v2060 = vsub.s32 0, %v2059
    %v2061 = vadd.s32 %v2056, 1
    %vm2062 = vcmp.gt.s32.totalorder %v2061, 0
    %v2063 = vsel %vm2062, %v2061, 0
    %v2064 = vshrl.u32 %v2063, 5
    %v2065 = vand.u32 %v2063, 31
    %v2066 = vsub.s32 32, %v2065
    %v2067 = vshrl.u32 683565275, %v2066
    %v2068 = vshll.u32 683565275, %v2065
    %v2069 = vshrl.u32 2475754826, %v2066
    %v2070 = vor.u32 %v2068, %v2069
    %v2071 = vshll.u32 2475754826, %v2065
    %v2072 = vshrl.u32 2131351028, %v2066
    %v2073 = vor.u32 %v2071, %v2072
    %v2074 = vshll.u32 2131351028, %v2065
    %v2075 = vshrl.u32 2102212464, %v2066
    %v2076 = vor.u32 %v2074, %v2075
    %v2077 = vshll.u32 2102212464, %v2065
    %v2078 = vshrl.u32 920167782, %v2066
    %v2079 = vor.u32 %v2077, %v2078
    %v2080 = vshll.u32 920167782, %v2065
    %v2081 = vshrl.u32 1326507024, %v2066
    %v2082 = vor.u32 %v2080, %v2081
    %vm2083 = vcmp.lt.s32.totalorder %v2064, 1
    %vm2084 = vcmp.lt.s32.totalorder %v2064, 2
    %vm2085 = vcmp.lt.s32.totalorder %v2064, 3
    %vm2086 = vcmp.lt.s32.totalorder %v2064, 4
    %v2087 = vsel %vm2083, %v2067, %v2070
    %v2088 = vsel %vm2086, %v2076, 2102212464
    %v2089 = vsel %vm2085, %v2073, %v2088
    %v2090 = vsel %vm2084, %v2087, %v2089
    %v2091 = vsel %vm2083, %v2070, %v2073
    %v2092 = vsel %vm2086, %v2079, 920167782
    %v2093 = vsel %vm2085, %v2076, %v2092
    %v2094 = vsel %vm2084, %v2091, %v2093
    %v2095 = vsel %vm2083, %v2073, %v2076
    %v2096 = vsel %vm2086, %v2082, 1326507024
    %v2097 = vsel %vm2085, %v2079, %v2096
    %v2098 = vsel %vm2084, %v2095, %v2097
    %v2099 = vshll.u32 %v2059, 8
    %v2100 = vmul.u32.u64.compose %v2099, %v2098
    %v2101 = vextract.low.u32 %v2100
    %v2102 = vextract.high.u32 %v2100
    %v2103 = vmul.u32.u64.compose %v2099, %v2094
    %v2104 = vextract.low.u32 %v2103
    %v2105 = vextract.high.u32 %v2103
    %v2106 = vmul.u32 %v2099, %v2090
    %v2107 = vadd.s32 %v2102, %v2104
    %vm2108 = vc.u32 %v2102, %v2104
    %v2109 = vadd.s32 %v2105, 1
    %v2110 = vsel %vm2108, %v2109, %v2105
    %v2111 = vadd.s32 %v2106, %v2110
    %v2112 = vadd.s32 %v2111, 536870912
    %v2113 = vshrl.u32 %v2112, 30
    %v2114 = vshll.u32 %v2113, 30
    %v2115 = vsub.s32 %v2111, %v2114
    %vm2116 = vcmp.lt.s32.totalorder %v2115, 0
    %v2117 = vsub.s32 0, %v2115
    %v2118 = vsel %vm2116, %v2117, %v2115
    %v2119 = vclz %v2118
    %v2120 = vsub.s32 %v2119, 2
    %vm2121 = vcmp.gt.s32.totalorder 0, %v2120
    %v2122 = vsel %vm2121, 0, %v2120
    %v2123 = vsub.s32 32, %v2122
    %v2124 = vshll.u32 %v2115, %v2122
    %v2125 = vshrl.u32 %v2107, %v2123
    %v2126 = vor.u32 %v2124, %v2125
    %v2127 = vsub.s32 4294967266, %v2122
    %v2128 = vadd.s32 %v2127, 127
    %v2129 = vshll.u32 %v2128, 23
    %v2130 = vor.u32 4788187, %v2129
    %v2131 = vand.u32 2147483647, %v2130
    %v2133 = vcvt.s32.f32 %v2126
    %v2134 = vmul.f32 %v2133, %v2131
    %v2135 = vxor.u32 %v2134, 2147483648
    %v2136 = vsel %vm2053, %v2135, %v2134
    %v2137 = vsub.s32 4, %v2113
    %v2138 = vsel %vm2053, %v2137, %v2113
    %v2139 = vsel %vm2052, %v151, %v2136
    %v2140 = vsel %vm2052, 0, %v2138
    %v2141 = vcosq.f32.pop %v2139
    %v2142 = vsinq.f32.pop %v2139
    %vm2143 = vweird.f32 %v151
    %v2144 = vand.u32 %v2140, 3
    %vm2145 = vcmp.lt.s32.totalorder %v2144, 2
    %vm2146 = vcmp.eq.s32.totalorder %v2144, 0
    %v2147 = vxor.u32 %v2142, 2147483648
    %v2148 = vsel %vm2146, %v2141, %v2147
    %vm2149 = vcmp.eq.s32.totalorder %v2144, 2
    %v2150 = vxor.u32 %v2141, 2147483648
    %v2151 = vsel %vm2149, %v2150, %v2142
    %v2152 = vsel %vm2145, %v2148, %v2151
    %v2153 = vsel %vm2143, nan, %v2152
    %v2154 = vand.u32 2147483647, %v152
    %vm2155 = vcmp.le.f32.partialorder %v2154, 0.7853982
    %vm2156 = vcmp.lt.s32.totalorder %v152, 0
    %v2157 = vand.u32 %v152, 2139095040
    %v2158 = vshrl.u32 %v2157, 23
    %v2159 = vsub.s32 %v2158, 127
    %v2160 = vand.u32 2147483647, %v152
    %v2161 = vand.u32 %v2160, 8388607
    %v2162 = vor.u32 %v2161, 8388608
    %v2163 = vsub.s32 0, %v2162
    %v2164 = vadd.s32 %v2159, 1
    %vm2165 = vcmp.gt.s32.totalorder %v2164, 0
    %v2166 = vsel %vm2165, %v2164, 0
    %v2167 = vshrl.u32 %v2166, 5
    %v2168 = vand.u32 %v2166, 31
    %v2169 = vsub.s32 32, %v2168
    %v2170 = vshrl.u32 683565275, %v2169
    %v2171 = vshll.u32 683565275, %v2168
    %v2172 = vshrl.u32 2475754826, %v2169
    %v2173 = vor.u32 %v2171, %v2172
    %v2174 = vshll.u32 2475754826, %v2168
    %v2175 = vshrl.u32 2131351028, %v2169
    %v2176 = vor.u32 %v2174, %v2175
    %v2177 = vshll.u32 2131351028, %v2168
    %v2178 = vshrl.u32 2102212464, %v2169
    %v2179 = vor.u32 %v2177, %v2178
    %v2180 = vshll.u32 2102212464, %v2168
    %v2181 = vshrl.u32 920167782, %v2169
    %v2182 = vor.u32 %v2180, %v2181
    %v2183 = vshll.u32 920167782, %v2168
    %v2184 = vshrl.u32 1326507024, %v2169
    %v2185 = vor.u32 %v2183, %v2184
    %vm2186 = vcmp.lt.s32.totalorder %v2167, 1
    %vm2187 = vcmp.lt.s32.totalorder %v2167, 2
    %vm2188 = vcmp.lt.s32.totalorder %v2167, 3
    %vm2189 = vcmp.lt.s32.totalorder %v2167, 4
    %v2190 = vsel %vm2186, %v2170, %v2173
    %v2191 = vsel %vm2189, %v2179, 2102212464
    %v2192 = vsel %vm2188, %v2176, %v2191
    %v2193 = vsel %vm2187, %v2190, %v2192
    %v2194 = vsel %vm2186, %v2173, %v2176
    %v2195 = vsel %vm2189, %v2182, 920167782
    %v2196 = vsel %vm2188, %v2179, %v2195
    %v2197 = vsel %vm2187, %v2194, %v2196
    %v2198 = vsel %vm2186, %v2176, %v2179
    %v2199 = vsel %vm2189, %v2185, 1326507024
    %v2200 = vsel %vm2188, %v2182, %v2199
    %v2201 = vsel %vm2187, %v2198, %v2200
    %v2202 = vshll.u32 %v2162, 8
    %v2203 = vmul.u32.u64.compose %v2202, %v2201
    %v2204 = vextract.low.u32 %v2203
    %v2205 = vextract.high.u32 %v2203
    %v2206 = vmul.u32.u64.compose %v2202, %v2197
    %v2207 = vextract.low.u32 %v2206
    %v2208 = vextract.high.u32 %v2206
    %v2209 = vmul.u32 %v2202, %v2193
    %v2210 = vadd.s32 %v2205, %v2207
    %vm2211 = vc.u32 %v2205, %v2207
    %v2212 = vadd.s32 %v2208, 1
    %v2213 = vsel %vm2211, %v2212, %v2208
    %v2214 = vadd.s32 %v2209, %v2213
    %v2215 = vadd.s32 %v2214, 536870912
    %v2216 = vshrl.u32 %v2215, 30
    %v2217 = vshll.u32 %v2216, 30
    %v2218 = vsub.s32 %v2214, %v2217
    %vm2219 = vcmp.lt.s32.totalorder %v2218, 0
    %v2220 = vsub.s32 0, %v2218
    %v2221 = vsel %vm2219, %v2220, %v2218
    %v2222 = vclz %v2221
    %v2223 = vsub.s32 %v2222, 2
    %vm2224 = vcmp.gt.s32.totalorder 0, %v2223
    %v2225 = vsel %vm2224, 0, %v2223
    %v2226 = vsub.s32 32, %v2225
    %v2227 = vshll.u32 %v2218, %v2225
    %v2228 = vshrl.u32 %v2210, %v2226
    %v2229 = vor.u32 %v2227, %v2228
    %v2230 = vsub.s32 4294967266, %v2225
    %v2231 = vadd.s32 %v2230, 127
    %v2232 = vshll.u32 %v2231, 23
    %v2233 = vor.u32 4788187, %v2232
    %v2234 = vand.u32 2147483647, %v2233
    %v2236 = vcvt.s32.f32 %v2229
    %v2237 = vmul.f32 %v2236, %v2234
    %v2238 = vxor.u32 %v2237, 2147483648
    %v2239 = vsel %vm2156, %v2238, %v2237
    %v2240 = vsub.s32 4, %v2216
    %v2241 = vsel %vm2156, %v2240, %v2216
    %v2242 = vsel %vm2155, %v152, %v2239
    %v2243 = vsel %vm2155, 0, %v2241
    %v2244 = vcosq.f32.pop %v2242
    %v2245 = vsinq.f32.pop %v2242
    %vm2246 = vweird.f32 %v152
    %v2247 = vand.u32 %v2243, 3
    %vm2248 = vcmp.lt.s32.totalorder %v2247, 2
    %vm2249 = vcmp.eq.s32.totalorder %v2247, 0
    %v2250 = vxor.u32 %v2245, 2147483648
    %v2251 = vsel %vm2249, %v2244, %v2250
    %vm2252 = vcmp.eq.s32.totalorder %v2247, 2
    %v2253 = vxor.u32 %v2244, 2147483648
    %v2254 = vsel %vm2252, %v2253, %v2245
    %v2255 = vsel %vm2248, %v2251, %v2254
    %v2256 = vsel %vm2246, nan, %v2255
    %v2257 = vand.u32 2147483647, %v153
    %vm2258 = vcmp.le.f32.partialorder %v2257, 0.7853982
    %vm2259 = vcmp.lt.s32.totalorder %v153, 0
    %v2260 = vand.u32 %v153, 2139095040
    %v2261 = vshrl.u32 %v2260, 23
    %v2262 = vsub.s32 %v2261, 127
    %v2263 = vand.u32 2147483647, %v153
    %v2264 = vand.u32 %v2263, 8388607
    %v2265 = vor.u32 %v2264, 8388608
    %v2266 = vsub.s32 0, %v2265
    %v2267 = vadd.s32 %v2262, 1
    %vm2268 = vcmp.gt.s32.totalorder %v2267, 0
    %v2269 = vsel %vm2268, %v2267, 0
    %v2270 = vshrl.u32 %v2269, 5
    %v2271 = vand.u32 %v2269, 31
    %v2272 = vsub.s32 32, %v2271
    %v2273 = vshrl.u32 683565275, %v2272
    %v2274 = vshll.u32 683565275, %v2271
    %v2275 = vshrl.u32 2475754826, %v2272
    %v2276 = vor.u32 %v2274, %v2275
    %v2277 = vshll.u32 2475754826, %v2271
    %v2278 = vshrl.u32 2131351028, %v2272
    %v2279 = vor.u32 %v2277, %v2278
    %v2280 = vshll.u32 2131351028, %v2271
    %v2281 = vshrl.u32 2102212464, %v2272
    %v2282 = vor.u32 %v2280, %v2281
    %v2283 = vshll.u32 2102212464, %v2271
    %v2284 = vshrl.u32 920167782, %v2272
    %v2285 = vor.u32 %v2283, %v2284
    %v2286 = vshll.u32 920167782, %v2271
    %v2287 = vshrl.u32 1326507024, %v2272
    %v2288 = vor.u32 %v2286, %v2287
    %vm2289 = vcmp.lt.s32.totalorder %v2270, 1
    %vm2290 = vcmp.lt.s32.totalorder %v2270, 2
    %vm2291 = vcmp.lt.s32.totalorder %v2270, 3
    %vm2292 = vcmp.lt.s32.totalorder %v2270, 4
    %v2293 = vsel %vm2289, %v2273, %v2276
    %v2294 = vsel %vm2292, %v2282, 2102212464
    %v2295 = vsel %vm2291, %v2279, %v2294
    %v2296 = vsel %vm2290, %v2293, %v2295
    %v2297 = vsel %vm2289, %v2276, %v2279
    %v2298 = vsel %vm2292, %v2285, 920167782
    %v2299 = vsel %vm2291, %v2282, %v2298
    %v2300 = vsel %vm2290, %v2297, %v2299
    %v2301 = vsel %vm2289, %v2279, %v2282
    %v2302 = vsel %vm2292, %v2288, 1326507024
    %v2303 = vsel %vm2291, %v2285, %v2302
    %v2304 = vsel %vm2290, %v2301, %v2303
    %v2305 = vshll.u32 %v2265, 8
    %v2306 = vmul.u32.u64.compose %v2305, %v2304
    %v2307 = vextract.low.u32 %v2306
    %v2308 = vextract.high.u32 %v2306
    %v2309 = vmul.u32.u64.compose %v2305, %v2300
    %v2310 = vextract.low.u32 %v2309
    %v2311 = vextract.high.u32 %v2309
    %v2312 = vmul.u32 %v2305, %v2296
    %v2313 = vadd.s32 %v2308, %v2310
    %vm2314 = vc.u32 %v2308, %v2310
    %v2315 = vadd.s32 %v2311, 1
    %v2316 = vsel %vm2314, %v2315, %v2311
    %v2317 = vadd.s32 %v2312, %v2316
    %v2318 = vadd.s32 %v2317, 536870912
    %v2319 = vshrl.u32 %v2318, 30
    %v2320 = vshll.u32 %v2319, 30
    %v2321 = vsub.s32 %v2317, %v2320
    %vm2322 = vcmp.lt.s32.totalorder %v2321, 0
    %v2323 = vsub.s32 0, %v2321
    %v2324 = vsel %vm2322, %v2323, %v2321
    %v2325 = vclz %v2324
    %v2326 = vsub.s32 %v2325, 2
    %vm2327 = vcmp.gt.s32.totalorder 0, %v2326
    %v2328 = vsel %vm2327, 0, %v2326
    %v2329 = vsub.s32 32, %v2328
    %v2330 = vshll.u32 %v2321, %v2328
    %v2331 = vshrl.u32 %v2313, %v2329
    %v2332 = vor.u32 %v2330, %v2331
    %v2333 = vsub.s32 4294967266, %v2328
    %v2334 = vadd.s32 %v2333, 127
    %v2335 = vshll.u32 %v2334, 23
    %v2336 = vor.u32 4788187, %v2335
    %v2337 = vand.u32 2147483647, %v2336
    %v2339 = vcvt.s32.f32 %v2332
    %v2340 = vmul.f32 %v2339, %v2337
    %v2341 = vxor.u32 %v2340, 2147483648
    %v2342 = vsel %vm2259, %v2341, %v2340
    %v2343 = vsub.s32 4, %v2319
    %v2344 = vsel %vm2259, %v2343, %v2319
    %v2345 = vsel %vm2258, %v153, %v2342
    %v2346 = vsel %vm2258, 0, %v2344
    %v2347 = vcosq.f32.pop %v2345
    %v2348 = vsinq.f32.pop %v2345
    %vm2349 = vweird.f32 %v153
    %v2350 = vand.u32 %v2346, 3
    %vm2351 = vcmp.lt.s32.totalorder %v2350, 2
    %vm2352 = vcmp.eq.s32.totalorder %v2350, 0
    %v2353 = vxor.u32 %v2348, 2147483648
    %v2354 = vsel %vm2352, %v2347, %v2353
    %vm2355 = vcmp.eq.s32.totalorder %v2350, 2
    %v2356 = vxor.u32 %v2347, 2147483648
    %v2357 = vsel %vm2355, %v2356, %v2348
    %v2358 = vsel %vm2351, %v2354, %v2357
    %v2359 = vsel %vm2349, nan, %v2358
    %v2360 = vand.u32 2147483647, %v154
    %vm2361 = vcmp.le.f32.partialorder %v2360, 0.7853982
    %vm2362 = vcmp.lt.s32.totalorder %v154, 0
    %v2363 = vand.u32 %v154, 2139095040
    %v2364 = vshrl.u32 %v2363, 23
    %v2365 = vsub.s32 %v2364, 127
    %v2366 = vand.u32 2147483647, %v154
    %v2367 = vand.u32 %v2366, 8388607
    %v2368 = vor.u32 %v2367, 8388608
    %v2369 = vsub.s32 0, %v2368
    %v2370 = vadd.s32 %v2365, 1
    %vm2371 = vcmp.gt.s32.totalorder %v2370, 0
    %v2372 = vsel %vm2371, %v2370, 0
    %v2373 = vshrl.u32 %v2372, 5
    %v2374 = vand.u32 %v2372, 31
    %v2375 = vsub.s32 32, %v2374
    %v2376 = vshrl.u32 683565275, %v2375
    %v2377 = vshll.u32 683565275, %v2374
    %v2378 = vshrl.u32 2475754826, %v2375
    %v2379 = vor.u32 %v2377, %v2378
    %v2380 = vshll.u32 2475754826, %v2374
    %v2381 = vshrl.u32 2131351028, %v2375
    %v2382 = vor.u32 %v2380, %v2381
    %v2383 = vshll.u32 2131351028, %v2374
    %v2384 = vshrl.u32 2102212464, %v2375
    %v2385 = vor.u32 %v2383, %v2384
    %v2386 = vshll.u32 2102212464, %v2374
    %v2387 = vshrl.u32 920167782, %v2375
    %v2388 = vor.u32 %v2386, %v2387
    %v2389 = vshll.u32 920167782, %v2374
    %v2390 = vshrl.u32 1326507024, %v2375
    %v2391 = vor.u32 %v2389, %v2390
    %vm2392 = vcmp.lt.s32.totalorder %v2373, 1
    %vm2393 = vcmp.lt.s32.totalorder %v2373, 2
    %vm2394 = vcmp.lt.s32.totalorder %v2373, 3
    %vm2395 = vcmp.lt.s32.totalorder %v2373, 4
    %v2396 = vsel %vm2392, %v2376, %v2379
    %v2397 = vsel %vm2395, %v2385, 2102212464
    %v2398 = vsel %vm2394, %v2382, %v2397
    %v2399 = vsel %vm2393, %v2396, %v2398
    %v2400 = vsel %vm2392, %v2379, %v2382
    %v2401 = vsel %vm2395, %v2388, 920167782
    %v2402 = vsel %vm2394, %v2385, %v2401
    %v2403 = vsel %vm2393, %v2400, %v2402
    %v2404 = vsel %vm2392, %v2382, %v2385
    %v2405 = vsel %vm2395, %v2391, 1326507024
    %v2406 = vsel %vm2394, %v2388, %v2405
    %v2407 = vsel %vm2393, %v2404, %v2406
    %v2408 = vshll.u32 %v2368, 8
    %v2409 = vmul.u32.u64.compose %v2408, %v2407
    %v2410 = vextract.low.u32 %v2409
    %v2411 = vextract.high.u32 %v2409
    %v2412 = vmul.u32.u64.compose %v2408, %v2403
    %v2413 = vextract.low.u32 %v2412
    %v2414 = vextract.high.u32 %v2412
    %v2415 = vmul.u32 %v2408, %v2399
    %v2416 = vadd.s32 %v2411, %v2413
    %vm2417 = vc.u32 %v2411, %v2413
    %v2418 = vadd.s32 %v2414, 1
    %v2419 = vsel %vm2417, %v2418, %v2414
    %v2420 = vadd.s32 %v2415, %v2419
    %v2421 = vadd.s32 %v2420, 536870912
    %v2422 = vshrl.u32 %v2421, 30
    %v2423 = vshll.u32 %v2422, 30
    %v2424 = vsub.s32 %v2420, %v2423
    %vm2425 = vcmp.lt.s32.totalorder %v2424, 0
    %v2426 = vsub.s32 0, %v2424
    %v2427 = vsel %vm2425, %v2426, %v2424
    %v2428 = vclz %v2427
    %v2429 = vsub.s32 %v2428, 2
    %vm2430 = vcmp.gt.s32.totalorder 0, %v2429
    %v2431 = vsel %vm2430, 0, %v2429
    %v2432 = vsub.s32 32, %v2431
    %v2433 = vshll.u32 %v2424, %v2431
    %v2434 = vshrl.u32 %v2416, %v2432
    %v2435 = vor.u32 %v2433, %v2434
    %v2436 = vsub.s32 4294967266, %v2431
    %v2437 = vadd.s32 %v2436, 127
    %v2438 = vshll.u32 %v2437, 23
    %v2439 = vor.u32 4788187, %v2438
    %v2440 = vand.u32 2147483647, %v2439
    %v2442 = vcvt.s32.f32 %v2435
    %v2443 = vmul.f32 %v2442, %v2440
    %v2444 = vxor.u32 %v2443, 2147483648
    %v2445 = vsel %vm2362, %v2444, %v2443
    %v2446 = vsub.s32 4, %v2422
    %v2447 = vsel %vm2362, %v2446, %v2422
    %v2448 = vsel %vm2361, %v154, %v2445
    %v2449 = vsel %vm2361, 0, %v2447
    %v2450 = vcosq.f32.pop %v2448
    %v2451 = vsinq.f32.pop %v2448
    %vm2452 = vweird.f32 %v154
    %v2453 = vand.u32 %v2449, 3
    %vm2454 = vcmp.lt.s32.totalorder %v2453, 2
    %vm2455 = vcmp.eq.s32.totalorder %v2453, 0
    %v2456 = vxor.u32 %v2451, 2147483648
    %v2457 = vsel %vm2455, %v2450, %v2456
    %vm2458 = vcmp.eq.s32.totalorder %v2453, 2
    %v2459 = vxor.u32 %v2450, 2147483648
    %v2460 = vsel %vm2458, %v2459, %v2451
    %v2461 = vsel %vm2454, %v2457, %v2460
    %v2462 = vsel %vm2452, nan, %v2461
    %v2463 = vand.u32 2147483647, %v155
    %vm2464 = vcmp.le.f32.partialorder %v2463, 0.7853982
    %vm2465 = vcmp.lt.s32.totalorder %v155, 0
    %v2466 = vand.u32 %v155, 2139095040
    %v2467 = vshrl.u32 %v2466, 23
    %v2468 = vsub.s32 %v2467, 127
    %v2469 = vand.u32 2147483647, %v155
    %v2470 = vand.u32 %v2469, 8388607
    %v2471 = vor.u32 %v2470, 8388608
    %v2472 = vsub.s32 0, %v2471
    %v2473 = vadd.s32 %v2468, 1
    %vm2474 = vcmp.gt.s32.totalorder %v2473, 0
    %v2475 = vsel %vm2474, %v2473, 0
    %v2476 = vshrl.u32 %v2475, 5
    %v2477 = vand.u32 %v2475, 31
    %v2478 = vsub.s32 32, %v2477
    %v2479 = vshrl.u32 683565275, %v2478
    %v2480 = vshll.u32 683565275, %v2477
    %v2481 = vshrl.u32 2475754826, %v2478
    %v2482 = vor.u32 %v2480, %v2481
    %v2483 = vshll.u32 2475754826, %v2477
    %v2484 = vshrl.u32 2131351028, %v2478
    %v2485 = vor.u32 %v2483, %v2484
    %v2486 = vshll.u32 2131351028, %v2477
    %v2487 = vshrl.u32 2102212464, %v2478
    %v2488 = vor.u32 %v2486, %v2487
    %v2489 = vshll.u32 2102212464, %v2477
    %v2490 = vshrl.u32 920167782, %v2478
    %v2491 = vor.u32 %v2489, %v2490
    %v2492 = vshll.u32 920167782, %v2477
    %v2493 = vshrl.u32 1326507024, %v2478
    %v2494 = vor.u32 %v2492, %v2493
    %vm2495 = vcmp.lt.s32.totalorder %v2476, 1
    %vm2496 = vcmp.lt.s32.totalorder %v2476, 2
    %vm2497 = vcmp.lt.s32.totalorder %v2476, 3
    %vm2498 = vcmp.lt.s32.totalorder %v2476, 4
    %v2499 = vsel %vm2495, %v2479, %v2482
    %v2500 = vsel %vm2498, %v2488, 2102212464
    %v2501 = vsel %vm2497, %v2485, %v2500
    %v2502 = vsel %vm2496, %v2499, %v2501
    %v2503 = vsel %vm2495, %v2482, %v2485
    %v2504 = vsel %vm2498, %v2491, 920167782
    %v2505 = vsel %vm2497, %v2488, %v2504
    %v2506 = vsel %vm2496, %v2503, %v2505
    %v2507 = vsel %vm2495, %v2485, %v2488
    %v2508 = vsel %vm2498, %v2494, 1326507024
    %v2509 = vsel %vm2497, %v2491, %v2508
    %v2510 = vsel %vm2496, %v2507, %v2509
    %v2511 = vshll.u32 %v2471, 8
    %v2512 = vmul.u32.u64.compose %v2511, %v2510
    %v2513 = vextract.low.u32 %v2512
    %v2514 = vextract.high.u32 %v2512
    %v2515 = vmul.u32.u64.compose %v2511, %v2506
    %v2516 = vextract.low.u32 %v2515
    %v2517 = vextract.high.u32 %v2515
    %v2518 = vmul.u32 %v2511, %v2502
    %v2519 = vadd.s32 %v2514, %v2516
    %vm2520 = vc.u32 %v2514, %v2516
    %v2521 = vadd.s32 %v2517, 1
    %v2522 = vsel %vm2520, %v2521, %v2517
    %v2523 = vadd.s32 %v2518, %v2522
    %v2524 = vadd.s32 %v2523, 536870912
    %v2525 = vshrl.u32 %v2524, 30
    %v2526 = vshll.u32 %v2525, 30
    %v2527 = vsub.s32 %v2523, %v2526
    %vm2528 = vcmp.lt.s32.totalorder %v2527, 0
    %v2529 = vsub.s32 0, %v2527
    %v2530 = vsel %vm2528, %v2529, %v2527
    %v2531 = vclz %v2530
    %v2532 = vsub.s32 %v2531, 2
    %vm2533 = vcmp.gt.s32.totalorder 0, %v2532
    %v2534 = vsel %vm2533, 0, %v2532
    %v2535 = vsub.s32 32, %v2534
    %v2536 = vshll.u32 %v2527, %v2534
    %v2537 = vshrl.u32 %v2519, %v2535
    %v2538 = vor.u32 %v2536, %v2537
    %v2539 = vsub.s32 4294967266, %v2534
    %v2540 = vadd.s32 %v2539, 127
    %v2541 = vshll.u32 %v2540, 23
    %v2542 = vor.u32 4788187, %v2541
    %v2543 = vand.u32 2147483647, %v2542
    %v2545 = vcvt.s32.f32 %v2538
    %v2546 = vmul.f32 %v2545, %v2543
    %v2547 = vxor.u32 %v2546, 2147483648
    %v2548 = vsel %vm2465, %v2547, %v2546
    %v2549 = vsub.s32 4, %v2525
    %v2550 = vsel %vm2465, %v2549, %v2525
    %v2551 = vsel %vm2464, %v155, %v2548
    %v2552 = vsel %vm2464, 0, %v2550
    %v2553 = vcosq.f32.pop %v2551
    %v2554 = vsinq.f32.pop %v2551
    %vm2555 = vweird.f32 %v155
    %v2556 = vand.u32 %v2552, 3
    %vm2557 = vcmp.lt.s32.totalorder %v2556, 2
    %vm2558 = vcmp.eq.s32.totalorder %v2556, 0
    %v2559 = vxor.u32 %v2554, 2147483648
    %v2560 = vsel %vm2558, %v2553, %v2559
    %vm2561 = vcmp.eq.s32.totalorder %v2556, 2
    %v2562 = vxor.u32 %v2553, 2147483648
    %v2563 = vsel %vm2561, %v2562, %v2554
    %v2564 = vsel %vm2557, %v2560, %v2563
    %v2565 = vsel %vm2555, nan, %v2564
    %v2566 = vand.u32 2147483647, %v156
    %vm2567 = vcmp.le.f32.partialorder %v2566, 0.7853982
    %vm2568 = vcmp.lt.s32.totalorder %v156, 0
    %v2569 = vand.u32 %v156, 2139095040
    %v2570 = vshrl.u32 %v2569, 23
    %v2571 = vsub.s32 %v2570, 127
    %v2572 = vand.u32 2147483647, %v156
    %v2573 = vand.u32 %v2572, 8388607
    %v2574 = vor.u32 %v2573, 8388608
    %v2575 = vsub.s32 0, %v2574
    %v2576 = vadd.s32 %v2571, 1
    %vm2577 = vcmp.gt.s32.totalorder %v2576, 0
    %v2578 = vsel %vm2577, %v2576, 0
    %v2579 = vshrl.u32 %v2578, 5
    %v2580 = vand.u32 %v2578, 31
    %v2581 = vsub.s32 32, %v2580
    %v2582 = vshrl.u32 683565275, %v2581
    %v2583 = vshll.u32 683565275, %v2580
    %v2584 = vshrl.u32 2475754826, %v2581
    %v2585 = vor.u32 %v2583, %v2584
    %v2586 = vshll.u32 2475754826, %v2580
    %v2587 = vshrl.u32 2131351028, %v2581
    %v2588 = vor.u32 %v2586, %v2587
    %v2589 = vshll.u32 2131351028, %v2580
    %v2590 = vshrl.u32 2102212464, %v2581
    %v2591 = vor.u32 %v2589, %v2590
    %v2592 = vshll.u32 2102212464, %v2580
    %v2593 = vshrl.u32 920167782, %v2581
    %v2594 = vor.u32 %v2592, %v2593
    %v2595 = vshll.u32 920167782, %v2580
    %v2596 = vshrl.u32 1326507024, %v2581
    %v2597 = vor.u32 %v2595, %v2596
    %vm2598 = vcmp.lt.s32.totalorder %v2579, 1
    %vm2599 = vcmp.lt.s32.totalorder %v2579, 2
    %vm2600 = vcmp.lt.s32.totalorder %v2579, 3
    %vm2601 = vcmp.lt.s32.totalorder %v2579, 4
    %v2602 = vsel %vm2598, %v2582, %v2585
    %v2603 = vsel %vm2601, %v2591, 2102212464
    %v2604 = vsel %vm2600, %v2588, %v2603
    %v2605 = vsel %vm2599, %v2602, %v2604
    %v2606 = vsel %vm2598, %v2585, %v2588
    %v2607 = vsel %vm2601, %v2594, 920167782
    %v2608 = vsel %vm2600, %v2591, %v2607
    %v2609 = vsel %vm2599, %v2606, %v2608
    %v2610 = vsel %vm2598, %v2588, %v2591
    %v2611 = vsel %vm2601, %v2597, 1326507024
    %v2612 = vsel %vm2600, %v2594, %v2611
    %v2613 = vsel %vm2599, %v2610, %v2612
    %v2614 = vshll.u32 %v2574, 8
    %v2615 = vmul.u32.u64.compose %v2614, %v2613
    %v2616 = vextract.low.u32 %v2615
    %v2617 = vextract.high.u32 %v2615
    %v2618 = vmul.u32.u64.compose %v2614, %v2609
    %v2619 = vextract.low.u32 %v2618
    %v2620 = vextract.high.u32 %v2618
    %v2621 = vmul.u32 %v2614, %v2605
    %v2622 = vadd.s32 %v2617, %v2619
    %vm2623 = vc.u32 %v2617, %v2619
    %v2624 = vadd.s32 %v2620, 1
    %v2625 = vsel %vm2623, %v2624, %v2620
    %v2626 = vadd.s32 %v2621, %v2625
    %v2627 = vadd.s32 %v2626, 536870912
    %v2628 = vshrl.u32 %v2627, 30
    %v2629 = vshll.u32 %v2628, 30
    %v2630 = vsub.s32 %v2626, %v2629
    %vm2631 = vcmp.lt.s32.totalorder %v2630, 0
    %v2632 = vsub.s32 0, %v2630
    %v2633 = vsel %vm2631, %v2632, %v2630
    %v2634 = vclz %v2633
    %v2635 = vsub.s32 %v2634, 2
    %vm2636 = vcmp.gt.s32.totalorder 0, %v2635
    %v2637 = vsel %vm2636, 0, %v2635
    %v2638 = vsub.s32 32, %v2637
    %v2639 = vshll.u32 %v2630, %v2637
    %v2640 = vshrl.u32 %v2622, %v2638
    %v2641 = vor.u32 %v2639, %v2640
    %v2642 = vsub.s32 4294967266, %v2637
    %v2643 = vadd.s32 %v2642, 127
    %v2644 = vshll.u32 %v2643, 23
    %v2645 = vor.u32 4788187, %v2644
    %v2646 = vand.u32 2147483647, %v2645
    %v2648 = vcvt.s32.f32 %v2641
    %v2649 = vmul.f32 %v2648, %v2646
    %v2650 = vxor.u32 %v2649, 2147483648
    %v2651 = vsel %vm2568, %v2650, %v2649
    %v2652 = vsub.s32 4, %v2628
    %v2653 = vsel %vm2568, %v2652, %v2628
    %v2654 = vsel %vm2567, %v156, %v2651
    %v2655 = vsel %vm2567, 0, %v2653
    %v2656 = vcosq.f32.pop %v2654
    %v2657 = vsinq.f32.pop %v2654
    %vm2658 = vweird.f32 %v156
    %v2659 = vand.u32 %v2655, 3
    %vm2660 = vcmp.lt.s32.totalorder %v2659, 2
    %vm2661 = vcmp.eq.s32.totalorder %v2659, 0
    %v2662 = vxor.u32 %v2657, 2147483648
    %v2663 = vsel %vm2661, %v2656, %v2662
    %vm2664 = vcmp.eq.s32.totalorder %v2659, 2
    %v2665 = vxor.u32 %v2656, 2147483648
    %v2666 = vsel %vm2664, %v2665, %v2657
    %v2667 = vsel %vm2660, %v2663, %v2666
    %v2668 = vsel %vm2658, nan, %v2667
    %v2669 = vand.u32 2147483647, %v157
    %vm2670 = vcmp.le.f32.partialorder %v2669, 0.7853982
    %vm2671 = vcmp.lt.s32.totalorder %v157, 0
    %v2672 = vand.u32 %v157, 2139095040
    %v2673 = vshrl.u32 %v2672, 23
    %v2674 = vsub.s32 %v2673, 127
    %v2675 = vand.u32 2147483647, %v157
    %v2676 = vand.u32 %v2675, 8388607
    %v2677 = vor.u32 %v2676, 8388608
    %v2678 = vsub.s32 0, %v2677
    %v2679 = vadd.s32 %v2674, 1
    %vm2680 = vcmp.gt.s32.totalorder %v2679, 0
    %v2681 = vsel %vm2680, %v2679, 0
    %v2682 = vshrl.u32 %v2681, 5
    %v2683 = vand.u32 %v2681, 31
    %v2684 = vsub.s32 32, %v2683
    %v2685 = vshrl.u32 683565275, %v2684
    %v2686 = vshll.u32 683565275, %v2683
    %v2687 = vshrl.u32 2475754826, %v2684
    %v2688 = vor.u32 %v2686, %v2687
    %v2689 = vshll.u32 2475754826, %v2683
    %v2690 = vshrl.u32 2131351028, %v2684
    %v2691 = vor.u32 %v2689, %v2690
    %v2692 = vshll.u32 2131351028, %v2683
    %v2693 = vshrl.u32 2102212464, %v2684
    %v2694 = vor.u32 %v2692, %v2693
    %v2695 = vshll.u32 2102212464, %v2683
    %v2696 = vshrl.u32 920167782, %v2684
    %v2697 = vor.u32 %v2695, %v2696
    %v2698 = vshll.u32 920167782, %v2683
    %v2699 = vshrl.u32 1326507024, %v2684
    %v2700 = vor.u32 %v2698, %v2699
    %vm2701 = vcmp.lt.s32.totalorder %v2682, 1
    %vm2702 = vcmp.lt.s32.totalorder %v2682, 2
    %vm2703 = vcmp.lt.s32.totalorder %v2682, 3
    %vm2704 = vcmp.lt.s32.totalorder %v2682, 4
    %v2705 = vsel %vm2701, %v2685, %v2688
    %v2706 = vsel %vm2704, %v2694, 2102212464
    %v2707 = vsel %vm2703, %v2691, %v2706
    %v2708 = vsel %vm2702, %v2705, %v2707
    %v2709 = vsel %vm2701, %v2688, %v2691
    %v2710 = vsel %vm2704, %v2697, 920167782
    %v2711 = vsel %vm2703, %v2694, %v2710
    %v2712 = vsel %vm2702, %v2709, %v2711
    %v2713 = vsel %vm2701, %v2691, %v2694
    %v2714 = vsel %vm2704, %v2700, 1326507024
    %v2715 = vsel %vm2703, %v2697, %v2714
    %v2716 = vsel %vm2702, %v2713, %v2715
    %v2717 = vshll.u32 %v2677, 8
    %v2718 = vmul.u32.u64.compose %v2717, %v2716
    %v2719 = vextract.low.u32 %v2718
    %v2720 = vextract.high.u32 %v2718
    %v2721 = vmul.u32.u64.compose %v2717, %v2712
    %v2722 = vextract.low.u32 %v2721
    %v2723 = vextract.high.u32 %v2721
    %v2724 = vmul.u32 %v2717, %v2708
    %v2725 = vadd.s32 %v2720, %v2722
    %vm2726 = vc.u32 %v2720, %v2722
    %v2727 = vadd.s32 %v2723, 1
    %v2728 = vsel %vm2726, %v2727, %v2723
    %v2729 = vadd.s32 %v2724, %v2728
    %v2730 = vadd.s32 %v2729, 536870912
    %v2731 = vshrl.u32 %v2730, 30
    %v2732 = vshll.u32 %v2731, 30
    %v2733 = vsub.s32 %v2729, %v2732
    %vm2734 = vcmp.lt.s32.totalorder %v2733, 0
    %v2735 = vsub.s32 0, %v2733
    %v2736 = vsel %vm2734, %v2735, %v2733
    %v2737 = vclz %v2736
    %v2738 = vsub.s32 %v2737, 2
    %vm2739 = vcmp.gt.s32.totalorder 0, %v2738
    %v2740 = vsel %vm2739, 0, %v2738
    %v2741 = vsub.s32 32, %v2740
    %v2742 = vshll.u32 %v2733, %v2740
    %v2743 = vshrl.u32 %v2725, %v2741
    %v2744 = vor.u32 %v2742, %v2743
    %v2745 = vsub.s32 4294967266, %v2740
    %v2746 = vadd.s32 %v2745, 127
    %v2747 = vshll.u32 %v2746, 23
    %v2748 = vor.u32 4788187, %v2747
    %v2749 = vand.u32 2147483647, %v2748
    %v2751 = vcvt.s32.f32 %v2744
    %v2752 = vmul.f32 %v2751, %v2749
    %v2753 = vxor.u32 %v2752, 2147483648
    %v2754 = vsel %vm2671, %v2753, %v2752
    %v2755 = vsub.s32 4, %v2731
    %v2756 = vsel %vm2671, %v2755, %v2731
    %v2757 = vsel %vm2670, %v157, %v2754
    %v2758 = vsel %vm2670, 0, %v2756
    %v2759 = vcosq.f32.pop %v2757
    %v2760 = vsinq.f32.pop %v2757
    %vm2761 = vweird.f32 %v157
    %v2762 = vand.u32 %v2758, 3
    %vm2763 = vcmp.lt.s32.totalorder %v2762, 2
    %vm2764 = vcmp.eq.s32.totalorder %v2762, 0
    %v2765 = vxor.u32 %v2760, 2147483648
    %v2766 = vsel %vm2764, %v2759, %v2765
    %vm2767 = vcmp.eq.s32.totalorder %v2762, 2
    %v2768 = vxor.u32 %v2759, 2147483648
    %v2769 = vsel %vm2767, %v2768, %v2760
    %v2770 = vsel %vm2763, %v2766, %v2769
    %v2771 = vsel %vm2761, nan, %v2770
    %v2772 = vand.u32 2147483647, %v158
    %vm2773 = vcmp.le.f32.partialorder %v2772, 0.7853982
    %vm2774 = vcmp.lt.s32.totalorder %v158, 0
    %v2775 = vand.u32 %v158, 2139095040
    %v2776 = vshrl.u32 %v2775, 23
    %v2777 = vsub.s32 %v2776, 127
    %v2778 = vand.u32 2147483647, %v158
    %v2779 = vand.u32 %v2778, 8388607
    %v2780 = vor.u32 %v2779, 8388608
    %v2781 = vsub.s32 0, %v2780
    %v2782 = vadd.s32 %v2777, 1
    %vm2783 = vcmp.gt.s32.totalorder %v2782, 0
    %v2784 = vsel %vm2783, %v2782, 0
    %v2785 = vshrl.u32 %v2784, 5
    %v2786 = vand.u32 %v2784, 31
    %v2787 = vsub.s32 32, %v2786
    %v2788 = vshrl.u32 683565275, %v2787
    %v2789 = vshll.u32 683565275, %v2786
    %v2790 = vshrl.u32 2475754826, %v2787
    %v2791 = vor.u32 %v2789, %v2790
    %v2792 = vshll.u32 2475754826, %v2786
    %v2793 = vshrl.u32 2131351028, %v2787
    %v2794 = vor.u32 %v2792, %v2793
    %v2795 = vshll.u32 2131351028, %v2786
    %v2796 = vshrl.u32 2102212464, %v2787
    %v2797 = vor.u32 %v2795, %v2796
    %v2798 = vshll.u32 2102212464, %v2786
    %v2799 = vshrl.u32 920167782, %v2787
    %v2800 = vor.u32 %v2798, %v2799
    %v2801 = vshll.u32 920167782, %v2786
    %v2802 = vshrl.u32 1326507024, %v2787
    %v2803 = vor.u32 %v2801, %v2802
    %vm2804 = vcmp.lt.s32.totalorder %v2785, 1
    %vm2805 = vcmp.lt.s32.totalorder %v2785, 2
    %vm2806 = vcmp.lt.s32.totalorder %v2785, 3
    %vm2807 = vcmp.lt.s32.totalorder %v2785, 4
    %v2808 = vsel %vm2804, %v2788, %v2791
    %v2809 = vsel %vm2807, %v2797, 2102212464
    %v2810 = vsel %vm2806, %v2794, %v2809
    %v2811 = vsel %vm2805, %v2808, %v2810
    %v2812 = vsel %vm2804, %v2791, %v2794
    %v2813 = vsel %vm2807, %v2800, 920167782
    %v2814 = vsel %vm2806, %v2797, %v2813
    %v2815 = vsel %vm2805, %v2812, %v2814
    %v2816 = vsel %vm2804, %v2794, %v2797
    %v2817 = vsel %vm2807, %v2803, 1326507024
    %v2818 = vsel %vm2806, %v2800, %v2817
    %v2819 = vsel %vm2805, %v2816, %v2818
    %v2820 = vshll.u32 %v2780, 8
    %v2821 = vmul.u32.u64.compose %v2820, %v2819
    %v2822 = vextract.low.u32 %v2821
    %v2823 = vextract.high.u32 %v2821
    %v2824 = vmul.u32.u64.compose %v2820, %v2815
    %v2825 = vextract.low.u32 %v2824
    %v2826 = vextract.high.u32 %v2824
    %v2827 = vmul.u32 %v2820, %v2811
    %v2828 = vadd.s32 %v2823, %v2825
    %vm2829 = vc.u32 %v2823, %v2825
    %v2830 = vadd.s32 %v2826, 1
    %v2831 = vsel %vm2829, %v2830, %v2826
    %v2832 = vadd.s32 %v2827, %v2831
    %v2833 = vadd.s32 %v2832, 536870912
    %v2834 = vshrl.u32 %v2833, 30
    %v2835 = vshll.u32 %v2834, 30
    %v2836 = vsub.s32 %v2832, %v2835
    %vm2837 = vcmp.lt.s32.totalorder %v2836, 0
    %v2838 = vsub.s32 0, %v2836
    %v2839 = vsel %vm2837, %v2838, %v2836
    %v2840 = vclz %v2839
    %v2841 = vsub.s32 %v2840, 2
    %vm2842 = vcmp.gt.s32.totalorder 0, %v2841
    %v2843 = vsel %vm2842, 0, %v2841
    %v2844 = vsub.s32 32, %v2843
    %v2845 = vshll.u32 %v2836, %v2843
    %v2846 = vshrl.u32 %v2828, %v2844
    %v2847 = vor.u32 %v2845, %v2846
    %v2848 = vsub.s32 4294967266, %v2843
    %v2849 = vadd.s32 %v2848, 127
    %v2850 = vshll.u32 %v2849, 23
    %v2851 = vor.u32 4788187, %v2850
    %v2852 = vand.u32 2147483647, %v2851
    %v2854 = vcvt.s32.f32 %v2847
    %v2855 = vmul.f32 %v2854, %v2852
    %v2856 = vxor.u32 %v2855, 2147483648
    %v2857 = vsel %vm2774, %v2856, %v2855
    %v2858 = vsub.s32 4, %v2834
    %v2859 = vsel %vm2774, %v2858, %v2834
    %v2860 = vsel %vm2773, %v158, %v2857
    %v2861 = vsel %vm2773, 0, %v2859
    %v2862 = vcosq.f32.pop %v2860
    %v2863 = vsinq.f32.pop %v2860
    %vm2864 = vweird.f32 %v158
    %v2865 = vand.u32 %v2861, 3
    %vm2866 = vcmp.lt.s32.totalorder %v2865, 2
    %vm2867 = vcmp.eq.s32.totalorder %v2865, 0
    %v2868 = vxor.u32 %v2863, 2147483648
    %v2869 = vsel %vm2867, %v2862, %v2868
    %vm2870 = vcmp.eq.s32.totalorder %v2865, 2
    %v2871 = vxor.u32 %v2862, 2147483648
    %v2872 = vsel %vm2870, %v2871, %v2863
    %v2873 = vsel %vm2866, %v2869, %v2872
    %v2874 = vsel %vm2864, nan, %v2873
    %v2875 = vand.u32 2147483647, %v159
    %vm2876 = vcmp.le.f32.partialorder %v2875, 0.7853982
    %vm2877 = vcmp.lt.s32.totalorder %v159, 0
    %v2878 = vand.u32 %v159, 2139095040
    %v2879 = vshrl.u32 %v2878, 23
    %v2880 = vsub.s32 %v2879, 127
    %v2881 = vand.u32 2147483647, %v159
    %v2882 = vand.u32 %v2881, 8388607
    %v2883 = vor.u32 %v2882, 8388608
    %v2884 = vsub.s32 0, %v2883
    %v2885 = vadd.s32 %v2880, 1
    %vm2886 = vcmp.gt.s32.totalorder %v2885, 0
    %v2887 = vsel %vm2886, %v2885, 0
    %v2888 = vshrl.u32 %v2887, 5
    %v2889 = vand.u32 %v2887, 31
    %v2890 = vsub.s32 32, %v2889
    %v2891 = vshrl.u32 683565275, %v2890
    %v2892 = vshll.u32 683565275, %v2889
    %v2893 = vshrl.u32 2475754826, %v2890
    %v2894 = vor.u32 %v2892, %v2893
    %v2895 = vshll.u32 2475754826, %v2889
    %v2896 = vshrl.u32 2131351028, %v2890
    %v2897 = vor.u32 %v2895, %v2896
    %v2898 = vshll.u32 2131351028, %v2889
    %v2899 = vshrl.u32 2102212464, %v2890
    %v2900 = vor.u32 %v2898, %v2899
    %v2901 = vshll.u32 2102212464, %v2889
    %v2902 = vshrl.u32 920167782, %v2890
    %v2903 = vor.u32 %v2901, %v2902
    %v2904 = vshll.u32 920167782, %v2889
    %v2905 = vshrl.u32 1326507024, %v2890
    %v2906 = vor.u32 %v2904, %v2905
    %vm2907 = vcmp.lt.s32.totalorder %v2888, 1
    %vm2908 = vcmp.lt.s32.totalorder %v2888, 2
    %vm2909 = vcmp.lt.s32.totalorder %v2888, 3
    %vm2910 = vcmp.lt.s32.totalorder %v2888, 4
    %v2911 = vsel %vm2907, %v2891, %v2894
    %v2912 = vsel %vm2910, %v2900, 2102212464
    %v2913 = vsel %vm2909, %v2897, %v2912
    %v2914 = vsel %vm2908, %v2911, %v2913
    %v2915 = vsel %vm2907, %v2894, %v2897
    %v2916 = vsel %vm2910, %v2903, 920167782
    %v2917 = vsel %vm2909, %v2900, %v2916
    %v2918 = vsel %vm2908, %v2915, %v2917
    %v2919 = vsel %vm2907, %v2897, %v2900
    %v2920 = vsel %vm2910, %v2906, 1326507024
    %v2921 = vsel %vm2909, %v2903, %v2920
    %v2922 = vsel %vm2908, %v2919, %v2921
    %v2923 = vshll.u32 %v2883, 8
    %v2924 = vmul.u32.u64.compose %v2923, %v2922
    %v2925 = vextract.low.u32 %v2924
    %v2926 = vextract.high.u32 %v2924
    %v2927 = vmul.u32.u64.compose %v2923, %v2918
    %v2928 = vextract.low.u32 %v2927
    %v2929 = vextract.high.u32 %v2927
    %v2930 = vmul.u32 %v2923, %v2914
    %v2931 = vadd.s32 %v2926, %v2928
    %vm2932 = vc.u32 %v2926, %v2928
    %v2933 = vadd.s32 %v2929, 1
    %v2934 = vsel %vm2932, %v2933, %v2929
    %v2935 = vadd.s32 %v2930, %v2934
    %v2936 = vadd.s32 %v2935, 536870912
    %v2937 = vshrl.u32 %v2936, 30
    %v2938 = vshll.u32 %v2937, 30
    %v2939 = vsub.s32 %v2935, %v2938
    %vm2940 = vcmp.lt.s32.totalorder %v2939, 0
    %v2941 = vsub.s32 0, %v2939
    %v2942 = vsel %vm2940, %v2941, %v2939
    %v2943 = vclz %v2942
    %v2944 = vsub.s32 %v2943, 2
    %vm2945 = vcmp.gt.s32.totalorder 0, %v2944
    %v2946 = vsel %vm2945, 0, %v2944
    %v2947 = vsub.s32 32, %v2946
    %v2948 = vshll.u32 %v2939, %v2946
    %v2949 = vshrl.u32 %v2931, %v2947
    %v2950 = vor.u32 %v2948, %v2949
    %v2951 = vsub.s32 4294967266, %v2946
    %v2952 = vadd.s32 %v2951, 127
    %v2953 = vshll.u32 %v2952, 23
    %v2954 = vor.u32 4788187, %v2953
    %v2955 = vand.u32 2147483647, %v2954
    %v2957 = vcvt.s32.f32 %v2950
    %v2958 = vmul.f32 %v2957, %v2955
    %v2959 = vxor.u32 %v2958, 2147483648
    %v2960 = vsel %vm2877, %v2959, %v2958
    %v2961 = vsub.s32 4, %v2937
    %v2962 = vsel %vm2877, %v2961, %v2937
    %v2963 = vsel %vm2876, %v159, %v2960
    %v2964 = vsel %vm2876, 0, %v2962
    %v2965 = vcosq.f32.pop %v2963
    %v2966 = vsinq.f32.pop %v2963
    %vm2967 = vweird.f32 %v159
    %v2968 = vand.u32 %v2964, 3
    %vm2969 = vcmp.lt.s32.totalorder %v2968, 2
    %vm2970 = vcmp.eq.s32.totalorder %v2968, 0
    %v2971 = vxor.u32 %v2966, 2147483648
    %v2972 = vsel %vm2970, %v2965, %v2971
    %vm2973 = vcmp.eq.s32.totalorder %v2968, 2
    %v2974 = vxor.u32 %v2965, 2147483648
    %v2975 = vsel %vm2973, %v2974, %v2966
    %v2976 = vsel %vm2969, %v2972, %v2975
    %v2977 = vsel %vm2967, nan, %v2976
    %v2978 = vand.u32 2147483647, %v160
    %vm2979 = vcmp.le.f32.partialorder %v2978, 0.7853982
    %vm2980 = vcmp.lt.s32.totalorder %v160, 0
    %v2981 = vand.u32 %v160, 2139095040
    %v2982 = vshrl.u32 %v2981, 23
    %v2983 = vsub.s32 %v2982, 127
    %v2984 = vand.u32 2147483647, %v160
    %v2985 = vand.u32 %v2984, 8388607
    %v2986 = vor.u32 %v2985, 8388608
    %v2987 = vsub.s32 0, %v2986
    %v2988 = vadd.s32 %v2983, 1
    %vm2989 = vcmp.gt.s32.totalorder %v2988, 0
    %v2990 = vsel %vm2989, %v2988, 0
    %v2991 = vshrl.u32 %v2990, 5
    %v2992 = vand.u32 %v2990, 31
    %v2993 = vsub.s32 32, %v2992
    %v2994 = vshrl.u32 683565275, %v2993
    %v2995 = vshll.u32 683565275, %v2992
    %v2996 = vshrl.u32 2475754826, %v2993
    %v2997 = vor.u32 %v2995, %v2996
    %v2998 = vshll.u32 2475754826, %v2992
    %v2999 = vshrl.u32 2131351028, %v2993
    %v3000 = vor.u32 %v2998, %v2999
    %v3001 = vshll.u32 2131351028, %v2992
    %v3002 = vshrl.u32 2102212464, %v2993
    %v3003 = vor.u32 %v3001, %v3002
    %v3004 = vshll.u32 2102212464, %v2992
    %v3005 = vshrl.u32 920167782, %v2993
    %v3006 = vor.u32 %v3004, %v3005
    %v3007 = vshll.u32 920167782, %v2992
    %v3008 = vshrl.u32 1326507024, %v2993
    %v3009 = vor.u32 %v3007, %v3008
    %vm3010 = vcmp.lt.s32.totalorder %v2991, 1
    %vm3011 = vcmp.lt.s32.totalorder %v2991, 2
    %vm3012 = vcmp.lt.s32.totalorder %v2991, 3
    %vm3013 = vcmp.lt.s32.totalorder %v2991, 4
    %v3014 = vsel %vm3010, %v2994, %v2997
    %v3015 = vsel %vm3013, %v3003, 2102212464
    %v3016 = vsel %vm3012, %v3000, %v3015
    %v3017 = vsel %vm3011, %v3014, %v3016
    %v3018 = vsel %vm3010, %v2997, %v3000
    %v3019 = vsel %vm3013, %v3006, 920167782
    %v3020 = vsel %vm3012, %v3003, %v3019
    %v3021 = vsel %vm3011, %v3018, %v3020
    %v3022 = vsel %vm3010, %v3000, %v3003
    %v3023 = vsel %vm3013, %v3009, 1326507024
    %v3024 = vsel %vm3012, %v3006, %v3023
    %v3025 = vsel %vm3011, %v3022, %v3024
    %v3026 = vshll.u32 %v2986, 8
    %v3027 = vmul.u32.u64.compose %v3026, %v3025
    %v3028 = vextract.low.u32 %v3027
    %v3029 = vextract.high.u32 %v3027
    %v3030 = vmul.u32.u64.compose %v3026, %v3021
    %v3031 = vextract.low.u32 %v3030
    %v3032 = vextract.high.u32 %v3030
    %v3033 = vmul.u32 %v3026, %v3017
    %v3034 = vadd.s32 %v3029, %v3031
    %vm3035 = vc.u32 %v3029, %v3031
    %v3036 = vadd.s32 %v3032, 1
    %v3037 = vsel %vm3035, %v3036, %v3032
    %v3038 = vadd.s32 %v3033, %v3037
    %v3039 = vadd.s32 %v3038, 536870912
    %v3040 = vshrl.u32 %v3039, 30
    %v3041 = vshll.u32 %v3040, 30
    %v3042 = vsub.s32 %v3038, %v3041
    %vm3043 = vcmp.lt.s32.totalorder %v3042, 0
    %v3044 = vsub.s32 0, %v3042
    %v3045 = vsel %vm3043, %v3044, %v3042
    %v3046 = vclz %v3045
    %v3047 = vsub.s32 %v3046, 2
    %vm3048 = vcmp.gt.s32.totalorder 0, %v3047
    %v3049 = vsel %vm3048, 0, %v3047
    %v3050 = vsub.s32 32, %v3049
    %v3051 = vshll.u32 %v3042, %v3049
    %v3052 = vshrl.u32 %v3034, %v3050
    %v3053 = vor.u32 %v3051, %v3052
    %v3054 = vsub.s32 4294967266, %v3049
    %v3055 = vadd.s32 %v3054, 127
    %v3056 = vshll.u32 %v3055, 23
    %v3057 = vor.u32 4788187, %v3056
    %v3058 = vand.u32 2147483647, %v3057
    %v3060 = vcvt.s32.f32 %v3053
    %v3061 = vmul.f32 %v3060, %v3058
    %v3062 = vxor.u32 %v3061, 2147483648
    %v3063 = vsel %vm2980, %v3062, %v3061
    %v3064 = vsub.s32 4, %v3040
    %v3065 = vsel %vm2980, %v3064, %v3040
    %v3066 = vsel %vm2979, %v160, %v3063
    %v3067 = vsel %vm2979, 0, %v3065
    %v3068 = vcosq.f32.pop %v3066
    %v3069 = vsinq.f32.pop %v3066
    %vm3070 = vweird.f32 %v160
    %v3071 = vand.u32 %v3067, 3
    %vm3072 = vcmp.lt.s32.totalorder %v3071, 2
    %vm3073 = vcmp.eq.s32.totalorder %v3071, 0
    %v3074 = vxor.u32 %v3069, 2147483648
    %v3075 = vsel %vm3073, %v3068, %v3074
    %vm3076 = vcmp.eq.s32.totalorder %v3071, 2
    %v3077 = vxor.u32 %v3068, 2147483648
    %v3078 = vsel %vm3076, %v3077, %v3069
    %v3079 = vsel %vm3072, %v3075, %v3078
    %v3080 = vsel %vm3070, nan, %v3079
    %v3081 = vand.u32 2147483647, %v161
    %vm3082 = vcmp.le.f32.partialorder %v3081, 0.7853982
    %vm3083 = vcmp.lt.s32.totalorder %v161, 0
    %v3084 = vand.u32 %v161, 2139095040
    %v3085 = vshrl.u32 %v3084, 23
    %v3086 = vsub.s32 %v3085, 127
    %v3087 = vand.u32 2147483647, %v161
    %v3088 = vand.u32 %v3087, 8388607
    %v3089 = vor.u32 %v3088, 8388608
    %v3090 = vsub.s32 0, %v3089
    %v3091 = vadd.s32 %v3086, 1
    %vm3092 = vcmp.gt.s32.totalorder %v3091, 0
    %v3093 = vsel %vm3092, %v3091, 0
    %v3094 = vshrl.u32 %v3093, 5
    %v3095 = vand.u32 %v3093, 31
    %v3096 = vsub.s32 32, %v3095
    %v3097 = vshrl.u32 683565275, %v3096
    %v3098 = vshll.u32 683565275, %v3095
    %v3099 = vshrl.u32 2475754826, %v3096
    %v3100 = vor.u32 %v3098, %v3099
    %v3101 = vshll.u32 2475754826, %v3095
    %v3102 = vshrl.u32 2131351028, %v3096
    %v3103 = vor.u32 %v3101, %v3102
    %v3104 = vshll.u32 2131351028, %v3095
    %v3105 = vshrl.u32 2102212464, %v3096
    %v3106 = vor.u32 %v3104, %v3105
    %v3107 = vshll.u32 2102212464, %v3095
    %v3108 = vshrl.u32 920167782, %v3096
    %v3109 = vor.u32 %v3107, %v3108
    %v3110 = vshll.u32 920167782, %v3095
    %v3111 = vshrl.u32 1326507024, %v3096
    %v3112 = vor.u32 %v3110, %v3111
    %vm3113 = vcmp.lt.s32.totalorder %v3094, 1
    %vm3114 = vcmp.lt.s32.totalorder %v3094, 2
    %vm3115 = vcmp.lt.s32.totalorder %v3094, 3
    %vm3116 = vcmp.lt.s32.totalorder %v3094, 4
    %v3117 = vsel %vm3113, %v3097, %v3100
    %v3118 = vsel %vm3116, %v3106, 2102212464
    %v3119 = vsel %vm3115, %v3103, %v3118
    %v3120 = vsel %vm3114, %v3117, %v3119
    %v3121 = vsel %vm3113, %v3100, %v3103
    %v3122 = vsel %vm3116, %v3109, 920167782
    %v3123 = vsel %vm3115, %v3106, %v3122
    %v3124 = vsel %vm3114, %v3121, %v3123
    %v3125 = vsel %vm3113, %v3103, %v3106
    %v3126 = vsel %vm3116, %v3112, 1326507024
    %v3127 = vsel %vm3115, %v3109, %v3126
    %v3128 = vsel %vm3114, %v3125, %v3127
    %v3129 = vshll.u32 %v3089, 8
    %v3130 = vmul.u32.u64.compose %v3129, %v3128
    %v3131 = vextract.low.u32 %v3130
    %v3132 = vextract.high.u32 %v3130
    %v3133 = vmul.u32.u64.compose %v3129, %v3124
    %v3134 = vextract.low.u32 %v3133
    %v3135 = vextract.high.u32 %v3133
    %v3136 = vmul.u32 %v3129, %v3120
    %v3137 = vadd.s32 %v3132, %v3134
    %vm3138 = vc.u32 %v3132, %v3134
    %v3139 = vadd.s32 %v3135, 1
    %v3140 = vsel %vm3138, %v3139, %v3135
    %v3141 = vadd.s32 %v3136, %v3140
    %v3142 = vadd.s32 %v3141, 536870912
    %v3143 = vshrl.u32 %v3142, 30
    %v3144 = vshll.u32 %v3143, 30
    %v3145 = vsub.s32 %v3141, %v3144
    %vm3146 = vcmp.lt.s32.totalorder %v3145, 0
    %v3147 = vsub.s32 0, %v3145
    %v3148 = vsel %vm3146, %v3147, %v3145
    %v3149 = vclz %v3148
    %v3150 = vsub.s32 %v3149, 2
    %vm3151 = vcmp.gt.s32.totalorder 0, %v3150
    %v3152 = vsel %vm3151, 0, %v3150
    %v3153 = vsub.s32 32, %v3152
    %v3154 = vshll.u32 %v3145, %v3152
    %v3155 = vshrl.u32 %v3137, %v3153
    %v3156 = vor.u32 %v3154, %v3155
    %v3157 = vsub.s32 4294967266, %v3152
    %v3158 = vadd.s32 %v3157, 127
    %v3159 = vshll.u32 %v3158, 23
    %v3160 = vor.u32 4788187, %v3159
    %v3161 = vand.u32 2147483647, %v3160
    %v3163 = vcvt.s32.f32 %v3156
    %v3164 = vmul.f32 %v3163, %v3161
    %v3165 = vxor.u32 %v3164, 2147483648
    %v3166 = vsel %vm3083, %v3165, %v3164
    %v3167 = vsub.s32 4, %v3143
    %v3168 = vsel %vm3083, %v3167, %v3143
    %v3169 = vsel %vm3082, %v161, %v3166
    %v3170 = vsel %vm3082, 0, %v3168
    %v3171 = vcosq.f32.pop %v3169
    %v3172 = vsinq.f32.pop %v3169
    %vm3173 = vweird.f32 %v161
    %v3174 = vand.u32 %v3170, 3
    %vm3175 = vcmp.lt.s32.totalorder %v3174, 2
    %vm3176 = vcmp.eq.s32.totalorder %v3174, 0
    %v3177 = vxor.u32 %v3172, 2147483648
    %v3178 = vsel %vm3176, %v3171, %v3177
    %vm3179 = vcmp.eq.s32.totalorder %v3174, 2
    %v3180 = vxor.u32 %v3171, 2147483648
    %v3181 = vsel %vm3179, %v3180, %v3172
    %v3182 = vsel %vm3175, %v3178, %v3181
    %v3183 = vsel %vm3173, nan, %v3182
    %v3184 = vand.u32 2147483647, %v162
    %vm3185 = vcmp.le.f32.partialorder %v3184, 0.7853982
    %vm3186 = vcmp.lt.s32.totalorder %v162, 0
    %v3187 = vand.u32 %v162, 2139095040
    %v3188 = vshrl.u32 %v3187, 23
    %v3189 = vsub.s32 %v3188, 127
    %v3190 = vand.u32 2147483647, %v162
    %v3191 = vand.u32 %v3190, 8388607
    %v3192 = vor.u32 %v3191, 8388608
    %v3193 = vsub.s32 0, %v3192
    %v3194 = vadd.s32 %v3189, 1
    %vm3195 = vcmp.gt.s32.totalorder %v3194, 0
    %v3196 = vsel %vm3195, %v3194, 0
    %v3197 = vshrl.u32 %v3196, 5
    %v3198 = vand.u32 %v3196, 31
    %v3199 = vsub.s32 32, %v3198
    %v3200 = vshrl.u32 683565275, %v3199
    %v3201 = vshll.u32 683565275, %v3198
    %v3202 = vshrl.u32 2475754826, %v3199
    %v3203 = vor.u32 %v3201, %v3202
    %v3204 = vshll.u32 2475754826, %v3198
    %v3205 = vshrl.u32 2131351028, %v3199
    %v3206 = vor.u32 %v3204, %v3205
    %v3207 = vshll.u32 2131351028, %v3198
    %v3208 = vshrl.u32 2102212464, %v3199
    %v3209 = vor.u32 %v3207, %v3208
    %v3210 = vshll.u32 2102212464, %v3198
    %v3211 = vshrl.u32 920167782, %v3199
    %v3212 = vor.u32 %v3210, %v3211
    %v3213 = vshll.u32 920167782, %v3198
    %v3214 = vshrl.u32 1326507024, %v3199
    %v3215 = vor.u32 %v3213, %v3214
    %vm3216 = vcmp.lt.s32.totalorder %v3197, 1
    %vm3217 = vcmp.lt.s32.totalorder %v3197, 2
    %vm3218 = vcmp.lt.s32.totalorder %v3197, 3
    %vm3219 = vcmp.lt.s32.totalorder %v3197, 4
    %v3220 = vsel %vm3216, %v3200, %v3203
    %v3221 = vsel %vm3219, %v3209, 2102212464
    %v3222 = vsel %vm3218, %v3206, %v3221
    %v3223 = vsel %vm3217, %v3220, %v3222
    %v3224 = vsel %vm3216, %v3203, %v3206
    %v3225 = vsel %vm3219, %v3212, 920167782
    %v3226 = vsel %vm3218, %v3209, %v3225
    %v3227 = vsel %vm3217, %v3224, %v3226
    %v3228 = vsel %vm3216, %v3206, %v3209
    %v3229 = vsel %vm3219, %v3215, 1326507024
    %v3230 = vsel %vm3218, %v3212, %v3229
    %v3231 = vsel %vm3217, %v3228, %v3230
    %v3232 = vshll.u32 %v3192, 8
    %v3233 = vmul.u32.u64.compose %v3232, %v3231
    %v3234 = vextract.low.u32 %v3233
    %v3235 = vextract.high.u32 %v3233
    %v3236 = vmul.u32.u64.compose %v3232, %v3227
    %v3237 = vextract.low.u32 %v3236
    %v3238 = vextract.high.u32 %v3236
    %v3239 = vmul.u32 %v3232, %v3223
    %v3240 = vadd.s32 %v3235, %v3237
    %vm3241 = vc.u32 %v3235, %v3237
    %v3242 = vadd.s32 %v3238, 1
    %v3243 = vsel %vm3241, %v3242, %v3238
    %v3244 = vadd.s32 %v3239, %v3243
    %v3245 = vadd.s32 %v3244, 536870912
    %v3246 = vshrl.u32 %v3245, 30
    %v3247 = vshll.u32 %v3246, 30
    %v3248 = vsub.s32 %v3244, %v3247
    %vm3249 = vcmp.lt.s32.totalorder %v3248, 0
    %v3250 = vsub.s32 0, %v3248
    %v3251 = vsel %vm3249, %v3250, %v3248
    %v3252 = vclz %v3251
    %v3253 = vsub.s32 %v3252, 2
    %vm3254 = vcmp.gt.s32.totalorder 0, %v3253
    %v3255 = vsel %vm3254, 0, %v3253
    %v3256 = vsub.s32 32, %v3255
    %v3257 = vshll.u32 %v3248, %v3255
    %v3258 = vshrl.u32 %v3240, %v3256
    %v3259 = vor.u32 %v3257, %v3258
    %v3260 = vsub.s32 4294967266, %v3255
    %v3261 = vadd.s32 %v3260, 127
    %v3262 = vshll.u32 %v3261, 23
    %v3263 = vor.u32 4788187, %v3262
    %v3264 = vand.u32 2147483647, %v3263
    %v3266 = vcvt.s32.f32 %v3259
    %v3267 = vmul.f32 %v3266, %v3264
    %v3268 = vxor.u32 %v3267, 2147483648
    %v3269 = vsel %vm3186, %v3268, %v3267
    %v3270 = vsub.s32 4, %v3246
    %v3271 = vsel %vm3186, %v3270, %v3246
    %v3272 = vsel %vm3185, %v162, %v3269
    %v3273 = vsel %vm3185, 0, %v3271
    %v3274 = vcosq.f32.pop %v3272
    %v3275 = vsinq.f32.pop %v3272
    %vm3276 = vweird.f32 %v162
    %v3277 = vand.u32 %v3273, 3
    %vm3278 = vcmp.lt.s32.totalorder %v3277, 2
    %vm3279 = vcmp.eq.s32.totalorder %v3277, 0
    %v3280 = vxor.u32 %v3275, 2147483648
    %v3281 = vsel %vm3279, %v3274, %v3280
    %vm3282 = vcmp.eq.s32.totalorder %v3277, 2
    %v3283 = vxor.u32 %v3274, 2147483648
    %v3284 = vsel %vm3282, %v3283, %v3275
    %v3285 = vsel %vm3278, %v3281, %v3284
    %v3286 = vsel %vm3276, nan, %v3285
    %v3287 = vand.u32 2147483647, %v163
    %vm3288 = vcmp.le.f32.partialorder %v3287, 0.7853982
    %vm3289 = vcmp.lt.s32.totalorder %v163, 0
    %v3290 = vand.u32 %v163, 2139095040
    %v3291 = vshrl.u32 %v3290, 23
    %v3292 = vsub.s32 %v3291, 127
    %v3293 = vand.u32 2147483647, %v163
    %v3294 = vand.u32 %v3293, 8388607
    %v3295 = vor.u32 %v3294, 8388608
    %v3296 = vsub.s32 0, %v3295
    %v3297 = vadd.s32 %v3292, 1
    %vm3298 = vcmp.gt.s32.totalorder %v3297, 0
    %v3299 = vsel %vm3298, %v3297, 0
    %v3300 = vshrl.u32 %v3299, 5
    %v3301 = vand.u32 %v3299, 31
    %v3302 = vsub.s32 32, %v3301
    %v3303 = vshrl.u32 683565275, %v3302
    %v3304 = vshll.u32 683565275, %v3301
    %v3305 = vshrl.u32 2475754826, %v3302
    %v3306 = vor.u32 %v3304, %v3305
    %v3307 = vshll.u32 2475754826, %v3301
    %v3308 = vshrl.u32 2131351028, %v3302
    %v3309 = vor.u32 %v3307, %v3308
    %v3310 = vshll.u32 2131351028, %v3301
    %v3311 = vshrl.u32 2102212464, %v3302
    %v3312 = vor.u32 %v3310, %v3311
    %v3313 = vshll.u32 2102212464, %v3301
    %v3314 = vshrl.u32 920167782, %v3302
    %v3315 = vor.u32 %v3313, %v3314
    %v3316 = vshll.u32 920167782, %v3301
    %v3317 = vshrl.u32 1326507024, %v3302
    %v3318 = vor.u32 %v3316, %v3317
    %vm3319 = vcmp.lt.s32.totalorder %v3300, 1
    %vm3320 = vcmp.lt.s32.totalorder %v3300, 2
    %vm3321 = vcmp.lt.s32.totalorder %v3300, 3
    %vm3322 = vcmp.lt.s32.totalorder %v3300, 4
    %v3323 = vsel %vm3319, %v3303, %v3306
    %v3324 = vsel %vm3322, %v3312, 2102212464
    %v3325 = vsel %vm3321, %v3309, %v3324
    %v3326 = vsel %vm3320, %v3323, %v3325
    %v3327 = vsel %vm3319, %v3306, %v3309
    %v3328 = vsel %vm3322, %v3315, 920167782
    %v3329 = vsel %vm3321, %v3312, %v3328
    %v3330 = vsel %vm3320, %v3327, %v3329
    %v3331 = vsel %vm3319, %v3309, %v3312
    %v3332 = vsel %vm3322, %v3318, 1326507024
    %v3333 = vsel %vm3321, %v3315, %v3332
    %v3334 = vsel %vm3320, %v3331, %v3333
    %v3335 = vshll.u32 %v3295, 8
    %v3336 = vmul.u32.u64.compose %v3335, %v3334
    %v3337 = vextract.low.u32 %v3336
    %v3338 = vextract.high.u32 %v3336
    %v3339 = vmul.u32.u64.compose %v3335, %v3330
    %v3340 = vextract.low.u32 %v3339
    %v3341 = vextract.high.u32 %v3339
    %v3342 = vmul.u32 %v3335, %v3326
    %v3343 = vadd.s32 %v3338, %v3340
    %vm3344 = vc.u32 %v3338, %v3340
    %v3345 = vadd.s32 %v3341, 1
    %v3346 = vsel %vm3344, %v3345, %v3341
    %v3347 = vadd.s32 %v3342, %v3346
    %v3348 = vadd.s32 %v3347, 536870912
    %v3349 = vshrl.u32 %v3348, 30
    %v3350 = vshll.u32 %v3349, 30
    %v3351 = vsub.s32 %v3347, %v3350
    %vm3352 = vcmp.lt.s32.totalorder %v3351, 0
    %v3353 = vsub.s32 0, %v3351
    %v3354 = vsel %vm3352, %v3353, %v3351
    %v3355 = vclz %v3354
    %v3356 = vsub.s32 %v3355, 2
    %vm3357 = vcmp.gt.s32.totalorder 0, %v3356
    %v3358 = vsel %vm3357, 0, %v3356
    %v3359 = vsub.s32 32, %v3358
    %v3360 = vshll.u32 %v3351, %v3358
    %v3361 = vshrl.u32 %v3343, %v3359
    %v3362 = vor.u32 %v3360, %v3361
    %v3363 = vsub.s32 4294967266, %v3358
    %v3364 = vadd.s32 %v3363, 127
    %v3365 = vshll.u32 %v3364, 23
    %v3366 = vor.u32 4788187, %v3365
    %v3367 = vand.u32 2147483647, %v3366
    %v3369 = vcvt.s32.f32 %v3362
    %v3370 = vmul.f32 %v3369, %v3367
    %v3371 = vxor.u32 %v3370, 2147483648
    %v3372 = vsel %vm3289, %v3371, %v3370
    %v3373 = vsub.s32 4, %v3349
    %v3374 = vsel %vm3289, %v3373, %v3349
    %v3375 = vsel %vm3288, %v163, %v3372
    %v3376 = vsel %vm3288, 0, %v3374
    %v3377 = vcosq.f32.pop %v3375
    %v3378 = vsinq.f32.pop %v3375
    %vm3379 = vweird.f32 %v163
    %v3380 = vand.u32 %v3376, 3
    %vm3381 = vcmp.lt.s32.totalorder %v3380, 2
    %vm3382 = vcmp.eq.s32.totalorder %v3380, 0
    %v3383 = vxor.u32 %v3378, 2147483648
    %v3384 = vsel %vm3382, %v3377, %v3383
    %vm3385 = vcmp.eq.s32.totalorder %v3380, 2
    %v3386 = vxor.u32 %v3377, 2147483648
    %v3387 = vsel %vm3385, %v3386, %v3378
    %v3388 = vsel %vm3381, %v3384, %v3387
    %v3389 = vsel %vm3379, nan, %v3388
    %v3390 = vand.u32 2147483647, %v164
    %vm3391 = vcmp.le.f32.partialorder %v3390, 0.7853982
    %vm3392 = vcmp.lt.s32.totalorder %v164, 0
    %v3393 = vand.u32 %v164, 2139095040
    %v3394 = vshrl.u32 %v3393, 23
    %v3395 = vsub.s32 %v3394, 127
    %v3396 = vand.u32 2147483647, %v164
    %v3397 = vand.u32 %v3396, 8388607
    %v3398 = vor.u32 %v3397, 8388608
    %v3399 = vsub.s32 0, %v3398
    %v3400 = vadd.s32 %v3395, 1
    %vm3401 = vcmp.gt.s32.totalorder %v3400, 0
    %v3402 = vsel %vm3401, %v3400, 0
    %v3403 = vshrl.u32 %v3402, 5
    %v3404 = vand.u32 %v3402, 31
    %v3405 = vsub.s32 32, %v3404
    %v3406 = vshrl.u32 683565275, %v3405
    %v3407 = vshll.u32 683565275, %v3404
    %v3408 = vshrl.u32 2475754826, %v3405
    %v3409 = vor.u32 %v3407, %v3408
    %v3410 = vshll.u32 2475754826, %v3404
    %v3411 = vshrl.u32 2131351028, %v3405
    %v3412 = vor.u32 %v3410, %v3411
    %v3413 = vshll.u32 2131351028, %v3404
    %v3414 = vshrl.u32 2102212464, %v3405
    %v3415 = vor.u32 %v3413, %v3414
    %v3416 = vshll.u32 2102212464, %v3404
    %v3417 = vshrl.u32 920167782, %v3405
    %v3418 = vor.u32 %v3416, %v3417
    %v3419 = vshll.u32 920167782, %v3404
    %v3420 = vshrl.u32 1326507024, %v3405
    %v3421 = vor.u32 %v3419, %v3420
    %vm3422 = vcmp.lt.s32.totalorder %v3403, 1
    %vm3423 = vcmp.lt.s32.totalorder %v3403, 2
    %vm3424 = vcmp.lt.s32.totalorder %v3403, 3
    %vm3425 = vcmp.lt.s32.totalorder %v3403, 4
    %v3426 = vsel %vm3422, %v3406, %v3409
    %v3427 = vsel %vm3425, %v3415, 2102212464
    %v3428 = vsel %vm3424, %v3412, %v3427
    %v3429 = vsel %vm3423, %v3426, %v3428
    %v3430 = vsel %vm3422, %v3409, %v3412
    %v3431 = vsel %vm3425, %v3418, 920167782
    %v3432 = vsel %vm3424, %v3415, %v3431
    %v3433 = vsel %vm3423, %v3430, %v3432
    %v3434 = vsel %vm3422, %v3412, %v3415
    %v3435 = vsel %vm3425, %v3421, 1326507024
    %v3436 = vsel %vm3424, %v3418, %v3435
    %v3437 = vsel %vm3423, %v3434, %v3436
    %v3438 = vshll.u32 %v3398, 8
    %v3439 = vmul.u32.u64.compose %v3438, %v3437
    %v3440 = vextract.low.u32 %v3439
    %v3441 = vextract.high.u32 %v3439
    %v3442 = vmul.u32.u64.compose %v3438, %v3433
    %v3443 = vextract.low.u32 %v3442
    %v3444 = vextract.high.u32 %v3442
    %v3445 = vmul.u32 %v3438, %v3429
    %v3446 = vadd.s32 %v3441, %v3443
    %vm3447 = vc.u32 %v3441, %v3443
    %v3448 = vadd.s32 %v3444, 1
    %v3449 = vsel %vm3447, %v3448, %v3444
    %v3450 = vadd.s32 %v3445, %v3449
    %v3451 = vadd.s32 %v3450, 536870912
    %v3452 = vshrl.u32 %v3451, 30
    %v3453 = vshll.u32 %v3452, 30
    %v3454 = vsub.s32 %v3450, %v3453
    %vm3455 = vcmp.lt.s32.totalorder %v3454, 0
    %v3456 = vsub.s32 0, %v3454
    %v3457 = vsel %vm3455, %v3456, %v3454
    %v3458 = vclz %v3457
    %v3459 = vsub.s32 %v3458, 2
    %vm3460 = vcmp.gt.s32.totalorder 0, %v3459
    %v3461 = vsel %vm3460, 0, %v3459
    %v3462 = vsub.s32 32, %v3461
    %v3463 = vshll.u32 %v3454, %v3461
    %v3464 = vshrl.u32 %v3446, %v3462
    %v3465 = vor.u32 %v3463, %v3464
    %v3466 = vsub.s32 4294967266, %v3461
    %v3467 = vadd.s32 %v3466, 127
    %v3468 = vshll.u32 %v3467, 23
    %v3469 = vor.u32 4788187, %v3468
    %v3470 = vand.u32 2147483647, %v3469
    %v3472 = vcvt.s32.f32 %v3465
    %v3473 = vmul.f32 %v3472, %v3470
    %v3474 = vxor.u32 %v3473, 2147483648
    %v3475 = vsel %vm3392, %v3474, %v3473
    %v3476 = vsub.s32 4, %v3452
    %v3477 = vsel %vm3392, %v3476, %v3452
    %v3478 = vsel %vm3391, %v164, %v3475
    %v3479 = vsel %vm3391, 0, %v3477
    %v3480 = vcosq.f32.pop %v3478
    %v3481 = vsinq.f32.pop %v3478
    %vm3482 = vweird.f32 %v164
    %v3483 = vand.u32 %v3479, 3
    %vm3484 = vcmp.lt.s32.totalorder %v3483, 2
    %vm3485 = vcmp.eq.s32.totalorder %v3483, 0
    %v3486 = vxor.u32 %v3481, 2147483648
    %v3487 = vsel %vm3485, %v3480, %v3486
    %vm3488 = vcmp.eq.s32.totalorder %v3483, 2
    %v3489 = vxor.u32 %v3480, 2147483648
    %v3490 = vsel %vm3488, %v3489, %v3481
    %v3491 = vsel %vm3484, %v3487, %v3490
    %v3492 = vsel %vm3482, nan, %v3491
    %3493 = vst [vmem:[#allocation2 + $0x80] sm:$0xff] %v1947
    %3494 = vst [vmem:[#allocation2 + $0x88] sm:$0xff] %v2050
    %3495 = vst [vmem:[#allocation2 + $0x90] sm:$0xff] %v2153
    %3496 = vst [vmem:[#allocation2 + $0x98] sm:$0xff] %v2256
    %3497 = vst [vmem:[#allocation2 + $0xa0] sm:$0xff] %v2359
    %3498 = vst [vmem:[#allocation2 + $0xa8] sm:$0xff] %v2462
    %3499 = vst [vmem:[#allocation2 + $0xb0] sm:$0xff] %v2565
    %3500 = vst [vmem:[#allocation2 + $0xb8] sm:$0xff] %v2668
    %3501 = vst [vmem:[#allocation2 + $0xc0] sm:$0xff] %v2771
    %3502 = vst [vmem:[#allocation2 + $0xc8] sm:$0xff] %v2874
    %3503 = vst [vmem:[#allocation2 + $0xd0] sm:$0xff] %v2977
    %3504 = vst [vmem:[#allocation2 + $0xd8] sm:$0xff] %v3080
    %3505 = vst [vmem:[#allocation2 + $0xe0] sm:$0xff] %v3183
    %3506 = vst [vmem:[#allocation2 + $0xe8] sm:$0xff] %v3286
    %3507 = vst [vmem:[#allocation2 + $0xf0] sm:$0xff] %v3389
    %3508 = vst [vmem:[#allocation2 + $0xf8] sm:$0xff] %v3492
    // Predicated region
    $region10: #{tpu_custom_call.1} parent=1 // pred_check
      _
    $region11: #{tpu_custom_call.1} parent=1 // pred_check_branch
      %3510 = sbr.rel (0) target = $region13
    $region12: #{tpu_custom_call.1} parent=1 // pred_region
      %s3512 = ssub.s32 4096, 4096
      %3513 = vsyncadd [#allocation3], %s3512
      %s3514 = sshll.u32 [#allocation2], 4
      %s3515 = int_to_ptr.vmem [resolvable:$true] %s3514
      %3520 = dma.vmem_to_hbm [thread:$0]  %s3515, 4096, %s2, [#allocation3], 256, 256, 16
    $region13: #{tpu_custom_call.1} parent=1 // pred_fallthru
      _
    // Predicated region
    $region14: #{tpu_custom_call.1} parent=1 // pred_check
      _
    $region15: #{tpu_custom_call.1} parent=1 // pred_check_branch
      %3522 = sbr.rel (0) target = $region17
    $region16: #{tpu_custom_call.1} parent=1 // pred_region
      %3523 = dma.done [#allocation3], 4096
    $region17: #{tpu_custom_call.1} parent=1 // pred_fallthru
      _
    %3524 = vsyncpa [#allocation3], 1

</llo_original>
